<compile_context>
chip_gen: v7x
topology: tpu7x:2x2x1
jax: 0.10.0
libtpu: 0.0.40
codegen_flags: <defaults>
</compile_context>

<pallas_src>
import jax
import jax.numpy as jnp
from jax.experimental import pallas as pl
from jax.experimental.pallas import tpu as pltpu

_IN_DIM = 384            # sentence-embedding part of the 512-wide input
_NOISE_DIM = 128         # exactly-zero noise part (dropped from the kernel)
_NOISE_STD = 0.0         # torch.normal(mean=zeros, std=zeros)
_H1, _H2, _OUT = 1024, 1536, 2048
_N_SPLIT = 2             # megacore split of layers 2/3
_H2_BLK = _H2 // _N_SPLIT            # 768 output cols of layer 2 per grid point
                                     # == 768 rows of w3 per grid point


def _mlp_kernel(x_ref, w1_ref, s1_ref, b1_ref,
                w2_ref, s2_ref, b2_ref,
                w3_ref, s3_ref, o_ref):
    """One grid point: full layer 1, a 768-wide column slice of layer 2, and the
    matching 768-row slice of layer 3 -> partial (B, 2048) output (b3 added in
    the wrapper after summing the partials)."""
    neg_slope = jnp.float32(0.01)    # F.leaky_relu default

    x = x_ref[...]                                                 # (B, 384) bf16

    # Layer 1 (tiny; recomputed per grid point).
    w1 = w1_ref[...].astype(jnp.bfloat16)                          # (384, 1024)
    h1 = jnp.dot(x, w1, preferred_element_type=jnp.float32)
    h1 = h1 * s1_ref[...] + b1_ref[...]                            # (B, 1024) f32
    h1 = jnp.where(h1 > 0, h1, neg_slope * h1)

    # Layer 2: this grid point's 768 output columns.
    w2 = w2_ref[...].astype(jnp.bfloat16)                          # (1024, 768)
    h2 = jnp.dot(h1.astype(jnp.bfloat16), w2,
                 preferred_element_type=jnp.float32)
    h2 = h2 * s2_ref[...] + b2_ref[...]                            # (B, 768) f32
    h2 = jnp.where(h2 > 0, h2, neg_slope * h2)

    # Layer 3: matching 768-row slice of w3 -> partial over the contraction.
    w3 = w3_ref[...].astype(jnp.bfloat16)                          # (768, 2048)
    h3 = jnp.dot(h2.astype(jnp.bfloat16), w3,
                 preferred_element_type=jnp.float32)
    o_ref[...] = h3 * s3_ref[...]                                  # (B, 2048) f32


def _quantize_per_col(w):
    """Symmetric int8 quantization with one scale per output column."""
    amax = jnp.max(jnp.abs(w), axis=0, keepdims=True)              # (1, out)
    scale = jnp.maximum(amax, 1e-8) / 127.0
    q = jnp.clip(jnp.round(w / scale), -127.0, 127.0).astype(jnp.int8)
    return q, scale.astype(jnp.float32)


def prepare_params(params_f32, noise_std=_NOISE_STD):
    """One-time conversion of f32 (in, out)-layout Linear params into the kernel
    streaming format: int8 weights + per-column f32 scales, f32 biases, the
    exactly-zero noise rows of w1 removed, and layer-2 column slices pre-split
    into a contiguous (N_SPLIT, 1024, 768) layout."""
    # Dropping w1 rows 384:512 is only valid because the noise is exactly zero.
    assert noise_std == 0.0, "non-zero noise std invalidates the w1-row drop"

    w1q, s1 = _quantize_per_col(params_f32["w1"][:_IN_DIM])        # (384, 1024)
    w2q, s2 = _quantize_per_col(params_f32["w2"])                  # (1024, 1536)
    w3q, s3 = _quantize_per_col(params_f32["w3"])                  # (1536, 2048)

    b1 = params_f32["b1"].reshape(1, _H1).astype(jnp.float32)
    b2 = params_f32["b2"].reshape(1, _H2).astype(jnp.float32)
    b3 = params_f32["b3"].reshape(1, _OUT).astype(jnp.float32)

    # Pre-split layer-2 column tiles into contiguous per-grid-point blocks.
    w2q = w2q.reshape(_H1, _N_SPLIT, _H2_BLK).transpose(1, 0, 2)   # (2,1024,768)
    s2 = s2.reshape(1, _N_SPLIT, _H2_BLK).transpose(1, 0, 2)       # (2,1,768)
    b2 = b2.reshape(1, _N_SPLIT, _H2_BLK).transpose(1, 0, 2)       # (2,1,768)

    return {"w1q": w1q, "s1": s1, "b1": b1,
            "w2q": w2q, "s2": s2, "b2": b2,
            "w3q": w3q, "s3": s3, "b3": b3}


def _forward_2d(x2d, kp):
    """Run the fused MLP on a (B, 384) batch of embeddings -> (B, 2048)."""
    B = x2d.shape[0]
    x2d = x2d.astype(jnp.bfloat16)

    flops = 2 * B * (_IN_DIM * _H1 + _H1 * _H2 + _H2 * _OUT)
    bytes_accessed = (
        (_IN_DIM * _H1 + _H1 * _H2 + _H2 * _OUT)      # int8 weights
        + 4 * (_H1 + _H2 + _OUT)                      # f32 scales
        + 4 * (_H1 + _H2)                             # f32 biases b1, b2
        + 2 * B * _IN_DIM                             # bf16 input
        + 4 * _N_SPLIT * B * _OUT                     # f32 partial outputs
    )

    partials = pl.pallas_call(
        _mlp_kernel,
        out_shape=jax.ShapeDtypeStruct((_N_SPLIT, B, _OUT), jnp.float32),
        grid_spec=pltpu.PrefetchScalarGridSpec(
            num_scalar_prefetch=0,
            grid=(_N_SPLIT,),
            in_specs=[
                pl.BlockSpec((B, _IN_DIM), lambda j: (0, 0)),            # x
                pl.BlockSpec((_IN_DIM, _H1), lambda j: (0, 0)),          # w1q
                pl.BlockSpec((1, _H1), lambda j: (0, 0)),                # s1
                pl.BlockSpec((1, _H1), lambda j: (0, 0)),                # b1
                pl.BlockSpec((None, _H1, _H2_BLK), lambda j: (j, 0, 0)),  # w2q slice
                pl.BlockSpec((None, 1, _H2_BLK), lambda j: (j, 0, 0)),    # s2 slice
                pl.BlockSpec((None, 1, _H2_BLK), lambda j: (j, 0, 0)),    # b2 slice
                pl.BlockSpec((_H2_BLK, _OUT), lambda j: (j, 0)),         # w3q rows
                pl.BlockSpec((1, _OUT), lambda j: (0, 0)),               # s3
            ],
            out_specs=pl.BlockSpec((None, B, _OUT), lambda j: (j, 0, 0)),
        ),
        compiler_params=pltpu.CompilerParams(
            dimension_semantics=("parallel",),
            vmem_limit_bytes=16 << 20,
        ),
        cost_estimate=pl.CostEstimate(
            flops=flops, transcendentals=0, bytes_accessed=bytes_accessed),
    )(
        x2d,
        kp["w1q"], kp["s1"], kp["b1"],
        kp["w2q"], kp["s2"], kp["b2"],
        kp["w3q"], kp["s3"],
    )
    # Sum the two layer-3 row-partials and add the final bias (fused by XLA).
    return partials.sum(axis=0) + kp["b3"]                          # (B, 2048)


_forward_2d_jit = jax.jit(_forward_2d)


def generator_forward(inp, kparams):
    """JAX wrapper reproducing Generator.forward.

    inp: array whose squeeze() is either a single (384,) sentence embedding
         (PyTorch module semantics -> returns (2048,)) or a (B, 384) batch
         (returns (B, 2048); amortizes the weight stream across rows).
    """
    # generate_noise(): normal(mean=0, std=0) == exact zeros, so the
    # concatenated noise half contributes nothing; it is dropped exactly.
    x = jnp.squeeze(jnp.asarray(inp))
    single = (x.ndim == 1)
    x2d = x.reshape(1, _IN_DIM) if single else x.reshape(-1, _IN_DIM)
    out = _forward_2d_jit(x2d, kparams)
    return out.reshape(_OUT) if single else out


def init_params(key):
    """Deterministic synthetic f32 parameters (shapes from FFTranslator)."""
    ks = jax.random.split(key, 6)

    def linear(kw, kb, fan_in, fan_out):
        # Uniform(-1/sqrt(fan_in), 1/sqrt(fan_in)), like nn.Linear's default.
        bound = 1.0 / jnp.sqrt(jnp.float32(fan_in))
        w = jax.random.uniform(kw, (fan_in, fan_out), jnp.float32, -bound, bound)
        b = jax.random.uniform(kb, (1, fan_out), jnp.float32, -bound, bound)
        return w, b

    w1, b1 = linear(ks[0], ks[1], _IN_DIM + _NOISE_DIM, _H1)       # (512, 1024)
    w2, b2 = linear(ks[2], ks[3], _H1, _H2)
    w3, b3 = linear(ks[4], ks[5], _H2, _OUT)
    return {"w1": w1, "b1": b1, "w2": w2, "b2": b2, "w3": w3, "b3": b3}


def _reference(inp, params_f32):
    """Pure-JAX f32 reference reproducing the PyTorch forward exactly."""
    noise = jnp.zeros((_NOISE_DIM,), dtype=jnp.float32)
    x = jnp.concatenate([jnp.squeeze(inp), noise], axis=0)          # (512,)
    h = x @ params_f32["w1"] + params_f32["b1"][0]
    h = jnp.where(h > 0, h, 0.01 * h)
    h = h @ params_f32["w2"] + params_f32["b2"][0]
    h = jnp.where(h > 0, h, 0.01 * h)
    return h @ params_f32["w3"] + params_f32["b3"][0]


if __name__ == "__main__":
    key = jax.random.PRNGKey(0)
    k_in, k_params, k_batch = jax.random.split(key, 3)

    # Input whose squeeze is a (384,) embedding; cat with 128 zero-noise = 512.
    inp = jax.random.normal(k_in, (1, _IN_DIM), dtype=jnp.float32)
    params = init_params(k_params)
    kparams = prepare_params(params)

    # Single-embedding path (matches the PyTorch module's forward).
    out = jax.block_until_ready(generator_forward(inp, kparams))
    ref = _reference(inp, params)
    assert out.shape == (_OUT,), out.shape
    # int8 weights + bf16 activation streaming => relaxed tolerance vs f32 ref.
    assert jnp.allclose(out, ref, atol=2e-2, rtol=2e-2), "mismatch vs reference"

    # Batched path (same weight stream services every row ~for free).
    xb = jax.random.normal(k_batch, (4, _IN_DIM), dtype=jnp.float32)
    outb = jax.block_until_ready(generator_forward(xb, kparams))
    refb = jax.vmap(lambda v: _reference(v, params))(xb)
    assert outb.shape == (4, _OUT), outb.shape
    assert jnp.allclose(outb, refb, atol=2e-2, rtol=2e-2), "batched mismatch"

    print("KERNEL_OK")
</pallas_src>

<mosaic_0001>
module attributes {stable_mosaic.version = 11 : i64} {
  func.func @_mlp_kernel(%arg0: i32, %arg1: memref<1x384xbf16, #tpu.memory_space<vmem>>, %arg2: memref<384x1024xi8, #tpu.memory_space<vmem>>, %arg3: memref<1x1024xf32, #tpu.memory_space<vmem>>, %arg4: memref<1x1024xf32, #tpu.memory_space<vmem>>, %arg5: memref<1x1024x768xi8, #tpu.memory_space<vmem>>, %arg6: memref<1x1x768xf32, #tpu.memory_space<vmem>>, %arg7: memref<1x1x768xf32, #tpu.memory_space<vmem>>, %arg8: memref<768x2048xi8, #tpu.memory_space<vmem>>, %arg9: memref<1x2048xf32, #tpu.memory_space<vmem>>, %arg10: memref<1x1x2048xf32, #tpu.memory_space<vmem>>) attributes {dimension_semantics = [#tpu.dimension_semantics<parallel>], iteration_bounds = array<i64: 2>, scalar_prefetch = 0 : i64, scratch_operands = 0 : i64, tpu.core_type = #tpu.core_type<tc>, window_params = [{pipeline_mode = #tpu.pipeline_mode<synchronous>, transform_indices = @transform_0, window_bounds = array<i64: 1, 384>}, {pipeline_mode = #tpu.pipeline_mode<synchronous>, transform_indices = @transform_1, window_bounds = array<i64: 384, 1024>}, {pipeline_mode = #tpu.pipeline_mode<synchronous>, transform_indices = @transform_2, window_bounds = array<i64: 1, 1024>}, {pipeline_mode = #tpu.pipeline_mode<synchronous>, transform_indices = @transform_3, window_bounds = array<i64: 1, 1024>}, {transform_indices = @transform_4, window_bounds = array<i64: 1, 1024, 768>}, {transform_indices = @transform_5, window_bounds = array<i64: 1, 1, 768>}, {transform_indices = @transform_6, window_bounds = array<i64: 1, 1, 768>}, {transform_indices = @transform_7, window_bounds = array<i64: 768, 2048>}, {pipeline_mode = #tpu.pipeline_mode<synchronous>, transform_indices = @transform_8, window_bounds = array<i64: 1, 2048>}, {transform_indices = @transform_9, window_bounds = array<i64: 1, 1, 2048>}]} {
    %c0 = arith.constant 0 : index
    %c0_0 = arith.constant 0 : index
    %0 = vector.load %arg1[%c0, %c0_0] : memref<1x384xbf16, #tpu.memory_space<vmem>>, vector<1x384xbf16>
    %c0_1 = arith.constant 0 : index
    %c0_2 = arith.constant 0 : index
    %1 = vector.load %arg2[%c0_1, %c0_2] : memref<384x1024xi8, #tpu.memory_space<vmem>>, vector<384x1024xi8>
    %2 = arith.sitofp %1 : vector<384x1024xi8> to vector<384x1024xbf16>
    %cst = arith.constant dense<0.000000e+00> : vector<1x1024xf32>
    %3 = tpu.matmul %0, %2, %cst {dimension_numbers = #tpu.dot_dimension_numbers<[1], [0], [0], [1], [0, 0, 1, 1], [], []>} : vector<1x384xbf16>, vector<384x1024xbf16>, vector<1x1024xf32> -> vector<1x1024xf32>
    %c0_3 = arith.constant 0 : index
    %c0_4 = arith.constant 0 : index
    %4 = vector.load %arg3[%c0_3, %c0_4] : memref<1x1024xf32, #tpu.memory_space<vmem>>, vector<1x1024xf32>
    %5 = arith.mulf %3, %4 : vector<1x1024xf32>
    %c0_5 = arith.constant 0 : index
    %c0_6 = arith.constant 0 : index
    %6 = vector.load %arg4[%c0_5, %c0_6] : memref<1x1024xf32, #tpu.memory_space<vmem>>, vector<1x1024xf32>
    %7 = arith.addf %5, %6 : vector<1x1024xf32>
    %cst_7 = arith.constant 0.000000e+00 : f32
    %8 = vector.broadcast %cst_7 : f32 to vector<1x1024xf32>
    %9 = arith.cmpf ogt, %7, %8 : vector<1x1024xf32>
    %cst_8 = arith.constant 0.00999999977 : f32
    %10 = vector.broadcast %cst_8 : f32 to vector<1x1024xf32>
    %11 = arith.mulf %10, %7 : vector<1x1024xf32>
    %12 = arith.select %9, %7, %11 : vector<1x1024xi1>, vector<1x1024xf32>
    %c0_9 = arith.constant 0 : index
    %c0_10 = arith.constant 0 : index
    %c0_11 = arith.constant 0 : index
    %13 = vector.load %arg5[%c0_9, %c0_10, %c0_11] : memref<1x1024x768xi8, #tpu.memory_space<vmem>>, vector<1x1024x768xi8>
    %14 = vector.shape_cast %13 : vector<1x1024x768xi8> to vector<1024x768xi8>
    %15 = arith.sitofp %14 : vector<1024x768xi8> to vector<1024x768xbf16>
    %16 = arith.truncf %12 : vector<1x1024xf32> to vector<1x1024xbf16>
    %cst_12 = arith.constant dense<0.000000e+00> : vector<1x768xf32>
    %17 = tpu.matmul %16, %15, %cst_12 {dimension_numbers = #tpu.dot_dimension_numbers<[1], [0], [0], [1], [0, 0, 1, 1], [], []>} : vector<1x1024xbf16>, vector<1024x768xbf16>, vector<1x768xf32> -> vector<1x768xf32>
    %c0_13 = arith.constant 0 : index
    %c0_14 = arith.constant 0 : index
    %c0_15 = arith.constant 0 : index
    %18 = vector.load %arg6[%c0_13, %c0_14, %c0_15] : memref<1x1x768xf32, #tpu.memory_space<vmem>>, vector<1x1x768xf32>
    %19 = vector.shape_cast %18 : vector<1x1x768xf32> to vector<1x768xf32>
    %20 = arith.mulf %17, %19 : vector<1x768xf32>
    %c0_16 = arith.constant 0 : index
    %c0_17 = arith.constant 0 : index
    %c0_18 = arith.constant 0 : index
    %21 = vector.load %arg7[%c0_16, %c0_17, %c0_18] : memref<1x1x768xf32, #tpu.memory_space<vmem>>, vector<1x1x768xf32>
    %22 = vector.shape_cast %21 : vector<1x1x768xf32> to vector<1x768xf32>
    %23 = arith.addf %20, %22 : vector<1x768xf32>
    %cst_19 = arith.constant 0.000000e+00 : f32
    %24 = vector.broadcast %cst_19 : f32 to vector<1x768xf32>
    %25 = arith.cmpf ogt, %23, %24 : vector<1x768xf32>
    %cst_20 = arith.constant 0.00999999977 : f32
    %26 = vector.broadcast %cst_20 : f32 to vector<1x768xf32>
    %27 = arith.mulf %26, %23 : vector<1x768xf32>
    %28 = arith.select %25, %23, %27 : vector<1x768xi1>, vector<1x768xf32>
    %c0_21 = arith.constant 0 : index
    %c0_22 = arith.constant 0 : index
    %29 = vector.load %arg8[%c0_21, %c0_22] : memref<768x2048xi8, #tpu.memory_space<vmem>>, vector<768x2048xi8>
    %30 = arith.sitofp %29 : vector<768x2048xi8> to vector<768x2048xbf16>
    %31 = arith.truncf %28 : vector<1x768xf32> to vector<1x768xbf16>
    %cst_23 = arith.constant dense<0.000000e+00> : vector<1x2048xf32>
    %32 = tpu.matmul %31, %30, %cst_23 {dimension_numbers = #tpu.dot_dimension_numbers<[1], [0], [0], [1], [0, 0, 1, 1], [], []>} : vector<1x768xbf16>, vector<768x2048xbf16>, vector<1x2048xf32> -> vector<1x2048xf32>
    %c0_24 = arith.constant 0 : index
    %c0_25 = arith.constant 0 : index
    %33 = vector.load %arg9[%c0_24, %c0_25] : memref<1x2048xf32, #tpu.memory_space<vmem>>, vector<1x2048xf32>
    %34 = arith.mulf %32, %33 : vector<1x2048xf32>
    %c0_26 = arith.constant 0 : index
    %c0_27 = arith.constant 0 : index
    %c0_28 = arith.constant 0 : index
    %35 = vector.load %arg10[%c0_26, %c0_27, %c0_28] : memref<1x1x2048xf32, #tpu.memory_space<vmem>>, vector<1x1x2048xf32>
    %36 = vector.shape_cast %35 : vector<1x1x2048xf32> to vector<1x2048xf32>
    %37 = vector.shape_cast %34 : vector<1x2048xf32> to vector<1x1x2048xf32>
    tpu.vector_store %arg10[%c0_26, %c0_27, %c0_28], %37 {strides = array<i32>} : memref<1x1x2048xf32, #tpu.memory_space<vmem>>, vector<1x1x2048xf32>,
    return
  }
  func.func @transform_0(%arg0: i32) -> (i32, i32) {
    %c0_i32 = arith.constant 0 : i32
    %c0_i32_0 = arith.constant 0 : i32
    %c0_i32_1 = arith.constant 0 : i32
    return %c0_i32, %c0_i32_0 : i32, i32
  }
  func.func @transform_1(%arg0: i32) -> (i32, i32) {
    %c0_i32 = arith.constant 0 : i32
    %c0_i32_0 = arith.constant 0 : i32
    %c0_i32_1 = arith.constant 0 : i32
    return %c0_i32, %c0_i32_0 : i32, i32
  }
  func.func @transform_2(%arg0: i32) -> (i32, i32) {
    %c0_i32 = arith.constant 0 : i32
    %c0_i32_0 = arith.constant 0 : i32
    %c0_i32_1 = arith.constant 0 : i32
    return %c0_i32, %c0_i32_0 : i32, i32
  }
  func.func @transform_3(%arg0: i32) -> (i32, i32) {
    %c0_i32 = arith.constant 0 : i32
    %c0_i32_0 = arith.constant 0 : i32
    %c0_i32_1 = arith.constant 0 : i32
    return %c0_i32, %c0_i32_0 : i32, i32
  }
  func.func @transform_4(%arg0: i32) -> (i32, i32, i32) {
    %c0_i32 = arith.constant 0 : i32
    %c0_i32_0 = arith.constant 0 : i32
    %c0_i32_1 = arith.constant 0 : i32
    return %arg0, %c0_i32, %c0_i32_0 : i32, i32, i32
  }
  func.func @transform_5(%arg0: i32) -> (i32, i32, i32) {
    %c0_i32 = arith.constant 0 : i32
    %c0_i32_0 = arith.constant 0 : i32
    %c0_i32_1 = arith.constant 0 : i32
    return %arg0, %c0_i32, %c0_i32_0 : i32, i32, i32
  }
  func.func @transform_6(%arg0: i32) -> (i32, i32, i32) {
    %c0_i32 = arith.constant 0 : i32
    %c0_i32_0 = arith.constant 0 : i32
    %c0_i32_1 = arith.constant 0 : i32
    return %arg0, %c0_i32, %c0_i32_0 : i32, i32, i32
  }
  func.func @transform_7(%arg0: i32) -> (i32, i32) {
    %c0_i32 = arith.constant 0 : i32
    %c0_i32_0 = arith.constant 0 : i32
    return %arg0, %c0_i32 : i32, i32
  }
  func.func @transform_8(%arg0: i32) -> (i32, i32) {
    %c0_i32 = arith.constant 0 : i32
    %c0_i32_0 = arith.constant 0 : i32
    %c0_i32_1 = arith.constant 0 : i32
    return %c0_i32, %c0_i32_0 : i32, i32
  }
  func.func @transform_9(%arg0: i32) -> (i32, i32, i32) {
    %c0_i32 = arith.constant 0 : i32
    %c0_i32_0 = arith.constant 0 : i32
    %c0_i32_1 = arith.constant 0 : i32
    return %arg0, %c0_i32, %c0_i32_0 : i32, i32, i32
  }
}

</mosaic_0001>

<llo_original>
// kernel: _forward_2d.1
$region0: #{_forward_2d.1}
  #allocation0 [shape = 'u32[]', space=smem, size = 0x4, offset = 0x4, fixed_abs, tag = 'smem constant byte address 0x4 - core index']
  #allocation1 [shape = 'u32[144,128]{1,0:T(1,128)}', space=vmem, size = 0x12000, scoped, tag = 'internal scratch']
  %s0 = inlined_call_operand.vmem [shape: bf16[1,384], index: 0, kind: input, shape index: {}]
  %s1 = inlined_call_operand.hbm [shape: s8[384,1024], index: 1, kind: input, shape index: {}]
  %s2 = inlined_call_operand.hbm [shape: f32[1,1024], index: 2, kind: input, shape index: {}]
  %s3 = inlined_call_operand.hbm [shape: f32[1,1024], index: 3, kind: input, shape index: {}]
  %s4 = inlined_call_operand.hbm [shape: s8[2,1024,768], index: 4, kind: input, shape index: {}]
  %s5 = inlined_call_operand.hbm [shape: f32[2,1,768], index: 5, kind: input, shape index: {}]
  %s6 = inlined_call_operand.hbm [shape: f32[2,1,768], index: 6, kind: input, shape index: {}]
  %s7 = inlined_call_operand.hbm [shape: s8[1536,2048], index: 7, kind: input, shape index: {}]
  %s8 = inlined_call_operand.hbm [shape: f32[1,2048], index: 8, kind: input, shape index: {}]
  %s9 = inlined_call_operand.vmem [shape: f32[2,1,2048], index: 9, kind: output, shape index: {}]
  %s10 = sld [smem:[#allocation0]]
  $region101: #{_forward_2d.1} parent=0
    _
  %s12 = ssub.s32 1, %s10
  %s13 = scalar_select 0, %s12, %s10
  $region1: #{_forward_2d.1} parent=0
    #allocation2 [shape = 'u8[393216]{0}', space=vmem, size = 0x60000, scoped, tag = 'input window, operand 1, single buffered']
    #allocation3 [shape = 's32[2]{0}', space=sflag, size = 0x8, scoped, tag = 'scoped memory for _forward_2d.1']
    #allocation4 [shape = 'u8[4096]{0}', space=vmem, size = 0x1000, scoped, tag = 'input window, operand 2, single buffered']
    #allocation5 [shape = 's32[1]{0}', space=sflag, size = 0x4, scoped, tag = 'scoped memory for _forward_2d.1']
    #allocation6 [shape = 'u8[4096]{0}', space=vmem, size = 0x1000, scoped, tag = 'input window, operand 3, single buffered']
    #allocation7 [shape = 'u8[1572864]{0}', space=vmem, size = 0x180000, scoped, tag = 'input window, operand 4']
    #allocation8 [shape = 's32[2]{0}', space=sflag, size = 0x8, scoped, tag = 'scoped memory for _forward_2d.1']
    #allocation9 [shape = 'u8[6144]{0}', space=vmem, size = 0x1800, scoped, tag = 'input window, operand 5']
    #allocation10 [shape = 'u8[6144]{0}', space=vmem, size = 0x1800, scoped, tag = 'input window, operand 6']
    #allocation11 [shape = 's32[2]{0}', space=sflag, size = 0x8, scoped, tag = 'scoped memory for _forward_2d.1']
    #allocation12 [shape = 'u8[3145728]{0}', space=vmem, size = 0x300000, scoped, tag = 'input window, operand 7']
    #allocation13 [shape = 'u8[8192]{0}', space=vmem, size = 0x2000, scoped, tag = 'input window, operand 8, single buffered']
    #allocation14 [shape = 's32[1]{0}', space=sflag, size = 0x4, scoped, tag = 'scoped memory for _forward_2d.1']
    %14 = vsyncpa [#allocation3], 0
    %15 = vsyncpa [#allocation5], 0
    %16 = vsyncpa [#allocation8], 0
    %s17 = scalar_lea.sflag [#allocation8], 1
    %18 = vsyncpa %s17, 0
    %19 = vsyncpa [#allocation11], 0
    %s20 = scalar_lea.sflag [#allocation11], 1
    %21 = vsyncpa %s20, 0
    %22 = vsyncpa [#allocation14], 0
    loop: start=0, step=1, limit=4
    $region2: #{_forward_2d.1} parent=1 // loop_pre_header
      _
    $region3: #{_forward_2d.1} parent=1 // loop_header
      %s24 = sphi 0, %s28
      %p25 = scmp.ge.s32.totalorder %s24, 4
      %s32 = sphi 0, %s32
      %s34 = sphi 0, %s32
      %s35 = sphi 0, %s34
      %s49 = sphi 0, %s35
      %s53 = sphi 0, %s53
      %s55 = sphi 0, %s53
      %s56 = sphi 0, %s55
      %s70 = sphi 0, %s56
      %s74 = sphi 0, %s74
      %s76 = sphi 0, %s74
      %s77 = sphi 0, %s76
      %s91 = sphi 0, %s77
      %s95 = sphi 0, %s95
      %s97 = sphi 0, %s95
      %s98 = sphi 0, %s97
      %s112 = sphi 0, %s98
      %s118 = sphi 0, %s120
      %s121 = sphi 0, %s118
      %s122 = sphi 0, %s121
      %s138 = sphi 0, %s122
      %s144 = sphi 0, %s146
      %s147 = sphi 0, %s144
      %s148 = sphi 0, %s147
      %s164 = sphi 0, %s148
      %s170 = sphi 0, %s172
      %s173 = sphi 0, %s170
      %s174 = sphi 0, %s173
      %s190 = sphi 0, %s174
      %s196 = sphi 0, %s198
      %s199 = sphi 0, %s196
      %s200 = sphi 0, %s199
      %s216 = sphi 0, %s200
      %s220 = sphi 0, %s220
      %s222 = sphi 0, %s220
      %s223 = sphi 0, %s222
      %s237 = sphi 0, %s223
      %s243 = sphi 0, %s245
      %s246 = sphi 0, %s243
      %s247 = sphi 0, %s246
      %s263 = sphi 0, %s247
    $region4: #{_forward_2d.1} parent=1 // loop_header_branch
      %27 = sbr.rel (%p25) target = $region8
    $region5: #{_forward_2d.1} parent=1 // loop_body
      %s29 = ssub.s32 %s24, 1
      %s30 = ssub.s32 %s24, 2
      %s31 = sadd.s32 %s24, 1
      %s33 = sadd.s32 %s32, 1
      %p36 = scmp.eq.s32.totalorder %s24, 1
      %p37 = scmp.ne.s32.totalorder %s32, %s34
      %p38 = scmp.eq.s32.totalorder %s24, 0
      %p39 = por %p37, %p38
      %p40 = scmp.ne.s32.totalorder %s32, %s34
      %p41 = scmp.eq.s32.totalorder %s29, 1
      %p42 = por %p40, %p41
      %p43 = scmp.ne.s32.totalorder %s34, %s35
      %p44 = scmp.eq.s32.totalorder %s29, 0
      %p45 = por %p43, %p44
      %p46 = scmp.ne.s32.totalorder %s34, %s35
      %p47 = scmp.eq.s32.totalorder %s30, 1
      %p48 = por %p46, %p47
      %p50 = scmp.ne.s32.totalorder %s35, %s49
      %p51 = scmp.eq.s32.totalorder %s30, 0
      %p52 = por %p50, %p51
      %s54 = sadd.s32 %s53, 1
      %p57 = scmp.eq.s32.totalorder %s24, 1
      %p58 = scmp.ne.s32.totalorder %s53, %s55
      %p59 = scmp.eq.s32.totalorder %s24, 0
      %p60 = por %p58, %p59
      %p61 = scmp.ne.s32.totalorder %s53, %s55
      %p62 = scmp.eq.s32.totalorder %s29, 1
      %p63 = por %p61, %p62
      %p64 = scmp.ne.s32.totalorder %s55, %s56
      %p65 = scmp.eq.s32.totalorder %s29, 0
      %p66 = por %p64, %p65
      %p67 = scmp.ne.s32.totalorder %s55, %s56
      %p68 = scmp.eq.s32.totalorder %s30, 1
      %p69 = por %p67, %p68
      %p71 = scmp.ne.s32.totalorder %s56, %s70
      %p72 = scmp.eq.s32.totalorder %s30, 0
      %p73 = por %p71, %p72
      %s75 = sadd.s32 %s74, 1
      %p78 = scmp.eq.s32.totalorder %s24, 1
      %p79 = scmp.ne.s32.totalorder %s74, %s76
      %p80 = scmp.eq.s32.totalorder %s24, 0
      %p81 = por %p79, %p80
      %p82 = scmp.ne.s32.totalorder %s74, %s76
      %p83 = scmp.eq.s32.totalorder %s29, 1
      %p84 = por %p82, %p83
      %p85 = scmp.ne.s32.totalorder %s76, %s77
      %p86 = scmp.eq.s32.totalorder %s29, 0
      %p87 = por %p85, %p86
      %p88 = scmp.ne.s32.totalorder %s76, %s77
      %p89 = scmp.eq.s32.totalorder %s30, 1
      %p90 = por %p88, %p89
      %p92 = scmp.ne.s32.totalorder %s77, %s91
      %p93 = scmp.eq.s32.totalorder %s30, 0
      %p94 = por %p92, %p93
      %s96 = sadd.s32 %s95, 1
      %p99 = scmp.eq.s32.totalorder %s24, 1
      %p100 = scmp.ne.s32.totalorder %s95, %s97
      %p101 = scmp.eq.s32.totalorder %s24, 0
      %p102 = por %p100, %p101
      %p103 = scmp.ne.s32.totalorder %s95, %s97
      %p104 = scmp.eq.s32.totalorder %s29, 1
      %p105 = por %p103, %p104
      %p106 = scmp.ne.s32.totalorder %s97, %s98
      %p107 = scmp.eq.s32.totalorder %s29, 0
      %p108 = por %p106, %p107
      %p109 = scmp.ne.s32.totalorder %s97, %s98
      %p110 = scmp.eq.s32.totalorder %s30, 1
      %p111 = por %p109, %p110
      %p113 = scmp.ne.s32.totalorder %s98, %s112
      %p114 = scmp.eq.s32.totalorder %s30, 0
      %p115 = por %p113, %p114
      %s116 = ssub.s32 %s24, %s31
      %p117 = scmp.eq.s32.totalorder %s116, 0
      %s119 = sadd.s32 %s118, 1
      %s120 = scalar_select %p117, %s118, %s119
      %p123 = pneg %p117
      %p124 = scmp.eq.s32.totalorder %s24, 1
      %p125 = por %p123, %p124
      %p126 = scmp.ne.s32.totalorder %s118, %s121
      %p127 = scmp.eq.s32.totalorder %s24, 0
      %p128 = por %p126, %p127
      %p129 = scmp.ne.s32.totalorder %s118, %s121
      %p130 = scmp.eq.s32.totalorder %s29, 1
      %p131 = por %p129, %p130
      %p132 = scmp.ne.s32.totalorder %s121, %s122
      %p133 = scmp.eq.s32.totalorder %s29, 0
      %p134 = por %p132, %p133
      %p135 = scmp.ne.s32.totalorder %s121, %s122
      %p136 = scmp.eq.s32.totalorder %s30, 1
      %p137 = por %p135, %p136
      %p139 = scmp.ne.s32.totalorder %s122, %s138
      %p140 = scmp.eq.s32.totalorder %s30, 0
      %p141 = por %p139, %p140
      %s142 = ssub.s32 %s24, %s31
      %p143 = scmp.eq.s32.totalorder %s142, 0
      %s145 = sadd.s32 %s144, 1
      %s146 = scalar_select %p143, %s144, %s145
      %p149 = pneg %p143
      %p150 = scmp.eq.s32.totalorder %s24, 1
      %p151 = por %p149, %p150
      %p152 = scmp.ne.s32.totalorder %s144, %s147
      %p153 = scmp.eq.s32.totalorder %s24, 0
      %p154 = por %p152, %p153
      %p155 = scmp.ne.s32.totalorder %s144, %s147
      %p156 = scmp.eq.s32.totalorder %s29, 1
      %p157 = por %p155, %p156
      %p158 = scmp.ne.s32.totalorder %s147, %s148
      %p159 = scmp.eq.s32.totalorder %s29, 0
      %p160 = por %p158, %p159
      %p161 = scmp.ne.s32.totalorder %s147, %s148
      %p162 = scmp.eq.s32.totalorder %s30, 1
      %p163 = por %p161, %p162
      %p165 = scmp.ne.s32.totalorder %s148, %s164
      %p166 = scmp.eq.s32.totalorder %s30, 0
      %p167 = por %p165, %p166
      %s168 = ssub.s32 %s24, %s31
      %p169 = scmp.eq.s32.totalorder %s168, 0
      %s171 = sadd.s32 %s170, 1
      %s172 = scalar_select %p169, %s170, %s171
      %p175 = pneg %p169
      %p176 = scmp.eq.s32.totalorder %s24, 1
      %p177 = por %p175, %p176
      %p178 = scmp.ne.s32.totalorder %s170, %s173
      %p179 = scmp.eq.s32.totalorder %s24, 0
      %p180 = por %p178, %p179
      %p181 = scmp.ne.s32.totalorder %s170, %s173
      %p182 = scmp.eq.s32.totalorder %s29, 1
      %p183 = por %p181, %p182
      %p184 = scmp.ne.s32.totalorder %s173, %s174
      %p185 = scmp.eq.s32.totalorder %s29, 0
      %p186 = por %p184, %p185
      %p187 = scmp.ne.s32.totalorder %s173, %s174
      %p188 = scmp.eq.s32.totalorder %s30, 1
      %p189 = por %p187, %p188
      %p191 = scmp.ne.s32.totalorder %s174, %s190
      %p192 = scmp.eq.s32.totalorder %s30, 0
      %p193 = por %p191, %p192
      %s194 = ssub.s32 %s24, %s31
      %p195 = scmp.eq.s32.totalorder %s194, 0
      %s197 = sadd.s32 %s196, 1
      %s198 = scalar_select %p195, %s196, %s197
      %p201 = pneg %p195
      %p202 = scmp.eq.s32.totalorder %s24, 1
      %p203 = por %p201, %p202
      %p204 = scmp.ne.s32.totalorder %s196, %s199
      %p205 = scmp.eq.s32.totalorder %s24, 0
      %p206 = por %p204, %p205
      %p207 = scmp.ne.s32.totalorder %s196, %s199
      %p208 = scmp.eq.s32.totalorder %s29, 1
      %p209 = por %p207, %p208
      %p210 = scmp.ne.s32.totalorder %s199, %s200
      %p211 = scmp.eq.s32.totalorder %s29, 0
      %p212 = por %p210, %p211
      %p213 = scmp.ne.s32.totalorder %s199, %s200
      %p214 = scmp.eq.s32.totalorder %s30, 1
      %p215 = por %p213, %p214
      %p217 = scmp.ne.s32.totalorder %s200, %s216
      %p218 = scmp.eq.s32.totalorder %s30, 0
      %p219 = por %p217, %p218
      %s221 = sadd.s32 %s220, 1
      %p224 = scmp.eq.s32.totalorder %s24, 1
      %p225 = scmp.ne.s32.totalorder %s220, %s222
      %p226 = scmp.eq.s32.totalorder %s24, 0
      %p227 = por %p225, %p226
      %p228 = scmp.ne.s32.totalorder %s220, %s222
      %p229 = scmp.eq.s32.totalorder %s29, 1
      %p230 = por %p228, %p229
      %p231 = scmp.ne.s32.totalorder %s222, %s223
      %p232 = scmp.eq.s32.totalorder %s29, 0
      %p233 = por %p231, %p232
      %p234 = scmp.ne.s32.totalorder %s222, %s223
      %p235 = scmp.eq.s32.totalorder %s30, 1
      %p236 = por %p234, %p235
      %p238 = scmp.ne.s32.totalorder %s223, %s237
      %p239 = scmp.eq.s32.totalorder %s30, 0
      %p240 = por %p238, %p239
      %s241 = ssub.s32 %s24, %s31
      %p242 = scmp.eq.s32.totalorder %s241, 0
      %s244 = sadd.s32 %s243, 1
      %s245 = scalar_select %p242, %s243, %s244
      %p248 = pneg %p242
      %p249 = scmp.eq.s32.totalorder %s24, 1
      %p250 = por %p248, %p249
      %p251 = scmp.ne.s32.totalorder %s243, %s246
      %p252 = scmp.eq.s32.totalorder %s24, 0
      %p253 = por %p251, %p252
      %p254 = scmp.ne.s32.totalorder %s243, %s246
      %p255 = scmp.eq.s32.totalorder %s29, 1
      %p256 = por %p254, %p255
      %p257 = scmp.ne.s32.totalorder %s246, %s247
      %p258 = scmp.eq.s32.totalorder %s29, 0
      %p259 = por %p257, %p258
      %p260 = scmp.ne.s32.totalorder %s246, %s247
      %p261 = scmp.eq.s32.totalorder %s30, 1
      %p262 = por %p260, %p261
      %p264 = scmp.ne.s32.totalorder %s247, %s263
      %p265 = scmp.eq.s32.totalorder %s30, 0
      %p266 = por %p264, %p265
      %p267 = scmp.le.s32.totalorder 1, %s24
      %p268 = scmp.lt.s32.totalorder %s24, 3
      %p269 = pnand %p267, %p268
      %p270 = pneg %p269
      // Predicated region
      $region9: #{_forward_2d.1} parent=5 // pred_check
        _
      $region10: #{_forward_2d.1} parent=5 // pred_check_branch
        %272 = sbr.rel (%p269) target = $region12
      $region11: #{_forward_2d.1} parent=5 // pred_region
        %s273 = ssub.s32 %s24, 1
        // Predicated region
        $region13: #{_forward_2d.1} parent=11 // pred_check
          %p274 = pneg %p45
        $region14: #{_forward_2d.1} parent=11 // pred_check_branch
          %276 = sbr.rel (%p274) target = $region16
        $region15: #{_forward_2d.1} parent=11 // pred_region
          _
        $region16: #{_forward_2d.1} parent=11 // pred_fallthru
          _
        // Predicated region
        $region17: #{_forward_2d.1} parent=11 // pred_check
          %p277 = pneg %p66
        $region18: #{_forward_2d.1} parent=11 // pred_check_branch
          %279 = sbr.rel (%p277) target = $region20
        $region19: #{_forward_2d.1} parent=11 // pred_region
          %s281 = ssub.s32 12288, 12288
          %282 = vsyncadd [#allocation3], %s281
          %s283 = sshll.u32 [#allocation2], 4
          %s284 = int_to_ptr.vmem [resolvable:$true] %s283
          %289 = dma.hbm_to_vmem [thread:$0]  %s1, 12288, %s284, [#allocation3], 1024, 1024, 64
        $region20: #{_forward_2d.1} parent=11 // pred_fallthru
          _
        // Predicated region
        $region21: #{_forward_2d.1} parent=11 // pred_check
          %p290 = pneg %p87
        $region22: #{_forward_2d.1} parent=11 // pred_check_branch
          %292 = sbr.rel (%p290) target = $region24
        $region23: #{_forward_2d.1} parent=11 // pred_region
          %s294 = ssub.s32 128, 128
          %295 = vsyncadd [#allocation5], %s294
          %s297 = sshll.u32 [#allocation4], 4
          %s298 = int_to_ptr.vmem [resolvable:$true] %s297
          %300 = dma.hbm_to_vmem [thread:$0]  %s2, 128, %s298, [#allocation5]
        $region24: #{_forward_2d.1} parent=11 // pred_fallthru
          _
        // Predicated region
        $region25: #{_forward_2d.1} parent=11 // pred_check
          %p301 = pneg %p108
        $region26: #{_forward_2d.1} parent=11 // pred_check_branch
          %303 = sbr.rel (%p301) target = $region28
        $region27: #{_forward_2d.1} parent=11 // pred_region
          %s305 = ssub.s32 128, 128
          %306 = vsyncadd [#allocation5], %s305
          %s308 = sshll.u32 [#allocation6], 4
          %s309 = int_to_ptr.vmem [resolvable:$true] %s308
          %311 = dma.hbm_to_vmem [thread:$0]  %s3, 128, %s309, [#allocation5]
        $region28: #{_forward_2d.1} parent=11 // pred_fallthru
          _
        // Predicated region
        $region29: #{_forward_2d.1} parent=11 // pred_check
          %p312 = pneg %p233
        $region30: #{_forward_2d.1} parent=11 // pred_check_branch
          %314 = sbr.rel (%p312) target = $region32
        $region31: #{_forward_2d.1} parent=11 // pred_region
          %s316 = ssub.s32 256, 256
          %317 = vsyncadd [#allocation14], %s316
          %s319 = sshll.u32 [#allocation13], 4
          %s320 = int_to_ptr.vmem [resolvable:$true] %s319
          %322 = dma.hbm_to_vmem [thread:$0]  %s8, 256, %s320, [#allocation14]
        $region32: #{_forward_2d.1} parent=11 // pred_fallthru
          _
      $region12: #{_forward_2d.1} parent=5 // pred_fallthru
        _
      %p323 = scmp.lt.s32.totalorder %s24, 2
      // Predicated region
      $region33: #{_forward_2d.1} parent=5 // pred_check
        %p324 = pneg %p323
      $region34: #{_forward_2d.1} parent=5 // pred_check_branch
        %326 = sbr.rel (%p324) target = $region36
      $region35: #{_forward_2d.1} parent=5 // pred_region
        // Predicated region
        $region37: #{_forward_2d.1} parent=35 // pred_check
          %p327 = pneg %p128
        $region38: #{_forward_2d.1} parent=35 // pred_check_branch
          %329 = sbr.rel (%p327) target = $region40
        $region39: #{_forward_2d.1} parent=35 // pred_region
          %s330 = sand.u32 %s24, 1
          %s331 = scalar_lea.sflag [#allocation8], %s330
          %s332 = sand.u32 %s118, 1
          %s333 = smul.addr %s332, 1536
          %s334 = scalar_lea.vmem [#allocation7], %s333
          %s336 = ssub.s32 24576, 24576
          %337 = vsyncadd %s331, %s336
          %s338 = smul.addr %s24, 192
          %s339 = smul.addr %s338, 128
          %s340 = scalar_lea.hbm %s4, %s339
          %s341 = sshll.u32 %s334, 4
          %s342 = int_to_ptr.vmem [resolvable:$true] %s341
          %347 = dma.hbm_to_vmem [thread:$0]  %s340, 24576, %s342, %s331, 768, 768, 48
        $region40: #{_forward_2d.1} parent=35 // pred_fallthru
          _
        // Predicated region
        $region41: #{_forward_2d.1} parent=35 // pred_check
          %p348 = pneg %p154
        $region42: #{_forward_2d.1} parent=35 // pred_check_branch
          %350 = sbr.rel (%p348) target = $region44
        $region43: #{_forward_2d.1} parent=35 // pred_region
          %s351 = sand.u32 %s24, 1
          %s352 = scalar_lea.sflag [#allocation8], %s351
          %s353 = sand.u32 %s144, 1
          %s354 = smul.addr %s353, 6
          %s355 = scalar_lea.vmem [#allocation9], %s354
          %s357 = ssub.s32 96, 96
          %358 = vsyncadd %s352, %s357
          %s359 = smul.addr %s24, 6
          %s360 = smul.addr %s359, 16
          %s361 = scalar_lea.hbm %s5, %s360
          %s363 = sshll.u32 %s355, 4
          %s364 = int_to_ptr.vmem [resolvable:$true] %s363
          %366 = dma.hbm_to_vmem [thread:$0]  %s361, 96, %s364, %s352
        $region44: #{_forward_2d.1} parent=35 // pred_fallthru
          _
        // Predicated region
        $region45: #{_forward_2d.1} parent=35 // pred_check
          %p367 = pneg %p180
        $region46: #{_forward_2d.1} parent=35 // pred_check_branch
          %369 = sbr.rel (%p367) target = $region48
        $region47: #{_forward_2d.1} parent=35 // pred_region
          %s370 = sand.u32 %s24, 1
          %s371 = scalar_lea.sflag [#allocation11], %s370
          %s372 = sand.u32 %s170, 1
          %s373 = smul.addr %s372, 6
          %s374 = scalar_lea.vmem [#allocation10], %s373
          %s376 = ssub.s32 96, 96
          %377 = vsyncadd %s371, %s376
          %s378 = smul.addr %s24, 6
          %s379 = smul.addr %s378, 16
          %s380 = scalar_lea.hbm %s6, %s379
          %s382 = sshll.u32 %s374, 4
          %s383 = int_to_ptr.vmem [resolvable:$true] %s382
          %385 = dma.hbm_to_vmem [thread:$0]  %s380, 96, %s383, %s371
        $region48: #{_forward_2d.1} parent=35 // pred_fallthru
          _
        // Predicated region
        $region49: #{_forward_2d.1} parent=35 // pred_check
          %p386 = pneg %p206
        $region50: #{_forward_2d.1} parent=35 // pred_check_branch
          %388 = sbr.rel (%p386) target = $region52
        $region51: #{_forward_2d.1} parent=35 // pred_region
          %s389 = sand.u32 %s24, 1
          %s390 = scalar_lea.sflag [#allocation11], %s389
          %s391 = sand.u32 %s196, 1
          %s392 = smul.addr %s391, 3072
          %s393 = scalar_lea.vmem [#allocation12], %s392
          %s394 = smul.u32 24, %s24
          %s396 = ssub.s32 49152, 49152
          %397 = vsyncadd %s390, %s396
          %s398 = smul.addr %s394, 16
          %s399 = smul.addr %s398, 128
          %s400 = scalar_lea.hbm %s7, %s399
          %s401 = sshll.u32 %s393, 4
          %s402 = int_to_ptr.vmem [resolvable:$true] %s401
          %407 = dma.hbm_to_vmem [thread:$0]  %s400, 49152, %s402, %s390, 2048, 2048, 128
        $region52: #{_forward_2d.1} parent=35 // pred_fallthru
          _
      $region36: #{_forward_2d.1} parent=5 // pred_fallthru
        _
      %p408 = scmp.le.s32.totalorder 1, %s24
      %p409 = scmp.lt.s32.totalorder %s24, 3
      %p410 = pnand %p408, %p409
      %p411 = pneg %p410
      // Predicated region
      $region53: #{_forward_2d.1} parent=5 // pred_check
        _
      $region54: #{_forward_2d.1} parent=5 // pred_check_branch
        %413 = sbr.rel (%p410) target = $region56
      $region55: #{_forward_2d.1} parent=5 // pred_region
        %s414 = ssub.s32 %s24, 1
        // Predicated region
        $region57: #{_forward_2d.1} parent=55 // pred_check
          %p415 = pneg %p66
        $region58: #{_forward_2d.1} parent=55 // pred_check_branch
          %417 = sbr.rel (%p415) target = $region60
        $region59: #{_forward_2d.1} parent=55 // pred_region
          %418 = dma.done [#allocation3], 12288
        $region60: #{_forward_2d.1} parent=55 // pred_fallthru
          _
        // Predicated region
        $region61: #{_forward_2d.1} parent=55 // pred_check
          %p419 = pneg %p87
        $region62: #{_forward_2d.1} parent=55 // pred_check_branch
          %421 = sbr.rel (%p419) target = $region64
        $region63: #{_forward_2d.1} parent=55 // pred_region
          %422 = dma.done [#allocation5], 128
        $region64: #{_forward_2d.1} parent=55 // pred_fallthru
          _
        // Predicated region
        $region65: #{_forward_2d.1} parent=55 // pred_check
          %p423 = pneg %p108
        $region66: #{_forward_2d.1} parent=55 // pred_check_branch
          %425 = sbr.rel (%p423) target = $region68
        $region67: #{_forward_2d.1} parent=55 // pred_region
          %426 = dma.done [#allocation5], 128
        $region68: #{_forward_2d.1} parent=55 // pred_fallthru
          _
        %s427 = sand.u32 %s29, 1
        %s428 = scalar_lea.sflag [#allocation8], %s427
        %s429 = sand.u32 %s121, 1
        %s430 = smul.addr %s429, 1536
        %s431 = scalar_lea.vmem [#allocation7], %s430
        // Predicated region
        $region69: #{_forward_2d.1} parent=55 // pred_check
          %p432 = pneg %p134
        $region70: #{_forward_2d.1} parent=55 // pred_check_branch
          %434 = sbr.rel (%p432) target = $region72
        $region71: #{_forward_2d.1} parent=55 // pred_region
          %435 = dma.done %s428, 24576
        $region72: #{_forward_2d.1} parent=55 // pred_fallthru
          _
        %s436 = sand.u32 %s29, 1
        %s437 = scalar_lea.sflag [#allocation8], %s436
        %s438 = sand.u32 %s147, 1
        %s439 = smul.addr %s438, 6
        %s440 = scalar_lea.vmem [#allocation9], %s439
        // Predicated region
        $region73: #{_forward_2d.1} parent=55 // pred_check
          %p441 = pneg %p160
        $region74: #{_forward_2d.1} parent=55 // pred_check_branch
          %443 = sbr.rel (%p441) target = $region76
        $region75: #{_forward_2d.1} parent=55 // pred_region
          %444 = dma.done %s437, 96
        $region76: #{_forward_2d.1} parent=55 // pred_fallthru
          _
        %s445 = sand.u32 %s29, 1
        %s446 = scalar_lea.sflag [#allocation11], %s445
        %s447 = sand.u32 %s173, 1
        %s448 = smul.addr %s447, 6
        %s449 = scalar_lea.vmem [#allocation10], %s448
        // Predicated region
        $region77: #{_forward_2d.1} parent=55 // pred_check
          %p450 = pneg %p186
        $region78: #{_forward_2d.1} parent=55 // pred_check_branch
          %452 = sbr.rel (%p450) target = $region80
        $region79: #{_forward_2d.1} parent=55 // pred_region
          %453 = dma.done %s446, 96
        $region80: #{_forward_2d.1} parent=55 // pred_fallthru
          _
        %s454 = sand.u32 %s29, 1
        %s455 = scalar_lea.sflag [#allocation11], %s454
        %s456 = sand.u32 %s199, 1
        %s457 = smul.addr %s456, 3072
        %s458 = scalar_lea.vmem [#allocation12], %s457
        // Predicated region
        $region81: #{_forward_2d.1} parent=55 // pred_check
          %p459 = pneg %p212
        $region82: #{_forward_2d.1} parent=55 // pred_check_branch
          %461 = sbr.rel (%p459) target = $region84
        $region83: #{_forward_2d.1} parent=55 // pred_region
          %462 = dma.done %s455, 49152
        $region84: #{_forward_2d.1} parent=55 // pred_fallthru
          _
        // Predicated region
        $region85: #{_forward_2d.1} parent=55 // pred_check
          %p463 = pneg %p233
        $region86: #{_forward_2d.1} parent=55 // pred_check_branch
          %465 = sbr.rel (%p463) target = $region88
        $region87: #{_forward_2d.1} parent=55 // pred_region
          %466 = dma.done [#allocation14], 256
        $region88: #{_forward_2d.1} parent=55 // pred_fallthru
          _
        %p467 = pneg %p45
        %p468 = pneg %p42
        %p469 = pneg %p66
        %p470 = pneg %p63
        %p471 = pneg %p87
        %p472 = pneg %p84
        %p473 = pneg %p108
        %p474 = pneg %p105
        %s475 = sand.u32 %s29, 1
        %s476 = scalar_lea.sflag [#allocation8], %s475
        %s477 = sand.u32 %s121, 1
        %s478 = smul.addr %s477, 1536
        %s479 = scalar_lea.vmem [#allocation7], %s478
        %p480 = pneg %p134
        %p481 = pneg %p131
        %s482 = sand.u32 %s29, 1
        %s483 = scalar_lea.sflag [#allocation8], %s482
        %s484 = sand.u32 %s147, 1
        %s485 = smul.addr %s484, 6
        %s486 = scalar_lea.vmem [#allocation9], %s485
        %p487 = pneg %p160
        %p488 = pneg %p157
        %s489 = sand.u32 %s29, 1
        %s490 = scalar_lea.sflag [#allocation11], %s489
        %s491 = sand.u32 %s173, 1
        %s492 = smul.addr %s491, 6
        %s493 = scalar_lea.vmem [#allocation10], %s492
        %p494 = pneg %p186
        %p495 = pneg %p183
        %s496 = sand.u32 %s29, 1
        %s497 = scalar_lea.sflag [#allocation11], %s496
        %s498 = sand.u32 %s199, 1
        %s499 = smul.addr %s498, 3072
        %s500 = scalar_lea.vmem [#allocation12], %s499
        %p501 = pneg %p212
        %p502 = pneg %p209
        %p503 = pneg %p233
        %p504 = pneg %p230
        %p505 = pneg %p259
        %p506 = pneg %p256
        %p507 = scmp.lt.s32.totalorder %s29, 1
        %s508 = scalar_select %p507, %s29, 1
        %s509 = smul.addr %s508, 16
        %s510 = scalar_lea.vmem %s9, %s509
        %s511 = smul.u32 24, %s29
        %p512 = scmp.lt.s32.totalorder %s29, 1
        %s513 = scalar_select %p512, %s29, 1
        %s514 = smul.addr %s513, 16
        %s515 = scalar_lea.vmem %s9, %s514
        %v517 = vld [vmem:[%s0] sm:$0x7]
        %v518 = vld [vmem:[#allocation2] sm:$0xff]
        %v519 = vld [vmem:[#allocation2 + $0x8] sm:$0xff]
        %v520 = vld [vmem:[#allocation2 + $0x10] sm:$0xff]
        %v521 = vld [vmem:[#allocation2 + $0x18] sm:$0xff]
        %v522 = vld [vmem:[#allocation2 + $0x20] sm:$0xff]
        %v523 = vld [vmem:[#allocation2 + $0x28] sm:$0xff]
        %v524 = vld [vmem:[#allocation2 + $0x30] sm:$0xff]
        %v525 = vld [vmem:[#allocation2 + $0x38] sm:$0xff]
        %v526 = vld [vmem:[#allocation2 + $0x40] sm:$0xff]
        %v527 = vld [vmem:[#allocation2 + $0x48] sm:$0xff]
        %v528 = vld [vmem:[#allocation2 + $0x50] sm:$0xff]
        %v529 = vld [vmem:[#allocation2 + $0x58] sm:$0xff]
        %v530 = vld [vmem:[#allocation2 + $0x60] sm:$0xff]
        %v531 = vld [vmem:[#allocation2 + $0x68] sm:$0xff]
        %v532 = vld [vmem:[#allocation2 + $0x70] sm:$0xff]
        %v533 = vld [vmem:[#allocation2 + $0x78] sm:$0xff]
        %v534 = vld [vmem:[#allocation2 + $0x80] sm:$0xff]
        %v535 = vld [vmem:[#allocation2 + $0x88] sm:$0xff]
        %v536 = vld [vmem:[#allocation2 + $0x90] sm:$0xff]
        %v537 = vld [vmem:[#allocation2 + $0x98] sm:$0xff]
        %v538 = vld [vmem:[#allocation2 + $0xa0] sm:$0xff]
        %v539 = vld [vmem:[#allocation2 + $0xa8] sm:$0xff]
        %v540 = vld [vmem:[#allocation2 + $0xb0] sm:$0xff]
        %v541 = vld [vmem:[#allocation2 + $0xb8] sm:$0xff]
        %v542 = vld [vmem:[#allocation2 + $0xc0] sm:$0xff]
        %v543 = vld [vmem:[#allocation2 + $0xc8] sm:$0xff]
        %v544 = vld [vmem:[#allocation2 + $0xd0] sm:$0xff]
        %v545 = vld [vmem:[#allocation2 + $0xd8] sm:$0xff]
        %v546 = vld [vmem:[#allocation2 + $0xe0] sm:$0xff]
        %v547 = vld [vmem:[#allocation2 + $0xe8] sm:$0xff]
        %v548 = vld [vmem:[#allocation2 + $0xf0] sm:$0xff]
        %v549 = vld [vmem:[#allocation2 + $0xf8] sm:$0xff]
        %v550 = vld [vmem:[#allocation2 + $0x100] sm:$0xff]
        %v551 = vld [vmem:[#allocation2 + $0x108] sm:$0xff]
        %v552 = vld [vmem:[#allocation2 + $0x110] sm:$0xff]
        %v553 = vld [vmem:[#allocation2 + $0x118] sm:$0xff]
        %v554 = vld [vmem:[#allocation2 + $0x120] sm:$0xff]
        %v555 = vld [vmem:[#allocation2 + $0x128] sm:$0xff]
        %v556 = vld [vmem:[#allocation2 + $0x130] sm:$0xff]
        %v557 = vld [vmem:[#allocation2 + $0x138] sm:$0xff]
        %v558 = vld [vmem:[#allocation2 + $0x140] sm:$0xff]
        %v559 = vld [vmem:[#allocation2 + $0x148] sm:$0xff]
        %v560 = vld [vmem:[#allocation2 + $0x150] sm:$0xff]
        %v561 = vld [vmem:[#allocation2 + $0x158] sm:$0xff]
        %v562 = vld [vmem:[#allocation2 + $0x160] sm:$0xff]
        %v563 = vld [vmem:[#allocation2 + $0x168] sm:$0xff]
        %v564 = vld [vmem:[#allocation2 + $0x170] sm:$0xff]
        %v565 = vld [vmem:[#allocation2 + $0x178] sm:$0xff]
        %v566 = vld [vmem:[#allocation2 + $0x180] sm:$0xff]
        %v567 = vld [vmem:[#allocation2 + $0x188] sm:$0xff]
        %v568 = vld [vmem:[#allocation2 + $0x190] sm:$0xff]
        %v569 = vld [vmem:[#allocation2 + $0x198] sm:$0xff]
        %v570 = vld [vmem:[#allocation2 + $0x1a0] sm:$0xff]
        %v571 = vld [vmem:[#allocation2 + $0x1a8] sm:$0xff]
        %v572 = vld [vmem:[#allocation2 + $0x1b0] sm:$0xff]
        %v573 = vld [vmem:[#allocation2 + $0x1b8] sm:$0xff]
        %v574 = vld [vmem:[#allocation2 + $0x1c0] sm:$0xff]
        %v575 = vld [vmem:[#allocation2 + $0x1c8] sm:$0xff]
        %v576 = vld [vmem:[#allocation2 + $0x1d0] sm:$0xff]
        %v577 = vld [vmem:[#allocation2 + $0x1d8] sm:$0xff]
        %v578 = vld [vmem:[#allocation2 + $0x1e0] sm:$0xff]
        %v579 = vld [vmem:[#allocation2 + $0x1e8] sm:$0xff]
        %v580 = vld [vmem:[#allocation2 + $0x1f0] sm:$0xff]
        %v581 = vld [vmem:[#allocation2 + $0x1f8] sm:$0xff]
        %v582 = vld [vmem:[#allocation2 + $0x200] sm:$0xff]
        %v583 = vld [vmem:[#allocation2 + $0x208] sm:$0xff]
        %v584 = vld [vmem:[#allocation2 + $0x210] sm:$0xff]
        %v585 = vld [vmem:[#allocation2 + $0x218] sm:$0xff]
        %v586 = vld [vmem:[#allocation2 + $0x220] sm:$0xff]
        %v587 = vld [vmem:[#allocation2 + $0x228] sm:$0xff]
        %v588 = vld [vmem:[#allocation2 + $0x230] sm:$0xff]
        %v589 = vld [vmem:[#allocation2 + $0x238] sm:$0xff]
        %v590 = vld [vmem:[#allocation2 + $0x240] sm:$0xff]
        %v591 = vld [vmem:[#allocation2 + $0x248] sm:$0xff]
        %v592 = vld [vmem:[#allocation2 + $0x250] sm:$0xff]
        %v593 = vld [vmem:[#allocation2 + $0x258] sm:$0xff]
        %v594 = vld [vmem:[#allocation2 + $0x260] sm:$0xff]
        %v595 = vld [vmem:[#allocation2 + $0x268] sm:$0xff]
        %v596 = vld [vmem:[#allocation2 + $0x270] sm:$0xff]
        %v597 = vld [vmem:[#allocation2 + $0x278] sm:$0xff]
        %v598 = vld [vmem:[#allocation2 + $0x280] sm:$0xff]
        %v599 = vld [vmem:[#allocation2 + $0x288] sm:$0xff]
        %v600 = vld [vmem:[#allocation2 + $0x290] sm:$0xff]
        %v601 = vld [vmem:[#allocation2 + $0x298] sm:$0xff]
        %v602 = vld [vmem:[#allocation2 + $0x2a0] sm:$0xff]
        %v603 = vld [vmem:[#allocation2 + $0x2a8] sm:$0xff]
        %v604 = vld [vmem:[#allocation2 + $0x2b0] sm:$0xff]
        %v605 = vld [vmem:[#allocation2 + $0x2b8] sm:$0xff]
        %v606 = vld [vmem:[#allocation2 + $0x2c0] sm:$0xff]
        %v607 = vld [vmem:[#allocation2 + $0x2c8] sm:$0xff]
        %v608 = vld [vmem:[#allocation2 + $0x2d0] sm:$0xff]
        %v609 = vld [vmem:[#allocation2 + $0x2d8] sm:$0xff]
        %v610 = vld [vmem:[#allocation2 + $0x2e0] sm:$0xff]
        %v611 = vld [vmem:[#allocation2 + $0x2e8] sm:$0xff]
        %v612 = vld [vmem:[#allocation2 + $0x2f0] sm:$0xff]
        %v613 = vld [vmem:[#allocation2 + $0x2f8] sm:$0xff]
        %v614 = vunpack.c.l.s8.bf16 %v518
        %v615 = vunpack.c.l.s8.bf16 %v519
        %v616 = vunpack.c.l.s8.bf16 %v520
        %v617 = vunpack.c.l.s8.bf16 %v521
        %v618 = vunpack.c.l.s8.bf16 %v522
        %v619 = vunpack.c.l.s8.bf16 %v523
        %v620 = vunpack.c.l.s8.bf16 %v524
        %v621 = vunpack.c.l.s8.bf16 %v525
        %v622 = vunpack.c.h.s8.bf16 %v518
        %v623 = vunpack.c.h.s8.bf16 %v519
        %v624 = vunpack.c.h.s8.bf16 %v520
        %v625 = vunpack.c.h.s8.bf16 %v521
        %v626 = vunpack.c.h.s8.bf16 %v522
        %v627 = vunpack.c.h.s8.bf16 %v523
        %v628 = vunpack.c.h.s8.bf16 %v524
        %v629 = vunpack.c.h.s8.bf16 %v525
        %v630 = vunpack.c.l.s8.bf16 %v526
        %v631 = vunpack.c.l.s8.bf16 %v527
        %v632 = vunpack.c.l.s8.bf16 %v528
        %v633 = vunpack.c.l.s8.bf16 %v529
        %v634 = vunpack.c.l.s8.bf16 %v530
        %v635 = vunpack.c.l.s8.bf16 %v531
        %v636 = vunpack.c.l.s8.bf16 %v532
        %v637 = vunpack.c.l.s8.bf16 %v533
        %v638 = vunpack.c.h.s8.bf16 %v526
        %v639 = vunpack.c.h.s8.bf16 %v527
        %v640 = vunpack.c.h.s8.bf16 %v528
        %v641 = vunpack.c.h.s8.bf16 %v529
        %v642 = vunpack.c.h.s8.bf16 %v530
        %v643 = vunpack.c.h.s8.bf16 %v531
        %v644 = vunpack.c.h.s8.bf16 %v532
        %v645 = vunpack.c.h.s8.bf16 %v533
        %v646 = vunpack.c.l.s8.bf16 %v534
        %v647 = vunpack.c.l.s8.bf16 %v535
        %v648 = vunpack.c.l.s8.bf16 %v536
        %v649 = vunpack.c.l.s8.bf16 %v537
        %v650 = vunpack.c.l.s8.bf16 %v538
        %v651 = vunpack.c.l.s8.bf16 %v539
        %v652 = vunpack.c.l.s8.bf16 %v540
        %v653 = vunpack.c.l.s8.bf16 %v541
        %v654 = vunpack.c.h.s8.bf16 %v534
        %v655 = vunpack.c.h.s8.bf16 %v535
        %v656 = vunpack.c.h.s8.bf16 %v536
        %v657 = vunpack.c.h.s8.bf16 %v537
        %v658 = vunpack.c.h.s8.bf16 %v538
        %v659 = vunpack.c.h.s8.bf16 %v539
        %v660 = vunpack.c.h.s8.bf16 %v540
        %v661 = vunpack.c.h.s8.bf16 %v541
        %v662 = vunpack.c.l.s8.bf16 %v542
        %v663 = vunpack.c.l.s8.bf16 %v543
        %v664 = vunpack.c.l.s8.bf16 %v544
        %v665 = vunpack.c.l.s8.bf16 %v545
        %v666 = vunpack.c.l.s8.bf16 %v546
        %v667 = vunpack.c.l.s8.bf16 %v547
        %v668 = vunpack.c.l.s8.bf16 %v548
        %v669 = vunpack.c.l.s8.bf16 %v549
        %v670 = vunpack.c.h.s8.bf16 %v542
        %v671 = vunpack.c.h.s8.bf16 %v543
        %v672 = vunpack.c.h.s8.bf16 %v544
        %v673 = vunpack.c.h.s8.bf16 %v545
        %v674 = vunpack.c.h.s8.bf16 %v546
        %v675 = vunpack.c.h.s8.bf16 %v547
        %v676 = vunpack.c.h.s8.bf16 %v548
        %v677 = vunpack.c.h.s8.bf16 %v549
        %v678 = vunpack.c.l.s8.bf16 %v550
        %v679 = vunpack.c.l.s8.bf16 %v551
        %v680 = vunpack.c.l.s8.bf16 %v552
        %v681 = vunpack.c.l.s8.bf16 %v553
        %v682 = vunpack.c.l.s8.bf16 %v554
        %v683 = vunpack.c.l.s8.bf16 %v555
        %v684 = vunpack.c.l.s8.bf16 %v556
        %v685 = vunpack.c.l.s8.bf16 %v557
        %v686 = vunpack.c.h.s8.bf16 %v550
        %v687 = vunpack.c.h.s8.bf16 %v551
        %v688 = vunpack.c.h.s8.bf16 %v552
        %v689 = vunpack.c.h.s8.bf16 %v553
        %v690 = vunpack.c.h.s8.bf16 %v554
        %v691 = vunpack.c.h.s8.bf16 %v555
        %v692 = vunpack.c.h.s8.bf16 %v556
        %v693 = vunpack.c.h.s8.bf16 %v557
        %v694 = vunpack.c.l.s8.bf16 %v558
        %v695 = vunpack.c.l.s8.bf16 %v559
        %v696 = vunpack.c.l.s8.bf16 %v560
        %v697 = vunpack.c.l.s8.bf16 %v561
        %v698 = vunpack.c.l.s8.bf16 %v562
        %v699 = vunpack.c.l.s8.bf16 %v563
        %v700 = vunpack.c.l.s8.bf16 %v564
        %v701 = vunpack.c.l.s8.bf16 %v565
        %v702 = vunpack.c.h.s8.bf16 %v558
        %v703 = vunpack.c.h.s8.bf16 %v559
        %v704 = vunpack.c.h.s8.bf16 %v560
        %v705 = vunpack.c.h.s8.bf16 %v561
        %v706 = vunpack.c.h.s8.bf16 %v562
        %v707 = vunpack.c.h.s8.bf16 %v563
        %v708 = vunpack.c.h.s8.bf16 %v564
        %v709 = vunpack.c.h.s8.bf16 %v565
        %v710 = vunpack.c.l.s8.bf16 %v566
        %v711 = vunpack.c.l.s8.bf16 %v567
        %v712 = vunpack.c.l.s8.bf16 %v568
        %v713 = vunpack.c.l.s8.bf16 %v569
        %v714 = vunpack.c.l.s8.bf16 %v570
        %v715 = vunpack.c.l.s8.bf16 %v571
        %v716 = vunpack.c.l.s8.bf16 %v572
        %v717 = vunpack.c.l.s8.bf16 %v573
        %v718 = vunpack.c.h.s8.bf16 %v566
        %v719 = vunpack.c.h.s8.bf16 %v567
        %v720 = vunpack.c.h.s8.bf16 %v568
        %v721 = vunpack.c.h.s8.bf16 %v569
        %v722 = vunpack.c.h.s8.bf16 %v570
        %v723 = vunpack.c.h.s8.bf16 %v571
        %v724 = vunpack.c.h.s8.bf16 %v572
        %v725 = vunpack.c.h.s8.bf16 %v573
        %v726 = vunpack.c.l.s8.bf16 %v574
        %v727 = vunpack.c.l.s8.bf16 %v575
        %v728 = vunpack.c.l.s8.bf16 %v576
        %v729 = vunpack.c.l.s8.bf16 %v577
        %v730 = vunpack.c.l.s8.bf16 %v578
        %v731 = vunpack.c.l.s8.bf16 %v579
        %v732 = vunpack.c.l.s8.bf16 %v580
        %v733 = vunpack.c.l.s8.bf16 %v581
        %v734 = vunpack.c.h.s8.bf16 %v574
        %v735 = vunpack.c.h.s8.bf16 %v575
        %v736 = vunpack.c.h.s8.bf16 %v576
        %v737 = vunpack.c.h.s8.bf16 %v577
        %v738 = vunpack.c.h.s8.bf16 %v578
        %v739 = vunpack.c.h.s8.bf16 %v579
        %v740 = vunpack.c.h.s8.bf16 %v580
        %v741 = vunpack.c.h.s8.bf16 %v581
        %v742 = vunpack.c.l.s8.bf16 %v582
        %v743 = vunpack.c.l.s8.bf16 %v583
        %v744 = vunpack.c.l.s8.bf16 %v584
        %v745 = vunpack.c.l.s8.bf16 %v585
        %v746 = vunpack.c.l.s8.bf16 %v586
        %v747 = vunpack.c.l.s8.bf16 %v587
        %v748 = vunpack.c.l.s8.bf16 %v588
        %v749 = vunpack.c.l.s8.bf16 %v589
        %v750 = vunpack.c.h.s8.bf16 %v582
        %v751 = vunpack.c.h.s8.bf16 %v583
        %v752 = vunpack.c.h.s8.bf16 %v584
        %v753 = vunpack.c.h.s8.bf16 %v585
        %v754 = vunpack.c.h.s8.bf16 %v586
        %v755 = vunpack.c.h.s8.bf16 %v587
        %v756 = vunpack.c.h.s8.bf16 %v588
        %v757 = vunpack.c.h.s8.bf16 %v589
        %v758 = vunpack.c.l.s8.bf16 %v590
        %v759 = vunpack.c.l.s8.bf16 %v591
        %v760 = vunpack.c.l.s8.bf16 %v592
        %v761 = vunpack.c.l.s8.bf16 %v593
        %v762 = vunpack.c.l.s8.bf16 %v594
        %v763 = vunpack.c.l.s8.bf16 %v595
        %v764 = vunpack.c.l.s8.bf16 %v596
        %v765 = vunpack.c.l.s8.bf16 %v597
        %v766 = vunpack.c.h.s8.bf16 %v590
        %v767 = vunpack.c.h.s8.bf16 %v591
        %v768 = vunpack.c.h.s8.bf16 %v592
        %v769 = vunpack.c.h.s8.bf16 %v593
        %v770 = vunpack.c.h.s8.bf16 %v594
        %v771 = vunpack.c.h.s8.bf16 %v595
        %v772 = vunpack.c.h.s8.bf16 %v596
        %v773 = vunpack.c.h.s8.bf16 %v597
        %v774 = vunpack.c.l.s8.bf16 %v598
        %v775 = vunpack.c.l.s8.bf16 %v599
        %v776 = vunpack.c.l.s8.bf16 %v600
        %v777 = vunpack.c.l.s8.bf16 %v601
        %v778 = vunpack.c.l.s8.bf16 %v602
        %v779 = vunpack.c.l.s8.bf16 %v603
        %v780 = vunpack.c.l.s8.bf16 %v604
        %v781 = vunpack.c.l.s8.bf16 %v605
        %v782 = vunpack.c.h.s8.bf16 %v598
        %v783 = vunpack.c.h.s8.bf16 %v599
        %v784 = vunpack.c.h.s8.bf16 %v600
        %v785 = vunpack.c.h.s8.bf16 %v601
        %v786 = vunpack.c.h.s8.bf16 %v602
        %v787 = vunpack.c.h.s8.bf16 %v603
        %v788 = vunpack.c.h.s8.bf16 %v604
        %v789 = vunpack.c.h.s8.bf16 %v605
        %v790 = vunpack.c.l.s8.bf16 %v606
        %v791 = vunpack.c.l.s8.bf16 %v607
        %v792 = vunpack.c.l.s8.bf16 %v608
        %v793 = vunpack.c.l.s8.bf16 %v609
        %v794 = vunpack.c.l.s8.bf16 %v610
        %v795 = vunpack.c.l.s8.bf16 %v611
        %v796 = vunpack.c.l.s8.bf16 %v612
        %v797 = vunpack.c.l.s8.bf16 %v613
        %v798 = vunpack.c.h.s8.bf16 %v606
        %v799 = vunpack.c.h.s8.bf16 %v607
        %v800 = vunpack.c.h.s8.bf16 %v608
        %v801 = vunpack.c.h.s8.bf16 %v609
        %v802 = vunpack.c.h.s8.bf16 %v610
        %v803 = vunpack.c.h.s8.bf16 %v611
        %v804 = vunpack.c.h.s8.bf16 %v612
        %v805 = vunpack.c.h.s8.bf16 %v613
        %v808 = vunpack.c.l.s4 1966171168
        %v809 = vunpack.c.0.s8 %v808
        %v810 = vlaneseq
        %v811 = vshrl.u32 %v810, 7
        %v812 = vsub.s32 %v809, %v811
        %v813 = vrot.slane %v517, %v812
        %v814 = vcombine.high %v813, %v813
        %v816 = vunpack.c.l.s4 1966171168
        %v817 = vunpack.c.0.s8 %v816
        %v818 = vlaneseq
        %v819 = vshrl.u32 %v818, 7
        %v820 = vsub.s32 %v817, %v819
        %v821 = vrot.slane %v813, %v820
        %v823 = vunpack.c.l.s4 1966171168
        %v824 = vunpack.c.0.s8 %v823
        %v825 = vlaneseq
        %v826 = vshrl.u32 %v825, 7
        %v827 = vsub.s32 %v824, %v826
        %v828 = vrot.slane %v814, %v827
        %v829 = vcombine.high %v821, %v821
        %833 = vmatprep.subr.bf16.mxu0 %v615
        %834 = vmatpush1.bf16.msra.mxu0 %v614
        %835 = vmatprep.subr.bf16.mxu0 %v623
        %836 = vmatpush1.bf16.msra.mxu0 %v622
        %837 = vmatprep.subr.bf16.mxu0 %v631
        %838 = vmatpush1.bf16.msra.mxu0 %v630
        %839 = vmatprep.subr.bf16.mxu0 %v639
        %840 = vmatpush1.bf16.msra.mxu0 %v638
        %841 = vmatprep.subr.bf16.mxu0 %v647
        %842 = vmatpush1.bf16.msra.mxu0 %v646
        %843 = vmatprep.subr.bf16.mxu0 %v655
        %844 = vmatpush1.bf16.msra.mxu0 %v654
        %845 = vmatprep.subr.bf16.mxu0 %v663
        %846 = vmatpush1.bf16.msra.mxu0 %v662
        %847 = vmatprep.subr.bf16.mxu0 %v671
        %848 = vmatpush1.bf16.msra.mxu0 %v670
        %849 = vmatprep.subr.bf16.mxu0 %v679
        %850 = vmatpush1.bf16.msra.mxu0 %v678
        %851 = vmatprep.subr.bf16.mxu0 %v687
        %852 = vmatpush1.bf16.msra.mxu0 %v686
        %853 = vmatprep.subr.bf16.mxu0 %v695
        %854 = vmatpush1.bf16.msra.mxu0 %v694
        %855 = vmatprep.subr.bf16.mxu0 %v703
        %856 = vmatpush1.bf16.msra.mxu0 %v702
        %857 = vmatprep.subr.bf16.mxu0 %v711
        %858 = vmatpush1.bf16.msra.mxu0 %v710
        %859 = vmatprep.subr.bf16.mxu0 %v719
        %860 = vmatpush1.bf16.msra.mxu0 %v718
        %861 = vmatprep.subr.bf16.mxu0 %v727
        %862 = vmatpush1.bf16.msra.mxu0 %v726
        %863 = vmatprep.subr.bf16.mxu0 %v735
        %864 = vmatpush1.bf16.msra.mxu0 %v734
        %865 = vmatprep.mubr.bf16.mxu0 %v828
        %866 = vmatmul.mubr.bf16.gmra.mrb[0].mxu0 %v821
        %v867 = vpop.f32.mrb[0].mxu0
        %v868 = vadd.f32 0.0, %v867
        %v869 = vpop.f32.mrb[0].mxu0
        %v870 = vadd.f32 0.0, %v869
        %v871 = vpop.f32.mrb[0].mxu0
        %v872 = vpop.f32.mrb[0].mxu0
        %873 = vdwg.mxu0
        %874 = vmatprep.subr.bf16.mxu0 %v743
        %875 = vmatpush1.bf16.msra.mxu0 %v742
        %876 = vmatprep.subr.bf16.mxu0 %v751
        %877 = vmatpush1.bf16.msra.mxu0 %v750
        %878 = vmatprep.subr.bf16.mxu0 %v759
        %879 = vmatpush1.bf16.msra.mxu0 %v758
        %880 = vmatprep.subr.bf16.mxu0 %v767
        %881 = vmatpush1.bf16.msra.mxu0 %v766
        %882 = vmatprep.subr.bf16.mxu0 %v775
        %883 = vmatpush1.bf16.msra.mxu0 %v774
        %884 = vmatprep.subr.bf16.mxu0 %v783
        %885 = vmatpush1.bf16.msra.mxu0 %v782
        %886 = vmatprep.subr.bf16.mxu0 %v791
        %887 = vmatpush1.bf16.msra.mxu0 %v790
        %888 = vmatprep.subr.bf16.mxu0 %v799
        %889 = vmatpush1.bf16.msra.mxu0 %v798
        %890 = vmatprep.subr.bf16.mxu0 0
        %891 = vmatpush1.bf16.msra.mxu0 0
        %892 = vmatprep.subr.bf16.mxu0 0
        %893 = vmatpush1.bf16.msra.mxu0 0
        %894 = vmatprep.subr.bf16.mxu0 0
        %895 = vmatpush1.bf16.msra.mxu0 0
        %896 = vmatprep.subr.bf16.mxu0 0
        %897 = vmatpush1.bf16.msra.mxu0 0
        %898 = vmatprep.subr.bf16.mxu0 0
        %899 = vmatpush1.bf16.msra.mxu0 0
        %900 = vmatprep.subr.bf16.mxu0 0
        %901 = vmatpush1.bf16.msra.mxu0 0
        %902 = vmatprep.subr.bf16.mxu0 0
        %903 = vmatpush1.bf16.msra.mxu0 0
        %904 = vmatprep.subr.bf16.mxu0 0
        %905 = vmatpush1.bf16.msra.mxu0 0
        %906 = vmatprep.mubr.bf16.mxu0 0
        %907 = vmatmul.mubr.bf16.gmra.mrb[0].mxu0 %v829
        %v908 = vpop.f32.mrb[0].mxu0
        %v909 = vadd.f32 %v868, %v908
        %v910 = vpop.f32.mrb[0].mxu0
        %v911 = vadd.f32 %v870, %v910
        %v912 = vpop.f32.mrb[0].mxu0
        %v913 = vpop.f32.mrb[0].mxu0
        %914 = vdwg.mxu0
        %915 = vmatprep.subr.bf16.mxu0 %v617
        %916 = vmatpush1.bf16.msra.mxu0 %v616
        %917 = vmatprep.subr.bf16.mxu0 %v625
        %918 = vmatpush1.bf16.msra.mxu0 %v624
        %919 = vmatprep.subr.bf16.mxu0 %v633
        %920 = vmatpush1.bf16.msra.mxu0 %v632
        %921 = vmatprep.subr.bf16.mxu0 %v641
        %922 = vmatpush1.bf16.msra.mxu0 %v640
        %923 = vmatprep.subr.bf16.mxu0 %v649
        %924 = vmatpush1.bf16.msra.mxu0 %v648
        %925 = vmatprep.subr.bf16.mxu0 %v657
        %926 = vmatpush1.bf16.msra.mxu0 %v656
        %927 = vmatprep.subr.bf16.mxu0 %v665
        %928 = vmatpush1.bf16.msra.mxu0 %v664
        %929 = vmatprep.subr.bf16.mxu0 %v673
        %930 = vmatpush1.bf16.msra.mxu0 %v672
        %931 = vmatprep.subr.bf16.mxu0 %v681
        %932 = vmatpush1.bf16.msra.mxu0 %v680
        %933 = vmatprep.subr.bf16.mxu0 %v689
        %934 = vmatpush1.bf16.msra.mxu0 %v688
        %935 = vmatprep.subr.bf16.mxu0 %v697
        %936 = vmatpush1.bf16.msra.mxu0 %v696
        %937 = vmatprep.subr.bf16.mxu0 %v705
        %938 = vmatpush1.bf16.msra.mxu0 %v704
        %939 = vmatprep.subr.bf16.mxu0 %v713
        %940 = vmatpush1.bf16.msra.mxu0 %v712
        %941 = vmatprep.subr.bf16.mxu0 %v721
        %942 = vmatpush1.bf16.msra.mxu0 %v720
        %943 = vmatprep.subr.bf16.mxu0 %v729
        %944 = vmatpush1.bf16.msra.mxu0 %v728
        %945 = vmatprep.subr.bf16.mxu0 %v737
        %946 = vmatpush1.bf16.msra.mxu0 %v736
        %947 = vmatprep.mubr.bf16.mxu0 %v828
        %948 = vmatmul.mubr.bf16.gmra.mrb[0].mxu0 %v821
        %v949 = vpop.f32.mrb[0].mxu0
        %v950 = vadd.f32 0.0, %v949
        %v951 = vpop.f32.mrb[0].mxu0
        %v952 = vadd.f32 0.0, %v951
        %v953 = vpop.f32.mrb[0].mxu0
        %v954 = vpop.f32.mrb[0].mxu0
        %955 = vdwg.mxu0
        %956 = vmatprep.subr.bf16.mxu0 %v745
        %957 = vmatpush1.bf16.msra.mxu0 %v744
        %958 = vmatprep.subr.bf16.mxu0 %v753
        %959 = vmatpush1.bf16.msra.mxu0 %v752
        %960 = vmatprep.subr.bf16.mxu0 %v761
        %961 = vmatpush1.bf16.msra.mxu0 %v760
        %962 = vmatprep.subr.bf16.mxu0 %v769
        %963 = vmatpush1.bf16.msra.mxu0 %v768
        %964 = vmatprep.subr.bf16.mxu0 %v777
        %965 = vmatpush1.bf16.msra.mxu0 %v776
        %966 = vmatprep.subr.bf16.mxu0 %v785
        %967 = vmatpush1.bf16.msra.mxu0 %v784
        %968 = vmatprep.subr.bf16.mxu0 %v793
        %969 = vmatpush1.bf16.msra.mxu0 %v792
        %970 = vmatprep.subr.bf16.mxu0 %v801
        %971 = vmatpush1.bf16.msra.mxu0 %v800
        %972 = vmatprep.subr.bf16.mxu0 0
        %973 = vmatpush1.bf16.msra.mxu0 0
        %974 = vmatprep.subr.bf16.mxu0 0
        %975 = vmatpush1.bf16.msra.mxu0 0
        %976 = vmatprep.subr.bf16.mxu0 0
        %977 = vmatpush1.bf16.msra.mxu0 0
        %978 = vmatprep.subr.bf16.mxu0 0
        %979 = vmatpush1.bf16.msra.mxu0 0
        %980 = vmatprep.subr.bf16.mxu0 0
        %981 = vmatpush1.bf16.msra.mxu0 0
        %982 = vmatprep.subr.bf16.mxu0 0
        %983 = vmatpush1.bf16.msra.mxu0 0
        %984 = vmatprep.subr.bf16.mxu0 0
        %985 = vmatpush1.bf16.msra.mxu0 0
        %986 = vmatprep.subr.bf16.mxu0 0
        %987 = vmatpush1.bf16.msra.mxu0 0
        %988 = vmatprep.mubr.bf16.mxu0 0
        %989 = vmatmul.mubr.bf16.gmra.mrb[0].mxu0 %v829
        %v990 = vpop.f32.mrb[0].mxu0
        %v991 = vadd.f32 %v950, %v990
        %v992 = vpop.f32.mrb[0].mxu0
        %v993 = vadd.f32 %v952, %v992
        %v994 = vpop.f32.mrb[0].mxu0
        %v995 = vpop.f32.mrb[0].mxu0
        %996 = vdwg.mxu0
        %997 = vmatprep.subr.bf16.mxu0 %v619
        %998 = vmatpush1.bf16.msra.mxu0 %v618
        %999 = vmatprep.subr.bf16.mxu0 %v627
        %1000 = vmatpush1.bf16.msra.mxu0 %v626
        %1001 = vmatprep.subr.bf16.mxu0 %v635
        %1002 = vmatpush1.bf16.msra.mxu0 %v634
        %1003 = vmatprep.subr.bf16.mxu0 %v643
        %1004 = vmatpush1.bf16.msra.mxu0 %v642
        %1005 = vmatprep.subr.bf16.mxu0 %v651
        %1006 = vmatpush1.bf16.msra.mxu0 %v650
        %1007 = vmatprep.subr.bf16.mxu0 %v659
        %1008 = vmatpush1.bf16.msra.mxu0 %v658
        %1009 = vmatprep.subr.bf16.mxu0 %v667
        %1010 = vmatpush1.bf16.msra.mxu0 %v666
        %1011 = vmatprep.subr.bf16.mxu0 %v675
        %1012 = vmatpush1.bf16.msra.mxu0 %v674
        %1013 = vmatprep.subr.bf16.mxu0 %v683
        %1014 = vmatpush1.bf16.msra.mxu0 %v682
        %1015 = vmatprep.subr.bf16.mxu0 %v691
        %1016 = vmatpush1.bf16.msra.mxu0 %v690
        %1017 = vmatprep.subr.bf16.mxu0 %v699
        %1018 = vmatpush1.bf16.msra.mxu0 %v698
        %1019 = vmatprep.subr.bf16.mxu0 %v707
        %1020 = vmatpush1.bf16.msra.mxu0 %v706
        %1021 = vmatprep.subr.bf16.mxu0 %v715
        %1022 = vmatpush1.bf16.msra.mxu0 %v714
        %1023 = vmatprep.subr.bf16.mxu0 %v723
        %1024 = vmatpush1.bf16.msra.mxu0 %v722
        %1025 = vmatprep.subr.bf16.mxu0 %v731
        %1026 = vmatpush1.bf16.msra.mxu0 %v730
        %1027 = vmatprep.subr.bf16.mxu0 %v739
        %1028 = vmatpush1.bf16.msra.mxu0 %v738
        %1029 = vmatprep.mubr.bf16.mxu0 %v828
        %1030 = vmatmul.mubr.bf16.gmra.mrb[0].mxu0 %v821
        %v1031 = vpop.f32.mrb[0].mxu0
        %v1032 = vadd.f32 0.0, %v1031
        %v1033 = vpop.f32.mrb[0].mxu0
        %v1034 = vadd.f32 0.0, %v1033
        %v1035 = vpop.f32.mrb[0].mxu0
        %v1036 = vpop.f32.mrb[0].mxu0
        %1037 = vdwg.mxu0
        %1038 = vmatprep.subr.bf16.mxu0 %v747
        %1039 = vmatpush1.bf16.msra.mxu0 %v746
        %1040 = vmatprep.subr.bf16.mxu0 %v755
        %1041 = vmatpush1.bf16.msra.mxu0 %v754
        %1042 = vmatprep.subr.bf16.mxu0 %v763
        %1043 = vmatpush1.bf16.msra.mxu0 %v762
        %1044 = vmatprep.subr.bf16.mxu0 %v771
        %1045 = vmatpush1.bf16.msra.mxu0 %v770
        %1046 = vmatprep.subr.bf16.mxu0 %v779
        %1047 = vmatpush1.bf16.msra.mxu0 %v778
        %1048 = vmatprep.subr.bf16.mxu0 %v787
        %1049 = vmatpush1.bf16.msra.mxu0 %v786
        %1050 = vmatprep.subr.bf16.mxu0 %v795
        %1051 = vmatpush1.bf16.msra.mxu0 %v794
        %1052 = vmatprep.subr.bf16.mxu0 %v803
        %1053 = vmatpush1.bf16.msra.mxu0 %v802
        %1054 = vmatprep.subr.bf16.mxu0 0
        %1055 = vmatpush1.bf16.msra.mxu0 0
        %1056 = vmatprep.subr.bf16.mxu0 0
        %1057 = vmatpush1.bf16.msra.mxu0 0
        %1058 = vmatprep.subr.bf16.mxu0 0
        %1059 = vmatpush1.bf16.msra.mxu0 0
        %1060 = vmatprep.subr.bf16.mxu0 0
        %1061 = vmatpush1.bf16.msra.mxu0 0
        %1062 = vmatprep.subr.bf16.mxu0 0
        %1063 = vmatpush1.bf16.msra.mxu0 0
        %1064 = vmatprep.subr.bf16.mxu0 0
        %1065 = vmatpush1.bf16.msra.mxu0 0
        %1066 = vmatprep.subr.bf16.mxu0 0
        %1067 = vmatpush1.bf16.msra.mxu0 0
        %1068 = vmatprep.subr.bf16.mxu0 0
        %1069 = vmatpush1.bf16.msra.mxu0 0
        %1070 = vmatprep.mubr.bf16.mxu0 0
        %1071 = vmatmul.mubr.bf16.gmra.mrb[0].mxu0 %v829
        %v1072 = vpop.f32.mrb[0].mxu0
        %v1073 = vadd.f32 %v1032, %v1072
        %v1074 = vpop.f32.mrb[0].mxu0
        %v1075 = vadd.f32 %v1034, %v1074
        %v1076 = vpop.f32.mrb[0].mxu0
        %v1077 = vpop.f32.mrb[0].mxu0
        %1078 = vdwg.mxu0
        %1079 = vmatprep.subr.bf16.mxu0 %v621
        %1080 = vmatpush1.bf16.msra.mxu0 %v620
        %1081 = vmatprep.subr.bf16.mxu0 %v629
        %1082 = vmatpush1.bf16.msra.mxu0 %v628
        %1083 = vmatprep.subr.bf16.mxu0 %v637
        %1084 = vmatpush1.bf16.msra.mxu0 %v636
        %1085 = vmatprep.subr.bf16.mxu0 %v645
        %1086 = vmatpush1.bf16.msra.mxu0 %v644
        %1087 = vmatprep.subr.bf16.mxu0 %v653
        %1088 = vmatpush1.bf16.msra.mxu0 %v652
        %1089 = vmatprep.subr.bf16.mxu0 %v661
        %1090 = vmatpush1.bf16.msra.mxu0 %v660
        %1091 = vmatprep.subr.bf16.mxu0 %v669
        %1092 = vmatpush1.bf16.msra.mxu0 %v668
        %1093 = vmatprep.subr.bf16.mxu0 %v677
        %1094 = vmatpush1.bf16.msra.mxu0 %v676
        %1095 = vmatprep.subr.bf16.mxu0 %v685
        %1096 = vmatpush1.bf16.msra.mxu0 %v684
        %1097 = vmatprep.subr.bf16.mxu0 %v693
        %1098 = vmatpush1.bf16.msra.mxu0 %v692
        %1099 = vmatprep.subr.bf16.mxu0 %v701
        %1100 = vmatpush1.bf16.msra.mxu0 %v700
        %1101 = vmatprep.subr.bf16.mxu0 %v709
        %1102 = vmatpush1.bf16.msra.mxu0 %v708
        %1103 = vmatprep.subr.bf16.mxu0 %v717
        %1104 = vmatpush1.bf16.msra.mxu0 %v716
        %1105 = vmatprep.subr.bf16.mxu0 %v725
        %1106 = vmatpush1.bf16.msra.mxu0 %v724
        %1107 = vmatprep.subr.bf16.mxu0 %v733
        %1108 = vmatpush1.bf16.msra.mxu0 %v732
        %1109 = vmatprep.subr.bf16.mxu0 %v741
        %1110 = vmatpush1.bf16.msra.mxu0 %v740
        %1111 = vmatprep.mubr.bf16.mxu0 %v828
        %1112 = vmatmul.mubr.bf16.gmra.mrb[0].mxu0 %v821
        %v1113 = vpop.f32.mrb[0].mxu0
        %v1114 = vadd.f32 0.0, %v1113
        %v1115 = vpop.f32.mrb[0].mxu0
        %v1116 = vadd.f32 0.0, %v1115
        %v1117 = vpop.f32.mrb[0].mxu0
        %v1118 = vpop.f32.mrb[0].mxu0
        %1119 = vdwg.mxu0
        %1120 = vmatprep.subr.bf16.mxu0 %v749
        %1121 = vmatpush1.bf16.msra.mxu0 %v748
        %1122 = vmatprep.subr.bf16.mxu0 %v757
        %1123 = vmatpush1.bf16.msra.mxu0 %v756
        %1124 = vmatprep.subr.bf16.mxu0 %v765
        %1125 = vmatpush1.bf16.msra.mxu0 %v764
        %1126 = vmatprep.subr.bf16.mxu0 %v773
        %1127 = vmatpush1.bf16.msra.mxu0 %v772
        %1128 = vmatprep.subr.bf16.mxu0 %v781
        %1129 = vmatpush1.bf16.msra.mxu0 %v780
        %1130 = vmatprep.subr.bf16.mxu0 %v789
        %1131 = vmatpush1.bf16.msra.mxu0 %v788
        %1132 = vmatprep.subr.bf16.mxu0 %v797
        %1133 = vmatpush1.bf16.msra.mxu0 %v796
        %1134 = vmatprep.subr.bf16.mxu0 %v805
        %1135 = vmatpush1.bf16.msra.mxu0 %v804
        %1136 = vmatprep.subr.bf16.mxu0 0
        %1137 = vmatpush1.bf16.msra.mxu0 0
        %1138 = vmatprep.subr.bf16.mxu0 0
        %1139 = vmatpush1.bf16.msra.mxu0 0
        %1140 = vmatprep.subr.bf16.mxu0 0
        %1141 = vmatpush1.bf16.msra.mxu0 0
        %1142 = vmatprep.subr.bf16.mxu0 0
        %1143 = vmatpush1.bf16.msra.mxu0 0
        %1144 = vmatprep.subr.bf16.mxu0 0
        %1145 = vmatpush1.bf16.msra.mxu0 0
        %1146 = vmatprep.subr.bf16.mxu0 0
        %1147 = vmatpush1.bf16.msra.mxu0 0
        %1148 = vmatprep.subr.bf16.mxu0 0
        %1149 = vmatpush1.bf16.msra.mxu0 0
        %1150 = vmatprep.subr.bf16.mxu0 0
        %1151 = vmatpush1.bf16.msra.mxu0 0
        %1152 = vmatprep.mubr.bf16.mxu0 0
        %1153 = vmatmul.mubr.bf16.gmra.mrb[0].mxu0 %v829
        %v1154 = vpop.f32.mrb[0].mxu0
        %v1155 = vadd.f32 %v1114, %v1154
        %v1156 = vpop.f32.mrb[0].mxu0
        %v1157 = vadd.f32 %v1116, %v1156
        %v1158 = vpop.f32.mrb[0].mxu0
        %v1159 = vpop.f32.mrb[0].mxu0
        %1160 = vdwg.mxu0
        %v1161 = vld [vmem:[#allocation4] sm:$0xff]
        %v1163 = vlaneseq
        %v1164 = vshrl.u32 %v1163, 7
        %v1165 = vsub.s32 0, %v1164
        %v1166 = vrot.slane %v1161, %v1165
        %v1167 = vlaneseq
        %v1168 = vshrl.u32 %v1167, 7
        %v1169 = vsub.s32 1, %v1168
        %v1170 = vrot.slane %v1161, %v1169
        %v1171 = vlaneseq
        %v1172 = vshrl.u32 %v1171, 7
        %v1173 = vsub.s32 2, %v1172
        %v1174 = vrot.slane %v1161, %v1173
        %v1175 = vlaneseq
        %v1176 = vshrl.u32 %v1175, 7
        %v1177 = vsub.s32 3, %v1176
        %v1178 = vrot.slane %v1161, %v1177
        %v1179 = vlaneseq
        %v1180 = vshrl.u32 %v1179, 7
        %v1181 = vsub.s32 4, %v1180
        %v1182 = vrot.slane %v1161, %v1181
        %v1183 = vlaneseq
        %v1184 = vshrl.u32 %v1183, 7
        %v1185 = vsub.s32 5, %v1184
        %v1186 = vrot.slane %v1161, %v1185
        %v1187 = vlaneseq
        %v1188 = vshrl.u32 %v1187, 7
        %v1189 = vsub.s32 6, %v1188
        %v1190 = vrot.slane %v1161, %v1189
        %v1191 = vlaneseq
        %v1192 = vshrl.u32 %v1191, 7
        %v1193 = vsub.s32 7, %v1192
        %v1194 = vrot.slane %v1161, %v1193
        %v1203 = vmul.f32 %v909, %v1166
        %v1204 = vmul.f32 %v911, %v1170
        %v1205 = vmul.f32 %v991, %v1174
        %v1206 = vmul.f32 %v993, %v1178
        %v1207 = vmul.f32 %v1073, %v1182
        %v1208 = vmul.f32 %v1075, %v1186
        %v1209 = vmul.f32 %v1155, %v1190
        %v1210 = vmul.f32 %v1157, %v1194
        %v1211 = vld [vmem:[#allocation6] sm:$0xff]
        %v1213 = vlaneseq
        %v1214 = vshrl.u32 %v1213, 7
        %v1215 = vsub.s32 0, %v1214
        %v1216 = vrot.slane %v1211, %v1215
        %v1217 = vlaneseq
        %v1218 = vshrl.u32 %v1217, 7
        %v1219 = vsub.s32 1, %v1218
        %v1220 = vrot.slane %v1211, %v1219
        %v1221 = vlaneseq
        %v1222 = vshrl.u32 %v1221, 7
        %v1223 = vsub.s32 2, %v1222
        %v1224 = vrot.slane %v1211, %v1223
        %v1225 = vlaneseq
        %v1226 = vshrl.u32 %v1225, 7
        %v1227 = vsub.s32 3, %v1226
        %v1228 = vrot.slane %v1211, %v1227
        %v1229 = vlaneseq
        %v1230 = vshrl.u32 %v1229, 7
        %v1231 = vsub.s32 4, %v1230
        %v1232 = vrot.slane %v1211, %v1231
        %v1233 = vlaneseq
        %v1234 = vshrl.u32 %v1233, 7
        %v1235 = vsub.s32 5, %v1234
        %v1236 = vrot.slane %v1211, %v1235
        %v1237 = vlaneseq
        %v1238 = vshrl.u32 %v1237, 7
        %v1239 = vsub.s32 6, %v1238
        %v1240 = vrot.slane %v1211, %v1239
        %v1241 = vlaneseq
        %v1242 = vshrl.u32 %v1241, 7
        %v1243 = vsub.s32 7, %v1242
        %v1244 = vrot.slane %v1211, %v1243
        %v1253 = vadd.f32 %v1203, %v1216
        %v1254 = vadd.f32 %v1204, %v1220
        %v1255 = vadd.f32 %v1205, %v1224
        %v1256 = vadd.f32 %v1206, %v1228
        %v1257 = vadd.f32 %v1207, %v1232
        %v1258 = vadd.f32 %v1208, %v1236
        %v1259 = vadd.f32 %v1209, %v1240
        %v1260 = vadd.f32 %v1210, %v1244
        %vm1261 = vcmp.gt.f32.partialorder %v1253, 0.0
        %vm1262 = vcmp.gt.f32.partialorder %v1254, 0.0
        %vm1263 = vcmp.gt.f32.partialorder %v1255, 0.0
        %vm1264 = vcmp.gt.f32.partialorder %v1256, 0.0
        %vm1265 = vcmp.gt.f32.partialorder %v1257, 0.0
        %vm1266 = vcmp.gt.f32.partialorder %v1258, 0.0
        %vm1267 = vcmp.gt.f32.partialorder %v1259, 0.0
        %vm1268 = vcmp.gt.f32.partialorder %v1260, 0.0
        %v1269 = vmul.f32 %v1253, 0.01
        %v1270 = vmul.f32 %v1254, 0.01
        %v1271 = vmul.f32 %v1255, 0.01
        %v1272 = vmul.f32 %v1256, 0.01
        %v1273 = vmul.f32 %v1257, 0.01
        %v1274 = vmul.f32 %v1258, 0.01
        %v1275 = vmul.f32 %v1259, 0.01
        %v1276 = vmul.f32 %v1260, 0.01
        %v1277 = vsel %vm1261, %v1253, %v1269
        %v1278 = vsel %vm1262, %v1254, %v1270
        %v1279 = vsel %vm1263, %v1255, %v1271
        %v1280 = vsel %vm1264, %v1256, %v1272
        %v1281 = vsel %vm1265, %v1257, %v1273
        %v1282 = vsel %vm1266, %v1258, %v1274
        %v1283 = vsel %vm1267, %v1259, %v1275
        %v1284 = vsel %vm1268, %v1260, %v1276
        %v1285 = vld [vmem:[%s431] sm:$0xff]
        %v1286 = vld [vmem:[%s431 + $0x8] sm:$0xff]
        %v1287 = vld [vmem:[%s431 + $0x10] sm:$0xff]
        %v1288 = vld [vmem:[%s431 + $0x18] sm:$0xff]
        %v1289 = vld [vmem:[%s431 + $0x20] sm:$0xff]
        %v1290 = vld [vmem:[%s431 + $0x28] sm:$0xff]
        %v1291 = vld [vmem:[%s431 + $0x30] sm:$0xff]
        %v1292 = vld [vmem:[%s431 + $0x38] sm:$0xff]
        %v1293 = vld [vmem:[%s431 + $0x40] sm:$0xff]
        %v1294 = vld [vmem:[%s431 + $0x48] sm:$0xff]
        %v1295 = vld [vmem:[%s431 + $0x50] sm:$0xff]
        %v1296 = vld [vmem:[%s431 + $0x58] sm:$0xff]
        %v1297 = vld [vmem:[%s431 + $0x60] sm:$0xff]
        %v1298 = vld [vmem:[%s431 + $0x68] sm:$0xff]
        %v1299 = vld [vmem:[%s431 + $0x70] sm:$0xff]
        %v1300 = vld [vmem:[%s431 + $0x78] sm:$0xff]
        %v1301 = vld [vmem:[%s431 + $0x80] sm:$0xff]
        %v1302 = vld [vmem:[%s431 + $0x88] sm:$0xff]
        %v1303 = vld [vmem:[%s431 + $0x90] sm:$0xff]
        %v1304 = vld [vmem:[%s431 + $0x98] sm:$0xff]
        %v1305 = vld [vmem:[%s431 + $0xa0] sm:$0xff]
        %v1306 = vld [vmem:[%s431 + $0xa8] sm:$0xff]
        %v1307 = vld [vmem:[%s431 + $0xb0] sm:$0xff]
        %v1308 = vld [vmem:[%s431 + $0xb8] sm:$0xff]
        %v1309 = vld [vmem:[%s431 + $0xc0] sm:$0xff]
        %v1310 = vld [vmem:[%s431 + $0xc8] sm:$0xff]
        %v1311 = vld [vmem:[%s431 + $0xd0] sm:$0xff]
        %v1312 = vld [vmem:[%s431 + $0xd8] sm:$0xff]
        %v1313 = vld [vmem:[%s431 + $0xe0] sm:$0xff]
        %v1314 = vld [vmem:[%s431 + $0xe8] sm:$0xff]
        %v1315 = vld [vmem:[%s431 + $0xf0] sm:$0xff]
        %v1316 = vld [vmem:[%s431 + $0xf8] sm:$0xff]
        %v1317 = vld [vmem:[%s431 + $0x100] sm:$0xff]
        %v1318 = vld [vmem:[%s431 + $0x108] sm:$0xff]
        %v1319 = vld [vmem:[%s431 + $0x110] sm:$0xff]
        %v1320 = vld [vmem:[%s431 + $0x118] sm:$0xff]
        %v1321 = vld [vmem:[%s431 + $0x120] sm:$0xff]
        %v1322 = vld [vmem:[%s431 + $0x128] sm:$0xff]
        %v1323 = vld [vmem:[%s431 + $0x130] sm:$0xff]
        %v1324 = vld [vmem:[%s431 + $0x138] sm:$0xff]
        %v1325 = vld [vmem:[%s431 + $0x140] sm:$0xff]
        %v1326 = vld [vmem:[%s431 + $0x148] sm:$0xff]
        %v1327 = vld [vmem:[%s431 + $0x150] sm:$0xff]
        %v1328 = vld [vmem:[%s431 + $0x158] sm:$0xff]
        %v1329 = vld [vmem:[%s431 + $0x160] sm:$0xff]
        %v1330 = vld [vmem:[%s431 + $0x168] sm:$0xff]
        %v1331 = vld [vmem:[%s431 + $0x170] sm:$0xff]
        %v1332 = vld [vmem:[%s431 + $0x178] sm:$0xff]
        %v1333 = vld [vmem:[%s431 + $0x180] sm:$0xff]
        %v1334 = vld [vmem:[%s431 + $0x188] sm:$0xff]
        %v1335 = vld [vmem:[%s431 + $0x190] sm:$0xff]
        %v1336 = vld [vmem:[%s431 + $0x198] sm:$0xff]
        %v1337 = vld [vmem:[%s431 + $0x1a0] sm:$0xff]
        %v1338 = vld [vmem:[%s431 + $0x1a8] sm:$0xff]
        %v1339 = vld [vmem:[%s431 + $0x1b0] sm:$0xff]
        %v1340 = vld [vmem:[%s431 + $0x1b8] sm:$0xff]
        %v1341 = vld [vmem:[%s431 + $0x1c0] sm:$0xff]
        %v1342 = vld [vmem:[%s431 + $0x1c8] sm:$0xff]
        %v1343 = vld [vmem:[%s431 + $0x1d0] sm:$0xff]
        %v1344 = vld [vmem:[%s431 + $0x1d8] sm:$0xff]
        %v1345 = vld [vmem:[%s431 + $0x1e0] sm:$0xff]
        %v1346 = vld [vmem:[%s431 + $0x1e8] sm:$0xff]
        %v1347 = vld [vmem:[%s431 + $0x1f0] sm:$0xff]
        %v1348 = vld [vmem:[%s431 + $0x1f8] sm:$0xff]
        %v1349 = vld [vmem:[%s431 + $0x200] sm:$0xff]
        %v1350 = vld [vmem:[%s431 + $0x208] sm:$0xff]
        %v1351 = vld [vmem:[%s431 + $0x210] sm:$0xff]
        %v1352 = vld [vmem:[%s431 + $0x218] sm:$0xff]
        %v1353 = vld [vmem:[%s431 + $0x220] sm:$0xff]
        %v1354 = vld [vmem:[%s431 + $0x228] sm:$0xff]
        %v1355 = vld [vmem:[%s431 + $0x230] sm:$0xff]
        %v1356 = vld [vmem:[%s431 + $0x238] sm:$0xff]
        %v1357 = vld [vmem:[%s431 + $0x240] sm:$0xff]
        %v1358 = vld [vmem:[%s431 + $0x248] sm:$0xff]
        %v1359 = vld [vmem:[%s431 + $0x250] sm:$0xff]
        %v1360 = vld [vmem:[%s431 + $0x258] sm:$0xff]
        %v1361 = vld [vmem:[%s431 + $0x260] sm:$0xff]
        %v1362 = vld [vmem:[%s431 + $0x268] sm:$0xff]
        %v1363 = vld [vmem:[%s431 + $0x270] sm:$0xff]
        %v1364 = vld [vmem:[%s431 + $0x278] sm:$0xff]
        %v1365 = vld [vmem:[%s431 + $0x280] sm:$0xff]
        %v1366 = vld [vmem:[%s431 + $0x288] sm:$0xff]
        %v1367 = vld [vmem:[%s431 + $0x290] sm:$0xff]
        %v1368 = vld [vmem:[%s431 + $0x298] sm:$0xff]
        %v1369 = vld [vmem:[%s431 + $0x2a0] sm:$0xff]
        %v1370 = vld [vmem:[%s431 + $0x2a8] sm:$0xff]
        %v1371 = vld [vmem:[%s431 + $0x2b0] sm:$0xff]
        %v1372 = vld [vmem:[%s431 + $0x2b8] sm:$0xff]
        %v1373 = vld [vmem:[%s431 + $0x2c0] sm:$0xff]
        %v1374 = vld [vmem:[%s431 + $0x2c8] sm:$0xff]
        %v1375 = vld [vmem:[%s431 + $0x2d0] sm:$0xff]
        %v1376 = vld [vmem:[%s431 + $0x2d8] sm:$0xff]
        %v1377 = vld [vmem:[%s431 + $0x2e0] sm:$0xff]
        %v1378 = vld [vmem:[%s431 + $0x2e8] sm:$0xff]
        %v1379 = vld [vmem:[%s431 + $0x2f0] sm:$0xff]
        %v1380 = vld [vmem:[%s431 + $0x2f8] sm:$0xff]
        %v1381 = vld [vmem:[%s431 + $0x300] sm:$0xff]
        %v1382 = vld [vmem:[%s431 + $0x308] sm:$0xff]
        %v1383 = vld [vmem:[%s431 + $0x310] sm:$0xff]
        %v1384 = vld [vmem:[%s431 + $0x318] sm:$0xff]
        %v1385 = vld [vmem:[%s431 + $0x320] sm:$0xff]
        %v1386 = vld [vmem:[%s431 + $0x328] sm:$0xff]
        %v1387 = vld [vmem:[%s431 + $0x330] sm:$0xff]
        %v1388 = vld [vmem:[%s431 + $0x338] sm:$0xff]
        %v1389 = vld [vmem:[%s431 + $0x340] sm:$0xff]
        %v1390 = vld [vmem:[%s431 + $0x348] sm:$0xff]
        %v1391 = vld [vmem:[%s431 + $0x350] sm:$0xff]
        %v1392 = vld [vmem:[%s431 + $0x358] sm:$0xff]
        %v1393 = vld [vmem:[%s431 + $0x360] sm:$0xff]
        %v1394 = vld [vmem:[%s431 + $0x368] sm:$0xff]
        %v1395 = vld [vmem:[%s431 + $0x370] sm:$0xff]
        %v1396 = vld [vmem:[%s431 + $0x378] sm:$0xff]
        %v1397 = vld [vmem:[%s431 + $0x380] sm:$0xff]
        %v1398 = vld [vmem:[%s431 + $0x388] sm:$0xff]
        %v1399 = vld [vmem:[%s431 + $0x390] sm:$0xff]
        %v1400 = vld [vmem:[%s431 + $0x398] sm:$0xff]
        %v1401 = vld [vmem:[%s431 + $0x3a0] sm:$0xff]
        %v1402 = vld [vmem:[%s431 + $0x3a8] sm:$0xff]
        %v1403 = vld [vmem:[%s431 + $0x3b0] sm:$0xff]
        %v1404 = vld [vmem:[%s431 + $0x3b8] sm:$0xff]
        %v1405 = vld [vmem:[%s431 + $0x3c0] sm:$0xff]
        %v1406 = vld [vmem:[%s431 + $0x3c8] sm:$0xff]
        %v1407 = vld [vmem:[%s431 + $0x3d0] sm:$0xff]
        %v1408 = vld [vmem:[%s431 + $0x3d8] sm:$0xff]
        %v1409 = vld [vmem:[%s431 + $0x3e0] sm:$0xff]
        %v1410 = vld [vmem:[%s431 + $0x3e8] sm:$0xff]
        %v1411 = vld [vmem:[%s431 + $0x3f0] sm:$0xff]
        %v1412 = vld [vmem:[%s431 + $0x3f8] sm:$0xff]
        %v1413 = vld [vmem:[%s431 + $0x400] sm:$0xff]
        %v1414 = vld [vmem:[%s431 + $0x408] sm:$0xff]
        %v1415 = vld [vmem:[%s431 + $0x410] sm:$0xff]
        %v1416 = vld [vmem:[%s431 + $0x418] sm:$0xff]
        %v1417 = vld [vmem:[%s431 + $0x420] sm:$0xff]
        %v1418 = vld [vmem:[%s431 + $0x428] sm:$0xff]
        %v1419 = vld [vmem:[%s431 + $0x430] sm:$0xff]
        %v1420 = vld [vmem:[%s431 + $0x438] sm:$0xff]
        %v1421 = vld [vmem:[%s431 + $0x440] sm:$0xff]
        %v1422 = vld [vmem:[%s431 + $0x448] sm:$0xff]
        %v1423 = vld [vmem:[%s431 + $0x450] sm:$0xff]
        %v1424 = vld [vmem:[%s431 + $0x458] sm:$0xff]
        %v1425 = vld [vmem:[%s431 + $0x460] sm:$0xff]
        %v1426 = vld [vmem:[%s431 + $0x468] sm:$0xff]
        %v1427 = vld [vmem:[%s431 + $0x470] sm:$0xff]
        %v1428 = vld [vmem:[%s431 + $0x478] sm:$0xff]
        %v1429 = vld [vmem:[%s431 + $0x480] sm:$0xff]
        %v1430 = vld [vmem:[%s431 + $0x488] sm:$0xff]
        %v1431 = vld [vmem:[%s431 + $0x490] sm:$0xff]
        %v1432 = vld [vmem:[%s431 + $0x498] sm:$0xff]
        %v1433 = vld [vmem:[%s431 + $0x4a0] sm:$0xff]
        %v1434 = vld [vmem:[%s431 + $0x4a8] sm:$0xff]
        %v1435 = vld [vmem:[%s431 + $0x4b0] sm:$0xff]
        %v1436 = vld [vmem:[%s431 + $0x4b8] sm:$0xff]
        %v1437 = vld [vmem:[%s431 + $0x4c0] sm:$0xff]
        %v1438 = vld [vmem:[%s431 + $0x4c8] sm:$0xff]
        %v1439 = vld [vmem:[%s431 + $0x4d0] sm:$0xff]
        %v1440 = vld [vmem:[%s431 + $0x4d8] sm:$0xff]
        %v1441 = vld [vmem:[%s431 + $0x4e0] sm:$0xff]
        %v1442 = vld [vmem:[%s431 + $0x4e8] sm:$0xff]
        %v1443 = vld [vmem:[%s431 + $0x4f0] sm:$0xff]
        %v1444 = vld [vmem:[%s431 + $0x4f8] sm:$0xff]
        %v1445 = vld [vmem:[%s431 + $0x500] sm:$0xff]
        %v1446 = vld [vmem:[%s431 + $0x508] sm:$0xff]
        %v1447 = vld [vmem:[%s431 + $0x510] sm:$0xff]
        %v1448 = vld [vmem:[%s431 + $0x518] sm:$0xff]
        %v1449 = vld [vmem:[%s431 + $0x520] sm:$0xff]
        %v1450 = vld [vmem:[%s431 + $0x528] sm:$0xff]
        %v1451 = vld [vmem:[%s431 + $0x530] sm:$0xff]
        %v1452 = vld [vmem:[%s431 + $0x538] sm:$0xff]
        %v1453 = vld [vmem:[%s431 + $0x540] sm:$0xff]
        %v1454 = vld [vmem:[%s431 + $0x548] sm:$0xff]
        %v1455 = vld [vmem:[%s431 + $0x550] sm:$0xff]
        %v1456 = vld [vmem:[%s431 + $0x558] sm:$0xff]
        %v1457 = vld [vmem:[%s431 + $0x560] sm:$0xff]
        %v1458 = vld [vmem:[%s431 + $0x568] sm:$0xff]
        %v1459 = vld [vmem:[%s431 + $0x570] sm:$0xff]
        %v1460 = vld [vmem:[%s431 + $0x578] sm:$0xff]
        %v1461 = vld [vmem:[%s431 + $0x580] sm:$0xff]
        %v1462 = vld [vmem:[%s431 + $0x588] sm:$0xff]
        %v1463 = vld [vmem:[%s431 + $0x590] sm:$0xff]
        %v1464 = vld [vmem:[%s431 + $0x598] sm:$0xff]
        %v1465 = vld [vmem:[%s431 + $0x5a0] sm:$0xff]
        %v1466 = vld [vmem:[%s431 + $0x5a8] sm:$0xff]
        %v1467 = vld [vmem:[%s431 + $0x5b0] sm:$0xff]
        %v1468 = vld [vmem:[%s431 + $0x5b8] sm:$0xff]
        %v1469 = vld [vmem:[%s431 + $0x5c0] sm:$0xff]
        %v1470 = vld [vmem:[%s431 + $0x5c8] sm:$0xff]
        %v1471 = vld [vmem:[%s431 + $0x5d0] sm:$0xff]
        %v1472 = vld [vmem:[%s431 + $0x5d8] sm:$0xff]
        %v1473 = vld [vmem:[%s431 + $0x5e0] sm:$0xff]
        %v1474 = vld [vmem:[%s431 + $0x5e8] sm:$0xff]
        %v1475 = vld [vmem:[%s431 + $0x5f0] sm:$0xff]
        %v1476 = vld [vmem:[%s431 + $0x5f8] sm:$0xff]
        %v1477 = vunpack.c.l.s8.bf16 %v1285
        %v1478 = vunpack.c.l.s8.bf16 %v1286
        %v1479 = vunpack.c.l.s8.bf16 %v1287
        %v1480 = vunpack.c.l.s8.bf16 %v1288
        %v1481 = vunpack.c.l.s8.bf16 %v1289
        %v1482 = vunpack.c.l.s8.bf16 %v1290
        %v1483 = vunpack.c.h.s8.bf16 %v1285
        %v1484 = vunpack.c.h.s8.bf16 %v1286
        %v1485 = vunpack.c.h.s8.bf16 %v1287
        %v1486 = vunpack.c.h.s8.bf16 %v1288
        %v1487 = vunpack.c.h.s8.bf16 %v1289
        %v1488 = vunpack.c.h.s8.bf16 %v1290
        %v1489 = vunpack.c.l.s8.bf16 %v1291
        %v1490 = vunpack.c.l.s8.bf16 %v1292
        %v1491 = vunpack.c.l.s8.bf16 %v1293
        %v1492 = vunpack.c.l.s8.bf16 %v1294
        %v1493 = vunpack.c.l.s8.bf16 %v1295
        %v1494 = vunpack.c.l.s8.bf16 %v1296
        %v1495 = vunpack.c.h.s8.bf16 %v1291
        %v1496 = vunpack.c.h.s8.bf16 %v1292
        %v1497 = vunpack.c.h.s8.bf16 %v1293
        %v1498 = vunpack.c.h.s8.bf16 %v1294
        %v1499 = vunpack.c.h.s8.bf16 %v1295
        %v1500 = vunpack.c.h.s8.bf16 %v1296
        %v1501 = vunpack.c.l.s8.bf16 %v1297
        %v1502 = vunpack.c.l.s8.bf16 %v1298
        %v1503 = vunpack.c.l.s8.bf16 %v1299
        %v1504 = vunpack.c.l.s8.bf16 %v1300
        %v1505 = vunpack.c.l.s8.bf16 %v1301
        %v1506 = vunpack.c.l.s8.bf16 %v1302
        %v1507 = vunpack.c.h.s8.bf16 %v1297
        %v1508 = vunpack.c.h.s8.bf16 %v1298
        %v1509 = vunpack.c.h.s8.bf16 %v1299
        %v1510 = vunpack.c.h.s8.bf16 %v1300
        %v1511 = vunpack.c.h.s8.bf16 %v1301
        %v1512 = vunpack.c.h.s8.bf16 %v1302
        %v1513 = vunpack.c.l.s8.bf16 %v1303
        %v1514 = vunpack.c.l.s8.bf16 %v1304
        %v1515 = vunpack.c.l.s8.bf16 %v1305
        %v1516 = vunpack.c.l.s8.bf16 %v1306
        %v1517 = vunpack.c.l.s8.bf16 %v1307
        %v1518 = vunpack.c.l.s8.bf16 %v1308
        %v1519 = vunpack.c.h.s8.bf16 %v1303
        %v1520 = vunpack.c.h.s8.bf16 %v1304
        %v1521 = vunpack.c.h.s8.bf16 %v1305
        %v1522 = vunpack.c.h.s8.bf16 %v1306
        %v1523 = vunpack.c.h.s8.bf16 %v1307
        %v1524 = vunpack.c.h.s8.bf16 %v1308
        %v1525 = vunpack.c.l.s8.bf16 %v1309
        %v1526 = vunpack.c.l.s8.bf16 %v1310
        %v1527 = vunpack.c.l.s8.bf16 %v1311
        %v1528 = vunpack.c.l.s8.bf16 %v1312
        %v1529 = vunpack.c.l.s8.bf16 %v1313
        %v1530 = vunpack.c.l.s8.bf16 %v1314
        %v1531 = vunpack.c.h.s8.bf16 %v1309
        %v1532 = vunpack.c.h.s8.bf16 %v1310
        %v1533 = vunpack.c.h.s8.bf16 %v1311
        %v1534 = vunpack.c.h.s8.bf16 %v1312
        %v1535 = vunpack.c.h.s8.bf16 %v1313
        %v1536 = vunpack.c.h.s8.bf16 %v1314
        %v1537 = vunpack.c.l.s8.bf16 %v1315
        %v1538 = vunpack.c.l.s8.bf16 %v1316
        %v1539 = vunpack.c.l.s8.bf16 %v1317
        %v1540 = vunpack.c.l.s8.bf16 %v1318
        %v1541 = vunpack.c.l.s8.bf16 %v1319
        %v1542 = vunpack.c.l.s8.bf16 %v1320
        %v1543 = vunpack.c.h.s8.bf16 %v1315
        %v1544 = vunpack.c.h.s8.bf16 %v1316
        %v1545 = vunpack.c.h.s8.bf16 %v1317
        %v1546 = vunpack.c.h.s8.bf16 %v1318
        %v1547 = vunpack.c.h.s8.bf16 %v1319
        %v1548 = vunpack.c.h.s8.bf16 %v1320
        %v1549 = vunpack.c.l.s8.bf16 %v1321
        %v1550 = vunpack.c.l.s8.bf16 %v1322
        %v1551 = vunpack.c.l.s8.bf16 %v1323
        %v1552 = vunpack.c.l.s8.bf16 %v1324
        %v1553 = vunpack.c.l.s8.bf16 %v1325
        %v1554 = vunpack.c.l.s8.bf16 %v1326
        %v1555 = vunpack.c.h.s8.bf16 %v1321
        %v1556 = vunpack.c.h.s8.bf16 %v1322
        %v1557 = vunpack.c.h.s8.bf16 %v1323
        %v1558 = vunpack.c.h.s8.bf16 %v1324
        %v1559 = vunpack.c.h.s8.bf16 %v1325
        %v1560 = vunpack.c.h.s8.bf16 %v1326
        %v1561 = vunpack.c.l.s8.bf16 %v1327
        %v1562 = vunpack.c.l.s8.bf16 %v1328
        %v1563 = vunpack.c.l.s8.bf16 %v1329
        %v1564 = vunpack.c.l.s8.bf16 %v1330
        %v1565 = vunpack.c.l.s8.bf16 %v1331
        %v1566 = vunpack.c.l.s8.bf16 %v1332
        %v1567 = vunpack.c.h.s8.bf16 %v1327
        %v1568 = vunpack.c.h.s8.bf16 %v1328
        %v1569 = vunpack.c.h.s8.bf16 %v1329
        %v1570 = vunpack.c.h.s8.bf16 %v1330
        %v1571 = vunpack.c.h.s8.bf16 %v1331
        %v1572 = vunpack.c.h.s8.bf16 %v1332
        %v1573 = vunpack.c.l.s8.bf16 %v1333
        %v1574 = vunpack.c.l.s8.bf16 %v1334
        %v1575 = vunpack.c.l.s8.bf16 %v1335
        %v1576 = vunpack.c.l.s8.bf16 %v1336
        %v1577 = vunpack.c.l.s8.bf16 %v1337
        %v1578 = vunpack.c.l.s8.bf16 %v1338
        %v1579 = vunpack.c.h.s8.bf16 %v1333
        %v1580 = vunpack.c.h.s8.bf16 %v1334
        %v1581 = vunpack.c.h.s8.bf16 %v1335
        %v1582 = vunpack.c.h.s8.bf16 %v1336
        %v1583 = vunpack.c.h.s8.bf16 %v1337
        %v1584 = vunpack.c.h.s8.bf16 %v1338
        %v1585 = vunpack.c.l.s8.bf16 %v1339
        %v1586 = vunpack.c.l.s8.bf16 %v1340
        %v1587 = vunpack.c.l.s8.bf16 %v1341
        %v1588 = vunpack.c.l.s8.bf16 %v1342
        %v1589 = vunpack.c.l.s8.bf16 %v1343
        %v1590 = vunpack.c.l.s8.bf16 %v1344
        %v1591 = vunpack.c.h.s8.bf16 %v1339
        %v1592 = vunpack.c.h.s8.bf16 %v1340
        %v1593 = vunpack.c.h.s8.bf16 %v1341
        %v1594 = vunpack.c.h.s8.bf16 %v1342
        %v1595 = vunpack.c.h.s8.bf16 %v1343
        %v1596 = vunpack.c.h.s8.bf16 %v1344
        %v1597 = vunpack.c.l.s8.bf16 %v1345
        %v1598 = vunpack.c.l.s8.bf16 %v1346
        %v1599 = vunpack.c.l.s8.bf16 %v1347
        %v1600 = vunpack.c.l.s8.bf16 %v1348
        %v1601 = vunpack.c.l.s8.bf16 %v1349
        %v1602 = vunpack.c.l.s8.bf16 %v1350
        %v1603 = vunpack.c.h.s8.bf16 %v1345
        %v1604 = vunpack.c.h.s8.bf16 %v1346
        %v1605 = vunpack.c.h.s8.bf16 %v1347
        %v1606 = vunpack.c.h.s8.bf16 %v1348
        %v1607 = vunpack.c.h.s8.bf16 %v1349
        %v1608 = vunpack.c.h.s8.bf16 %v1350
        %v1609 = vunpack.c.l.s8.bf16 %v1351
        %v1610 = vunpack.c.l.s8.bf16 %v1352
        %v1611 = vunpack.c.l.s8.bf16 %v1353
        %v1612 = vunpack.c.l.s8.bf16 %v1354
        %v1613 = vunpack.c.l.s8.bf16 %v1355
        %v1614 = vunpack.c.l.s8.bf16 %v1356
        %v1615 = vunpack.c.h.s8.bf16 %v1351
        %v1616 = vunpack.c.h.s8.bf16 %v1352
        %v1617 = vunpack.c.h.s8.bf16 %v1353
        %v1618 = vunpack.c.h.s8.bf16 %v1354
        %v1619 = vunpack.c.h.s8.bf16 %v1355
        %v1620 = vunpack.c.h.s8.bf16 %v1356
        %v1621 = vunpack.c.l.s8.bf16 %v1357
        %v1622 = vunpack.c.l.s8.bf16 %v1358
        %v1623 = vunpack.c.l.s8.bf16 %v1359
        %v1624 = vunpack.c.l.s8.bf16 %v1360
        %v1625 = vunpack.c.l.s8.bf16 %v1361
        %v1626 = vunpack.c.l.s8.bf16 %v1362
        %v1627 = vunpack.c.h.s8.bf16 %v1357
        %v1628 = vunpack.c.h.s8.bf16 %v1358
        %v1629 = vunpack.c.h.s8.bf16 %v1359
        %v1630 = vunpack.c.h.s8.bf16 %v1360
        %v1631 = vunpack.c.h.s8.bf16 %v1361
        %v1632 = vunpack.c.h.s8.bf16 %v1362
        %v1633 = vunpack.c.l.s8.bf16 %v1363
        %v1634 = vunpack.c.l.s8.bf16 %v1364
        %v1635 = vunpack.c.l.s8.bf16 %v1365
        %v1636 = vunpack.c.l.s8.bf16 %v1366
        %v1637 = vunpack.c.l.s8.bf16 %v1367
        %v1638 = vunpack.c.l.s8.bf16 %v1368
        %v1639 = vunpack.c.h.s8.bf16 %v1363
        %v1640 = vunpack.c.h.s8.bf16 %v1364
        %v1641 = vunpack.c.h.s8.bf16 %v1365
        %v1642 = vunpack.c.h.s8.bf16 %v1366
        %v1643 = vunpack.c.h.s8.bf16 %v1367
        %v1644 = vunpack.c.h.s8.bf16 %v1368
        %v1645 = vunpack.c.l.s8.bf16 %v1369
        %v1646 = vunpack.c.l.s8.bf16 %v1370
        %v1647 = vunpack.c.l.s8.bf16 %v1371
        %v1648 = vunpack.c.l.s8.bf16 %v1372
        %v1649 = vunpack.c.l.s8.bf16 %v1373
        %v1650 = vunpack.c.l.s8.bf16 %v1374
        %v1651 = vunpack.c.h.s8.bf16 %v1369
        %v1652 = vunpack.c.h.s8.bf16 %v1370
        %v1653 = vunpack.c.h.s8.bf16 %v1371
        %v1654 = vunpack.c.h.s8.bf16 %v1372
        %v1655 = vunpack.c.h.s8.bf16 %v1373
        %v1656 = vunpack.c.h.s8.bf16 %v1374
        %v1657 = vunpack.c.l.s8.bf16 %v1375
        %v1658 = vunpack.c.l.s8.bf16 %v1376
        %v1659 = vunpack.c.l.s8.bf16 %v1377
        %v1660 = vunpack.c.l.s8.bf16 %v1378
        %v1661 = vunpack.c.l.s8.bf16 %v1379
        %v1662 = vunpack.c.l.s8.bf16 %v1380
        %v1663 = vunpack.c.h.s8.bf16 %v1375
        %v1664 = vunpack.c.h.s8.bf16 %v1376
        %v1665 = vunpack.c.h.s8.bf16 %v1377
        %v1666 = vunpack.c.h.s8.bf16 %v1378
        %v1667 = vunpack.c.h.s8.bf16 %v1379
        %v1668 = vunpack.c.h.s8.bf16 %v1380
        %v1669 = vunpack.c.l.s8.bf16 %v1381
        %v1670 = vunpack.c.l.s8.bf16 %v1382
        %v1671 = vunpack.c.l.s8.bf16 %v1383
        %v1672 = vunpack.c.l.s8.bf16 %v1384
        %v1673 = vunpack.c.l.s8.bf16 %v1385
        %v1674 = vunpack.c.l.s8.bf16 %v1386
        %v1675 = vunpack.c.h.s8.bf16 %v1381
        %v1676 = vunpack.c.h.s8.bf16 %v1382
        %v1677 = vunpack.c.h.s8.bf16 %v1383
        %v1678 = vunpack.c.h.s8.bf16 %v1384
        %v1679 = vunpack.c.h.s8.bf16 %v1385
        %v1680 = vunpack.c.h.s8.bf16 %v1386
        %v1681 = vunpack.c.l.s8.bf16 %v1387
        %v1682 = vunpack.c.l.s8.bf16 %v1388
        %v1683 = vunpack.c.l.s8.bf16 %v1389
        %v1684 = vunpack.c.l.s8.bf16 %v1390
        %v1685 = vunpack.c.l.s8.bf16 %v1391
        %v1686 = vunpack.c.l.s8.bf16 %v1392
        %v1687 = vunpack.c.h.s8.bf16 %v1387
        %v1688 = vunpack.c.h.s8.bf16 %v1388
        %v1689 = vunpack.c.h.s8.bf16 %v1389
        %v1690 = vunpack.c.h.s8.bf16 %v1390
        %v1691 = vunpack.c.h.s8.bf16 %v1391
        %v1692 = vunpack.c.h.s8.bf16 %v1392
        %v1693 = vunpack.c.l.s8.bf16 %v1393
        %v1694 = vunpack.c.l.s8.bf16 %v1394
        %v1695 = vunpack.c.l.s8.bf16 %v1395
        %v1696 = vunpack.c.l.s8.bf16 %v1396
        %v1697 = vunpack.c.l.s8.bf16 %v1397
        %v1698 = vunpack.c.l.s8.bf16 %v1398
        %v1699 = vunpack.c.h.s8.bf16 %v1393
        %v1700 = vunpack.c.h.s8.bf16 %v1394
        %v1701 = vunpack.c.h.s8.bf16 %v1395
        %v1702 = vunpack.c.h.s8.bf16 %v1396
        %v1703 = vunpack.c.h.s8.bf16 %v1397
        %v1704 = vunpack.c.h.s8.bf16 %v1398
        %v1705 = vunpack.c.l.s8.bf16 %v1399
        %v1706 = vunpack.c.l.s8.bf16 %v1400
        %v1707 = vunpack.c.l.s8.bf16 %v1401
        %v1708 = vunpack.c.l.s8.bf16 %v1402
        %v1709 = vunpack.c.l.s8.bf16 %v1403
        %v1710 = vunpack.c.l.s8.bf16 %v1404
        %v1711 = vunpack.c.h.s8.bf16 %v1399
        %v1712 = vunpack.c.h.s8.bf16 %v1400
        %v1713 = vunpack.c.h.s8.bf16 %v1401
        %v1714 = vunpack.c.h.s8.bf16 %v1402
        %v1715 = vunpack.c.h.s8.bf16 %v1403
        %v1716 = vunpack.c.h.s8.bf16 %v1404
        %v1717 = vunpack.c.l.s8.bf16 %v1405
        %v1718 = vunpack.c.l.s8.bf16 %v1406
        %v1719 = vunpack.c.l.s8.bf16 %v1407
        %v1720 = vunpack.c.l.s8.bf16 %v1408
        %v1721 = vunpack.c.l.s8.bf16 %v1409
        %v1722 = vunpack.c.l.s8.bf16 %v1410
        %v1723 = vunpack.c.h.s8.bf16 %v1405
        %v1724 = vunpack.c.h.s8.bf16 %v1406
        %v1725 = vunpack.c.h.s8.bf16 %v1407
        %v1726 = vunpack.c.h.s8.bf16 %v1408
        %v1727 = vunpack.c.h.s8.bf16 %v1409
        %v1728 = vunpack.c.h.s8.bf16 %v1410
        %v1729 = vunpack.c.l.s8.bf16 %v1411
        %v1730 = vunpack.c.l.s8.bf16 %v1412
        %v1731 = vunpack.c.l.s8.bf16 %v1413
        %v1732 = vunpack.c.l.s8.bf16 %v1414
        %v1733 = vunpack.c.l.s8.bf16 %v1415
        %v1734 = vunpack.c.l.s8.bf16 %v1416
        %v1735 = vunpack.c.h.s8.bf16 %v1411
        %v1736 = vunpack.c.h.s8.bf16 %v1412
        %v1737 = vunpack.c.h.s8.bf16 %v1413
        %v1738 = vunpack.c.h.s8.bf16 %v1414
        %v1739 = vunpack.c.h.s8.bf16 %v1415
        %v1740 = vunpack.c.h.s8.bf16 %v1416
        %v1741 = vunpack.c.l.s8.bf16 %v1417
        %v1742 = vunpack.c.l.s8.bf16 %v1418
        %v1743 = vunpack.c.l.s8.bf16 %v1419
        %v1744 = vunpack.c.l.s8.bf16 %v1420
        %v1745 = vunpack.c.l.s8.bf16 %v1421
        %v1746 = vunpack.c.l.s8.bf16 %v1422
        %v1747 = vunpack.c.h.s8.bf16 %v1417
        %v1748 = vunpack.c.h.s8.bf16 %v1418
        %v1749 = vunpack.c.h.s8.bf16 %v1419
        %v1750 = vunpack.c.h.s8.bf16 %v1420
        %v1751 = vunpack.c.h.s8.bf16 %v1421
        %v1752 = vunpack.c.h.s8.bf16 %v1422
        %v1753 = vunpack.c.l.s8.bf16 %v1423
        %v1754 = vunpack.c.l.s8.bf16 %v1424
        %v1755 = vunpack.c.l.s8.bf16 %v1425
        %v1756 = vunpack.c.l.s8.bf16 %v1426
        %v1757 = vunpack.c.l.s8.bf16 %v1427
        %v1758 = vunpack.c.l.s8.bf16 %v1428
        %v1759 = vunpack.c.h.s8.bf16 %v1423
        %v1760 = vunpack.c.h.s8.bf16 %v1424
        %v1761 = vunpack.c.h.s8.bf16 %v1425
        %v1762 = vunpack.c.h.s8.bf16 %v1426
        %v1763 = vunpack.c.h.s8.bf16 %v1427
        %v1764 = vunpack.c.h.s8.bf16 %v1428
        %v1765 = vunpack.c.l.s8.bf16 %v1429
        %v1766 = vunpack.c.l.s8.bf16 %v1430
        %v1767 = vunpack.c.l.s8.bf16 %v1431
        %v1768 = vunpack.c.l.s8.bf16 %v1432
        %v1769 = vunpack.c.l.s8.bf16 %v1433
        %v1770 = vunpack.c.l.s8.bf16 %v1434
        %v1771 = vunpack.c.h.s8.bf16 %v1429
        %v1772 = vunpack.c.h.s8.bf16 %v1430
        %v1773 = vunpack.c.h.s8.bf16 %v1431
        %v1774 = vunpack.c.h.s8.bf16 %v1432
        %v1775 = vunpack.c.h.s8.bf16 %v1433
        %v1776 = vunpack.c.h.s8.bf16 %v1434
        %v1777 = vunpack.c.l.s8.bf16 %v1435
        %v1778 = vunpack.c.l.s8.bf16 %v1436
        %v1779 = vunpack.c.l.s8.bf16 %v1437
        %v1780 = vunpack.c.l.s8.bf16 %v1438
        %v1781 = vunpack.c.l.s8.bf16 %v1439
        %v1782 = vunpack.c.l.s8.bf16 %v1440
        %v1783 = vunpack.c.h.s8.bf16 %v1435
        %v1784 = vunpack.c.h.s8.bf16 %v1436
        %v1785 = vunpack.c.h.s8.bf16 %v1437
        %v1786 = vunpack.c.h.s8.bf16 %v1438
        %v1787 = vunpack.c.h.s8.bf16 %v1439
        %v1788 = vunpack.c.h.s8.bf16 %v1440
        %v1789 = vunpack.c.l.s8.bf16 %v1441
        %v1790 = vunpack.c.l.s8.bf16 %v1442
        %v1791 = vunpack.c.l.s8.bf16 %v1443
        %v1792 = vunpack.c.l.s8.bf16 %v1444
        %v1793 = vunpack.c.l.s8.bf16 %v1445
        %v1794 = vunpack.c.l.s8.bf16 %v1446
        %v1795 = vunpack.c.h.s8.bf16 %v1441
        %v1796 = vunpack.c.h.s8.bf16 %v1442
        %v1797 = vunpack.c.h.s8.bf16 %v1443
        %v1798 = vunpack.c.h.s8.bf16 %v1444
        %v1799 = vunpack.c.h.s8.bf16 %v1445
        %v1800 = vunpack.c.h.s8.bf16 %v1446
        %v1801 = vunpack.c.l.s8.bf16 %v1447
        %v1802 = vunpack.c.l.s8.bf16 %v1448
        %v1803 = vunpack.c.l.s8.bf16 %v1449
        %v1804 = vunpack.c.l.s8.bf16 %v1450
        %v1805 = vunpack.c.l.s8.bf16 %v1451
        %v1806 = vunpack.c.l.s8.bf16 %v1452
        %v1807 = vunpack.c.h.s8.bf16 %v1447
        %v1808 = vunpack.c.h.s8.bf16 %v1448
        %v1809 = vunpack.c.h.s8.bf16 %v1449
        %v1810 = vunpack.c.h.s8.bf16 %v1450
        %v1811 = vunpack.c.h.s8.bf16 %v1451
        %v1812 = vunpack.c.h.s8.bf16 %v1452
        %v1813 = vunpack.c.l.s8.bf16 %v1453
        %v1814 = vunpack.c.l.s8.bf16 %v1454
        %v1815 = vunpack.c.l.s8.bf16 %v1455
        %v1816 = vunpack.c.l.s8.bf16 %v1456
        %v1817 = vunpack.c.l.s8.bf16 %v1457
        %v1818 = vunpack.c.l.s8.bf16 %v1458
        %v1819 = vunpack.c.h.s8.bf16 %v1453
        %v1820 = vunpack.c.h.s8.bf16 %v1454
        %v1821 = vunpack.c.h.s8.bf16 %v1455
        %v1822 = vunpack.c.h.s8.bf16 %v1456
        %v1823 = vunpack.c.h.s8.bf16 %v1457
        %v1824 = vunpack.c.h.s8.bf16 %v1458
        %v1825 = vunpack.c.l.s8.bf16 %v1459
        %v1826 = vunpack.c.l.s8.bf16 %v1460
        %v1827 = vunpack.c.l.s8.bf16 %v1461
        %v1828 = vunpack.c.l.s8.bf16 %v1462
        %v1829 = vunpack.c.l.s8.bf16 %v1463
        %v1830 = vunpack.c.l.s8.bf16 %v1464
        %v1831 = vunpack.c.h.s8.bf16 %v1459
        %v1832 = vunpack.c.h.s8.bf16 %v1460
        %v1833 = vunpack.c.h.s8.bf16 %v1461
        %v1834 = vunpack.c.h.s8.bf16 %v1462
        %v1835 = vunpack.c.h.s8.bf16 %v1463
        %v1836 = vunpack.c.h.s8.bf16 %v1464
        %v1837 = vunpack.c.l.s8.bf16 %v1465
        %v1838 = vunpack.c.l.s8.bf16 %v1466
        %v1839 = vunpack.c.l.s8.bf16 %v1467
        %v1840 = vunpack.c.l.s8.bf16 %v1468
        %v1841 = vunpack.c.l.s8.bf16 %v1469
        %v1842 = vunpack.c.l.s8.bf16 %v1470
        %v1843 = vunpack.c.h.s8.bf16 %v1465
        %v1844 = vunpack.c.h.s8.bf16 %v1466
        %v1845 = vunpack.c.h.s8.bf16 %v1467
        %v1846 = vunpack.c.h.s8.bf16 %v1468
        %v1847 = vunpack.c.h.s8.bf16 %v1469
        %v1848 = vunpack.c.h.s8.bf16 %v1470
        %v1849 = vunpack.c.l.s8.bf16 %v1471
        %v1850 = vunpack.c.l.s8.bf16 %v1472
        %v1851 = vunpack.c.l.s8.bf16 %v1473
        %v1852 = vunpack.c.l.s8.bf16 %v1474
        %v1853 = vunpack.c.l.s8.bf16 %v1475
        %v1854 = vunpack.c.l.s8.bf16 %v1476
        %v1855 = vunpack.c.h.s8.bf16 %v1471
        %v1856 = vunpack.c.h.s8.bf16 %v1472
        %v1857 = vunpack.c.h.s8.bf16 %v1473
        %v1858 = vunpack.c.h.s8.bf16 %v1474
        %v1859 = vunpack.c.h.s8.bf16 %v1475
        %v1860 = vunpack.c.h.s8.bf16 %v1476
        %v1861 = vpack.c.bf16 %v1277, %v1277
        %v1862 = vpack.c.bf16 %v1278, %v1278
        %v1863 = vpack.c.bf16 %v1279, %v1279
        %v1864 = vpack.c.bf16 %v1280, %v1280
        %v1865 = vpack.c.bf16 %v1281, %v1281
        %v1866 = vpack.c.bf16 %v1282, %v1282
        %v1867 = vpack.c.bf16 %v1283, %v1283
        %v1868 = vpack.c.bf16 %v1284, %v1284
        %1869 = vmatprep.subr.bf16.mxu0 %v1478
        %1870 = vmatpush1.bf16.msra.mxu0 %v1477
        %1871 = vmatprep.subr.bf16.mxu0 %v1484
        %1872 = vmatpush1.bf16.msra.mxu0 %v1483
        %1873 = vmatprep.subr.bf16.mxu0 %v1490
        %1874 = vmatpush1.bf16.msra.mxu0 %v1489
        %1875 = vmatprep.subr.bf16.mxu0 %v1496
        %1876 = vmatpush1.bf16.msra.mxu0 %v1495
        %1877 = vmatprep.subr.bf16.mxu0 %v1502
        %1878 = vmatpush1.bf16.msra.mxu0 %v1501
        %1879 = vmatprep.subr.bf16.mxu0 %v1508
        %1880 = vmatpush1.bf16.msra.mxu0 %v1507
        %1881 = vmatprep.subr.bf16.mxu0 %v1514
        %1882 = vmatpush1.bf16.msra.mxu0 %v1513
        %1883 = vmatprep.subr.bf16.mxu0 %v1520
        %1884 = vmatpush1.bf16.msra.mxu0 %v1519
        %1885 = vmatprep.subr.bf16.mxu0 %v1526
        %1886 = vmatpush1.bf16.msra.mxu0 %v1525
        %1887 = vmatprep.subr.bf16.mxu0 %v1532
        %1888 = vmatpush1.bf16.msra.mxu0 %v1531
        %1889 = vmatprep.subr.bf16.mxu0 %v1538
        %1890 = vmatpush1.bf16.msra.mxu0 %v1537
        %1891 = vmatprep.subr.bf16.mxu0 %v1544
        %1892 = vmatpush1.bf16.msra.mxu0 %v1543
        %1893 = vmatprep.subr.bf16.mxu0 %v1550
        %1894 = vmatpush1.bf16.msra.mxu0 %v1549
        %1895 = vmatprep.subr.bf16.mxu0 %v1556
        %1896 = vmatpush1.bf16.msra.mxu0 %v1555
        %1897 = vmatprep.subr.bf16.mxu0 %v1562
        %1898 = vmatpush1.bf16.msra.mxu0 %v1561
        %1899 = vmatprep.subr.bf16.mxu0 %v1568
        %1900 = vmatpush1.bf16.msra.mxu0 %v1567
        %1901 = vmatprep.mubr.bf16.mxu0 %v1862
        %1902 = vmatmul.mubr.bf16.gmra.mrb[0].mxu0 %v1861
        %v1903 = vpop.f32.mrb[0].mxu0
        %v1904 = vadd.f32 0.0, %v1903
        %v1905 = vpop.f32.mrb[0].mxu0
        %v1906 = vadd.f32 0.0, %v1905
        %v1907 = vpop.f32.mrb[0].mxu0
        %v1908 = vpop.f32.mrb[0].mxu0
        %1909 = vdwg.mxu0
        %1910 = vmatprep.subr.bf16.mxu0 %v1574
        %1911 = vmatpush1.bf16.msra.mxu0 %v1573
        %1912 = vmatprep.subr.bf16.mxu0 %v1580
        %1913 = vmatpush1.bf16.msra.mxu0 %v1579
        %1914 = vmatprep.subr.bf16.mxu0 %v1586
        %1915 = vmatpush1.bf16.msra.mxu0 %v1585
        %1916 = vmatprep.subr.bf16.mxu0 %v1592
        %1917 = vmatpush1.bf16.msra.mxu0 %v1591
        %1918 = vmatprep.subr.bf16.mxu0 %v1598
        %1919 = vmatpush1.bf16.msra.mxu0 %v1597
        %1920 = vmatprep.subr.bf16.mxu0 %v1604
        %1921 = vmatpush1.bf16.msra.mxu0 %v1603
        %1922 = vmatprep.subr.bf16.mxu0 %v1610
        %1923 = vmatpush1.bf16.msra.mxu0 %v1609
        %1924 = vmatprep.subr.bf16.mxu0 %v1616
        %1925 = vmatpush1.bf16.msra.mxu0 %v1615
        %1926 = vmatprep.subr.bf16.mxu0 %v1622
        %1927 = vmatpush1.bf16.msra.mxu0 %v1621
        %1928 = vmatprep.subr.bf16.mxu0 %v1628
        %1929 = vmatpush1.bf16.msra.mxu0 %v1627
        %1930 = vmatprep.subr.bf16.mxu0 %v1634
        %1931 = vmatpush1.bf16.msra.mxu0 %v1633
        %1932 = vmatprep.subr.bf16.mxu0 %v1640
        %1933 = vmatpush1.bf16.msra.mxu0 %v1639
        %1934 = vmatprep.subr.bf16.mxu0 %v1646
        %1935 = vmatpush1.bf16.msra.mxu0 %v1645
        %1936 = vmatprep.subr.bf16.mxu0 %v1652
        %1937 = vmatpush1.bf16.msra.mxu0 %v1651
        %1938 = vmatprep.subr.bf16.mxu0 %v1658
        %1939 = vmatpush1.bf16.msra.mxu0 %v1657
        %1940 = vmatprep.subr.bf16.mxu0 %v1664
        %1941 = vmatpush1.bf16.msra.mxu0 %v1663
        %1942 = vmatprep.mubr.bf16.mxu0 %v1864
        %1943 = vmatmul.mubr.bf16.gmra.mrb[0].mxu0 %v1863
        %v1944 = vpop.f32.mrb[0].mxu0
        %v1945 = vadd.f32 %v1904, %v1944
        %v1946 = vpop.f32.mrb[0].mxu0
        %v1947 = vadd.f32 %v1906, %v1946
        %v1948 = vpop.f32.mrb[0].mxu0
        %v1949 = vpop.f32.mrb[0].mxu0
        %1950 = vdwg.mxu0
        %1951 = vmatprep.subr.bf16.mxu0 %v1670
        %1952 = vmatpush1.bf16.msra.mxu0 %v1669
        %1953 = vmatprep.subr.bf16.mxu0 %v1676
        %1954 = vmatpush1.bf16.msra.mxu0 %v1675
        %1955 = vmatprep.subr.bf16.mxu0 %v1682
        %1956 = vmatpush1.bf16.msra.mxu0 %v1681
        %1957 = vmatprep.subr.bf16.mxu0 %v1688
        %1958 = vmatpush1.bf16.msra.mxu0 %v1687
        %1959 = vmatprep.subr.bf16.mxu0 %v1694
        %1960 = vmatpush1.bf16.msra.mxu0 %v1693
        %1961 = vmatprep.subr.bf16.mxu0 %v1700
        %1962 = vmatpush1.bf16.msra.mxu0 %v1699
        %1963 = vmatprep.subr.bf16.mxu0 %v1706
        %1964 = vmatpush1.bf16.msra.mxu0 %v1705
        %1965 = vmatprep.subr.bf16.mxu0 %v1712
        %1966 = vmatpush1.bf16.msra.mxu0 %v1711
        %1967 = vmatprep.subr.bf16.mxu0 %v1718
        %1968 = vmatpush1.bf16.msra.mxu0 %v1717
        %1969 = vmatprep.subr.bf16.mxu0 %v1724
        %1970 = vmatpush1.bf16.msra.mxu0 %v1723
        %1971 = vmatprep.subr.bf16.mxu0 %v1730
        %1972 = vmatpush1.bf16.msra.mxu0 %v1729
        %1973 = vmatprep.subr.bf16.mxu0 %v1736
        %1974 = vmatpush1.bf16.msra.mxu0 %v1735
        %1975 = vmatprep.subr.bf16.mxu0 %v1742
        %1976 = vmatpush1.bf16.msra.mxu0 %v1741
        %1977 = vmatprep.subr.bf16.mxu0 %v1748
        %1978 = vmatpush1.bf16.msra.mxu0 %v1747
        %1979 = vmatprep.subr.bf16.mxu0 %v1754
        %1980 = vmatpush1.bf16.msra.mxu0 %v1753
        %1981 = vmatprep.subr.bf16.mxu0 %v1760
        %1982 = vmatpush1.bf16.msra.mxu0 %v1759
        %1983 = vmatprep.mubr.bf16.mxu0 %v1866
        %1984 = vmatmul.mubr.bf16.gmra.mrb[0].mxu0 %v1865
        %v1985 = vpop.f32.mrb[0].mxu0
        %v1986 = vadd.f32 %v1945, %v1985
        %v1987 = vpop.f32.mrb[0].mxu0
        %v1988 = vadd.f32 %v1947, %v1987
        %v1989 = vpop.f32.mrb[0].mxu0
        %v1990 = vpop.f32.mrb[0].mxu0
        %1991 = vdwg.mxu0
        %1992 = vmatprep.subr.bf16.mxu0 %v1766
        %1993 = vmatpush1.bf16.msra.mxu0 %v1765
        %1994 = vmatprep.subr.bf16.mxu0 %v1772
        %1995 = vmatpush1.bf16.msra.mxu0 %v1771
        %1996 = vmatprep.subr.bf16.mxu0 %v1778
        %1997 = vmatpush1.bf16.msra.mxu0 %v1777
        %1998 = vmatprep.subr.bf16.mxu0 %v1784
        %1999 = vmatpush1.bf16.msra.mxu0 %v1783
        %2000 = vmatprep.subr.bf16.mxu0 %v1790
        %2001 = vmatpush1.bf16.msra.mxu0 %v1789
        %2002 = vmatprep.subr.bf16.mxu0 %v1796
        %2003 = vmatpush1.bf16.msra.mxu0 %v1795
        %2004 = vmatprep.subr.bf16.mxu0 %v1802
        %2005 = vmatpush1.bf16.msra.mxu0 %v1801
        %2006 = vmatprep.subr.bf16.mxu0 %v1808
        %2007 = vmatpush1.bf16.msra.mxu0 %v1807
        %2008 = vmatprep.subr.bf16.mxu0 %v1814
        %2009 = vmatpush1.bf16.msra.mxu0 %v1813
        %2010 = vmatprep.subr.bf16.mxu0 %v1820
        %2011 = vmatpush1.bf16.msra.mxu0 %v1819
        %2012 = vmatprep.subr.bf16.mxu0 %v1826
        %2013 = vmatpush1.bf16.msra.mxu0 %v1825
        %2014 = vmatprep.subr.bf16.mxu0 %v1832
        %2015 = vmatpush1.bf16.msra.mxu0 %v1831
        %2016 = vmatprep.subr.bf16.mxu0 %v1838
        %2017 = vmatpush1.bf16.msra.mxu0 %v1837
        %2018 = vmatprep.subr.bf16.mxu0 %v1844
        %2019 = vmatpush1.bf16.msra.mxu0 %v1843
        %2020 = vmatprep.subr.bf16.mxu0 %v1850
        %2021 = vmatpush1.bf16.msra.mxu0 %v1849
        %2022 = vmatprep.subr.bf16.mxu0 %v1856
        %2023 = vmatpush1.bf16.msra.mxu0 %v1855
        %2024 = vmatprep.mubr.bf16.mxu0 %v1868
        %2025 = vmatmul.mubr.bf16.gmra.mrb[0].mxu0 %v1867
        %v2026 = vpop.f32.mrb[0].mxu0
        %v2027 = vadd.f32 %v1986, %v2026
        %v2028 = vpop.f32.mrb[0].mxu0
        %v2029 = vadd.f32 %v1988, %v2028
        %v2030 = vpop.f32.mrb[0].mxu0
        %v2031 = vpop.f32.mrb[0].mxu0
        %2032 = vdwg.mxu0
        %2033 = vmatprep.subr.bf16.mxu0 %v1480
        %2034 = vmatpush1.bf16.msra.mxu0 %v1479
        %2035 = vmatprep.subr.bf16.mxu0 %v1486
        %2036 = vmatpush1.bf16.msra.mxu0 %v1485
        %2037 = vmatprep.subr.bf16.mxu0 %v1492
        %2038 = vmatpush1.bf16.msra.mxu0 %v1491
        %2039 = vmatprep.subr.bf16.mxu0 %v1498
        %2040 = vmatpush1.bf16.msra.mxu0 %v1497
        %2041 = vmatprep.subr.bf16.mxu0 %v1504
        %2042 = vmatpush1.bf16.msra.mxu0 %v1503
        %2043 = vmatprep.subr.bf16.mxu0 %v1510
        %2044 = vmatpush1.bf16.msra.mxu0 %v1509
        %2045 = vmatprep.subr.bf16.mxu0 %v1516
        %2046 = vmatpush1.bf16.msra.mxu0 %v1515
        %2047 = vmatprep.subr.bf16.mxu0 %v1522
        %2048 = vmatpush1.bf16.msra.mxu0 %v1521
        %2049 = vmatprep.subr.bf16.mxu0 %v1528
        %2050 = vmatpush1.bf16.msra.mxu0 %v1527
        %2051 = vmatprep.subr.bf16.mxu0 %v1534
        %2052 = vmatpush1.bf16.msra.mxu0 %v1533
        %2053 = vmatprep.subr.bf16.mxu0 %v1540
        %2054 = vmatpush1.bf16.msra.mxu0 %v1539
        %2055 = vmatprep.subr.bf16.mxu0 %v1546
        %2056 = vmatpush1.bf16.msra.mxu0 %v1545
        %2057 = vmatprep.subr.bf16.mxu0 %v1552
        %2058 = vmatpush1.bf16.msra.mxu0 %v1551
        %2059 = vmatprep.subr.bf16.mxu0 %v1558
        %2060 = vmatpush1.bf16.msra.mxu0 %v1557
        %2061 = vmatprep.subr.bf16.mxu0 %v1564
        %2062 = vmatpush1.bf16.msra.mxu0 %v1563
        %2063 = vmatprep.subr.bf16.mxu0 %v1570
        %2064 = vmatpush1.bf16.msra.mxu0 %v1569
        %2065 = vmatprep.mubr.bf16.mxu0 %v1862
        %2066 = vmatmul.mubr.bf16.gmra.mrb[0].mxu0 %v1861
        %v2067 = vpop.f32.mrb[0].mxu0
        %v2068 = vadd.f32 0.0, %v2067
        %v2069 = vpop.f32.mrb[0].mxu0
        %v2070 = vadd.f32 0.0, %v2069
        %v2071 = vpop.f32.mrb[0].mxu0
        %v2072 = vpop.f32.mrb[0].mxu0
        %2073 = vdwg.mxu0
        %2074 = vmatprep.subr.bf16.mxu0 %v1576
        %2075 = vmatpush1.bf16.msra.mxu0 %v1575
        %2076 = vmatprep.subr.bf16.mxu0 %v1582
        %2077 = vmatpush1.bf16.msra.mxu0 %v1581
        %2078 = vmatprep.subr.bf16.mxu0 %v1588
        %2079 = vmatpush1.bf16.msra.mxu0 %v1587
        %2080 = vmatprep.subr.bf16.mxu0 %v1594
        %2081 = vmatpush1.bf16.msra.mxu0 %v1593
        %2082 = vmatprep.subr.bf16.mxu0 %v1600
        %2083 = vmatpush1.bf16.msra.mxu0 %v1599
        %2084 = vmatprep.subr.bf16.mxu0 %v1606
        %2085 = vmatpush1.bf16.msra.mxu0 %v1605
        %2086 = vmatprep.subr.bf16.mxu0 %v1612
        %2087 = vmatpush1.bf16.msra.mxu0 %v1611
        %2088 = vmatprep.subr.bf16.mxu0 %v1618
        %2089 = vmatpush1.bf16.msra.mxu0 %v1617
        %2090 = vmatprep.subr.bf16.mxu0 %v1624
        %2091 = vmatpush1.bf16.msra.mxu0 %v1623
        %2092 = vmatprep.subr.bf16.mxu0 %v1630
        %2093 = vmatpush1.bf16.msra.mxu0 %v1629
        %2094 = vmatprep.subr.bf16.mxu0 %v1636
        %2095 = vmatpush1.bf16.msra.mxu0 %v1635
        %2096 = vmatprep.subr.bf16.mxu0 %v1642
        %2097 = vmatpush1.bf16.msra.mxu0 %v1641
        %2098 = vmatprep.subr.bf16.mxu0 %v1648
        %2099 = vmatpush1.bf16.msra.mxu0 %v1647
        %2100 = vmatprep.subr.bf16.mxu0 %v1654
        %2101 = vmatpush1.bf16.msra.mxu0 %v1653
        %2102 = vmatprep.subr.bf16.mxu0 %v1660
        %2103 = vmatpush1.bf16.msra.mxu0 %v1659
        %2104 = vmatprep.subr.bf16.mxu0 %v1666
        %2105 = vmatpush1.bf16.msra.mxu0 %v1665
        %2106 = vmatprep.mubr.bf16.mxu0 %v1864
        %2107 = vmatmul.mubr.bf16.gmra.mrb[0].mxu0 %v1863
        %v2108 = vpop.f32.mrb[0].mxu0
        %v2109 = vadd.f32 %v2068, %v2108
        %v2110 = vpop.f32.mrb[0].mxu0
        %v2111 = vadd.f32 %v2070, %v2110
        %v2112 = vpop.f32.mrb[0].mxu0
        %v2113 = vpop.f32.mrb[0].mxu0
        %2114 = vdwg.mxu0
        %2115 = vmatprep.subr.bf16.mxu0 %v1672
        %2116 = vmatpush1.bf16.msra.mxu0 %v1671
        %2117 = vmatprep.subr.bf16.mxu0 %v1678
        %2118 = vmatpush1.bf16.msra.mxu0 %v1677
        %2119 = vmatprep.subr.bf16.mxu0 %v1684
        %2120 = vmatpush1.bf16.msra.mxu0 %v1683
        %2121 = vmatprep.subr.bf16.mxu0 %v1690
        %2122 = vmatpush1.bf16.msra.mxu0 %v1689
        %2123 = vmatprep.subr.bf16.mxu0 %v1696
        %2124 = vmatpush1.bf16.msra.mxu0 %v1695
        %2125 = vmatprep.subr.bf16.mxu0 %v1702
        %2126 = vmatpush1.bf16.msra.mxu0 %v1701
        %2127 = vmatprep.subr.bf16.mxu0 %v1708
        %2128 = vmatpush1.bf16.msra.mxu0 %v1707
        %2129 = vmatprep.subr.bf16.mxu0 %v1714
        %2130 = vmatpush1.bf16.msra.mxu0 %v1713
        %2131 = vmatprep.subr.bf16.mxu0 %v1720
        %2132 = vmatpush1.bf16.msra.mxu0 %v1719
        %2133 = vmatprep.subr.bf16.mxu0 %v1726
        %2134 = vmatpush1.bf16.msra.mxu0 %v1725
        %2135 = vmatprep.subr.bf16.mxu0 %v1732
        %2136 = vmatpush1.bf16.msra.mxu0 %v1731
        %2137 = vmatprep.subr.bf16.mxu0 %v1738
        %2138 = vmatpush1.bf16.msra.mxu0 %v1737
        %2139 = vmatprep.subr.bf16.mxu0 %v1744
        %2140 = vmatpush1.bf16.msra.mxu0 %v1743
        %2141 = vmatprep.subr.bf16.mxu0 %v1750
        %2142 = vmatpush1.bf16.msra.mxu0 %v1749
        %2143 = vmatprep.subr.bf16.mxu0 %v1756
        %2144 = vmatpush1.bf16.msra.mxu0 %v1755
        %2145 = vmatprep.subr.bf16.mxu0 %v1762
        %2146 = vmatpush1.bf16.msra.mxu0 %v1761
        %2147 = vmatprep.mubr.bf16.mxu0 %v1866
        %2148 = vmatmul.mubr.bf16.gmra.mrb[0].mxu0 %v1865
        %v2149 = vpop.f32.mrb[0].mxu0
        %v2150 = vadd.f32 %v2109, %v2149
        %v2151 = vpop.f32.mrb[0].mxu0
        %v2152 = vadd.f32 %v2111, %v2151
        %v2153 = vpop.f32.mrb[0].mxu0
        %v2154 = vpop.f32.mrb[0].mxu0
        %2155 = vdwg.mxu0
        %2156 = vmatprep.subr.bf16.mxu0 %v1768
        %2157 = vmatpush1.bf16.msra.mxu0 %v1767
        %2158 = vmatprep.subr.bf16.mxu0 %v1774
        %2159 = vmatpush1.bf16.msra.mxu0 %v1773
        %2160 = vmatprep.subr.bf16.mxu0 %v1780
        %2161 = vmatpush1.bf16.msra.mxu0 %v1779
        %2162 = vmatprep.subr.bf16.mxu0 %v1786
        %2163 = vmatpush1.bf16.msra.mxu0 %v1785
        %2164 = vmatprep.subr.bf16.mxu0 %v1792
        %2165 = vmatpush1.bf16.msra.mxu0 %v1791
        %2166 = vmatprep.subr.bf16.mxu0 %v1798
        %2167 = vmatpush1.bf16.msra.mxu0 %v1797
        %2168 = vmatprep.subr.bf16.mxu0 %v1804
        %2169 = vmatpush1.bf16.msra.mxu0 %v1803
        %2170 = vmatprep.subr.bf16.mxu0 %v1810
        %2171 = vmatpush1.bf16.msra.mxu0 %v1809
        %2172 = vmatprep.subr.bf16.mxu0 %v1816
        %2173 = vmatpush1.bf16.msra.mxu0 %v1815
        %2174 = vmatprep.subr.bf16.mxu0 %v1822
        %2175 = vmatpush1.bf16.msra.mxu0 %v1821
        %2176 = vmatprep.subr.bf16.mxu0 %v1828
        %2177 = vmatpush1.bf16.msra.mxu0 %v1827
        %2178 = vmatprep.subr.bf16.mxu0 %v1834
        %2179 = vmatpush1.bf16.msra.mxu0 %v1833
        %2180 = vmatprep.subr.bf16.mxu0 %v1840
        %2181 = vmatpush1.bf16.msra.mxu0 %v1839
        %2182 = vmatprep.subr.bf16.mxu0 %v1846
        %2183 = vmatpush1.bf16.msra.mxu0 %v1845
        %2184 = vmatprep.subr.bf16.mxu0 %v1852
        %2185 = vmatpush1.bf16.msra.mxu0 %v1851
        %2186 = vmatprep.subr.bf16.mxu0 %v1858
        %2187 = vmatpush1.bf16.msra.mxu0 %v1857
        %2188 = vmatprep.mubr.bf16.mxu0 %v1868
        %2189 = vmatmul.mubr.bf16.gmra.mrb[0].mxu0 %v1867
        %v2190 = vpop.f32.mrb[0].mxu0
        %v2191 = vadd.f32 %v2150, %v2190
        %v2192 = vpop.f32.mrb[0].mxu0
        %v2193 = vadd.f32 %v2152, %v2192
        %v2194 = vpop.f32.mrb[0].mxu0
        %v2195 = vpop.f32.mrb[0].mxu0
        %2196 = vdwg.mxu0
        %2197 = vmatprep.subr.bf16.mxu0 %v1482
        %2198 = vmatpush1.bf16.msra.mxu0 %v1481
        %2199 = vmatprep.subr.bf16.mxu0 %v1488
        %2200 = vmatpush1.bf16.msra.mxu0 %v1487
        %2201 = vmatprep.subr.bf16.mxu0 %v1494
        %2202 = vmatpush1.bf16.msra.mxu0 %v1493
        %2203 = vmatprep.subr.bf16.mxu0 %v1500
        %2204 = vmatpush1.bf16.msra.mxu0 %v1499
        %2205 = vmatprep.subr.bf16.mxu0 %v1506
        %2206 = vmatpush1.bf16.msra.mxu0 %v1505
        %2207 = vmatprep.subr.bf16.mxu0 %v1512
        %2208 = vmatpush1.bf16.msra.mxu0 %v1511
        %2209 = vmatprep.subr.bf16.mxu0 %v1518
        %2210 = vmatpush1.bf16.msra.mxu0 %v1517
        %2211 = vmatprep.subr.bf16.mxu0 %v1524
        %2212 = vmatpush1.bf16.msra.mxu0 %v1523
        %2213 = vmatprep.subr.bf16.mxu0 %v1530
        %2214 = vmatpush1.bf16.msra.mxu0 %v1529
        %2215 = vmatprep.subr.bf16.mxu0 %v1536
        %2216 = vmatpush1.bf16.msra.mxu0 %v1535
        %2217 = vmatprep.subr.bf16.mxu0 %v1542
        %2218 = vmatpush1.bf16.msra.mxu0 %v1541
        %2219 = vmatprep.subr.bf16.mxu0 %v1548
        %2220 = vmatpush1.bf16.msra.mxu0 %v1547
        %2221 = vmatprep.subr.bf16.mxu0 %v1554
        %2222 = vmatpush1.bf16.msra.mxu0 %v1553
        %2223 = vmatprep.subr.bf16.mxu0 %v1560
        %2224 = vmatpush1.bf16.msra.mxu0 %v1559
        %2225 = vmatprep.subr.bf16.mxu0 %v1566
        %2226 = vmatpush1.bf16.msra.mxu0 %v1565
        %2227 = vmatprep.subr.bf16.mxu0 %v1572
        %2228 = vmatpush1.bf16.msra.mxu0 %v1571
        %2229 = vmatprep.mubr.bf16.mxu0 %v1862
        %2230 = vmatmul.mubr.bf16.gmra.mrb[0].mxu0 %v1861
        %v2231 = vpop.f32.mrb[0].mxu0
        %v2232 = vadd.f32 0.0, %v2231
        %v2233 = vpop.f32.mrb[0].mxu0
        %v2234 = vadd.f32 0.0, %v2233
        %v2235 = vpop.f32.mrb[0].mxu0
        %v2236 = vpop.f32.mrb[0].mxu0
        %2237 = vdwg.mxu0
        %2238 = vmatprep.subr.bf16.mxu0 %v1578
        %2239 = vmatpush1.bf16.msra.mxu0 %v1577
        %2240 = vmatprep.subr.bf16.mxu0 %v1584
        %2241 = vmatpush1.bf16.msra.mxu0 %v1583
        %2242 = vmatprep.subr.bf16.mxu0 %v1590
        %2243 = vmatpush1.bf16.msra.mxu0 %v1589
        %2244 = vmatprep.subr.bf16.mxu0 %v1596
        %2245 = vmatpush1.bf16.msra.mxu0 %v1595
        %2246 = vmatprep.subr.bf16.mxu0 %v1602
        %2247 = vmatpush1.bf16.msra.mxu0 %v1601
        %2248 = vmatprep.subr.bf16.mxu0 %v1608
        %2249 = vmatpush1.bf16.msra.mxu0 %v1607
        %2250 = vmatprep.subr.bf16.mxu0 %v1614
        %2251 = vmatpush1.bf16.msra.mxu0 %v1613
        %2252 = vmatprep.subr.bf16.mxu0 %v1620
        %2253 = vmatpush1.bf16.msra.mxu0 %v1619
        %2254 = vmatprep.subr.bf16.mxu0 %v1626
        %2255 = vmatpush1.bf16.msra.mxu0 %v1625
        %2256 = vmatprep.subr.bf16.mxu0 %v1632
        %2257 = vmatpush1.bf16.msra.mxu0 %v1631
        %2258 = vmatprep.subr.bf16.mxu0 %v1638
        %2259 = vmatpush1.bf16.msra.mxu0 %v1637
        %2260 = vmatprep.subr.bf16.mxu0 %v1644
        %2261 = vmatpush1.bf16.msra.mxu0 %v1643
        %2262 = vmatprep.subr.bf16.mxu0 %v1650
        %2263 = vmatpush1.bf16.msra.mxu0 %v1649
        %2264 = vmatprep.subr.bf16.mxu0 %v1656
        %2265 = vmatpush1.bf16.msra.mxu0 %v1655
        %2266 = vmatprep.subr.bf16.mxu0 %v1662
        %2267 = vmatpush1.bf16.msra.mxu0 %v1661
        %2268 = vmatprep.subr.bf16.mxu0 %v1668
        %2269 = vmatpush1.bf16.msra.mxu0 %v1667
        %2270 = vmatprep.mubr.bf16.mxu0 %v1864
        %2271 = vmatmul.mubr.bf16.gmra.mrb[0].mxu0 %v1863
        %v2272 = vpop.f32.mrb[0].mxu0
        %v2273 = vadd.f32 %v2232, %v2272
        %v2274 = vpop.f32.mrb[0].mxu0
        %v2275 = vadd.f32 %v2234, %v2274
        %v2276 = vpop.f32.mrb[0].mxu0
        %v2277 = vpop.f32.mrb[0].mxu0
        %2278 = vdwg.mxu0
        %2279 = vmatprep.subr.bf16.mxu0 %v1674
        %2280 = vmatpush1.bf16.msra.mxu0 %v1673
        %2281 = vmatprep.subr.bf16.mxu0 %v1680
        %2282 = vmatpush1.bf16.msra.mxu0 %v1679
        %2283 = vmatprep.subr.bf16.mxu0 %v1686
        %2284 = vmatpush1.bf16.msra.mxu0 %v1685
        %2285 = vmatprep.subr.bf16.mxu0 %v1692
        %2286 = vmatpush1.bf16.msra.mxu0 %v1691
        %2287 = vmatprep.subr.bf16.mxu0 %v1698
        %2288 = vmatpush1.bf16.msra.mxu0 %v1697
        %2289 = vmatprep.subr.bf16.mxu0 %v1704
        %2290 = vmatpush1.bf16.msra.mxu0 %v1703
        %2291 = vmatprep.subr.bf16.mxu0 %v1710
        %2292 = vmatpush1.bf16.msra.mxu0 %v1709
        %2293 = vmatprep.subr.bf16.mxu0 %v1716
        %2294 = vmatpush1.bf16.msra.mxu0 %v1715
        %2295 = vmatprep.subr.bf16.mxu0 %v1722
        %2296 = vmatpush1.bf16.msra.mxu0 %v1721
        %2297 = vmatprep.subr.bf16.mxu0 %v1728
        %2298 = vmatpush1.bf16.msra.mxu0 %v1727
        %2299 = vmatprep.subr.bf16.mxu0 %v1734
        %2300 = vmatpush1.bf16.msra.mxu0 %v1733
        %2301 = vmatprep.subr.bf16.mxu0 %v1740
        %2302 = vmatpush1.bf16.msra.mxu0 %v1739
        %2303 = vmatprep.subr.bf16.mxu0 %v1746
        %2304 = vmatpush1.bf16.msra.mxu0 %v1745
        %2305 = vmatprep.subr.bf16.mxu0 %v1752
        %2306 = vmatpush1.bf16.msra.mxu0 %v1751
        %2307 = vmatprep.subr.bf16.mxu0 %v1758
        %2308 = vmatpush1.bf16.msra.mxu0 %v1757
        %2309 = vmatprep.subr.bf16.mxu0 %v1764
        %2310 = vmatpush1.bf16.msra.mxu0 %v1763
        %2311 = vmatprep.mubr.bf16.mxu0 %v1866
        %2312 = vmatmul.mubr.bf16.gmra.mrb[0].mxu0 %v1865
        %v2313 = vpop.f32.mrb[0].mxu0
        %v2314 = vadd.f32 %v2273, %v2313
        %v2315 = vpop.f32.mrb[0].mxu0
        %v2316 = vadd.f32 %v2275, %v2315
        %v2317 = vpop.f32.mrb[0].mxu0
        %v2318 = vpop.f32.mrb[0].mxu0
        %2319 = vdwg.mxu0
        %2320 = vmatprep.subr.bf16.mxu0 %v1770
        %2321 = vmatpush1.bf16.msra.mxu0 %v1769
        %2322 = vmatprep.subr.bf16.mxu0 %v1776
        %2323 = vmatpush1.bf16.msra.mxu0 %v1775
        %2324 = vmatprep.subr.bf16.mxu0 %v1782
        %2325 = vmatpush1.bf16.msra.mxu0 %v1781
        %2326 = vmatprep.subr.bf16.mxu0 %v1788
        %2327 = vmatpush1.bf16.msra.mxu0 %v1787
        %2328 = vmatprep.subr.bf16.mxu0 %v1794
        %2329 = vmatpush1.bf16.msra.mxu0 %v1793
        %2330 = vmatprep.subr.bf16.mxu0 %v1800
        %2331 = vmatpush1.bf16.msra.mxu0 %v1799
        %2332 = vmatprep.subr.bf16.mxu0 %v1806
        %2333 = vmatpush1.bf16.msra.mxu0 %v1805
        %2334 = vmatprep.subr.bf16.mxu0 %v1812
        %2335 = vmatpush1.bf16.msra.mxu0 %v1811
        %2336 = vmatprep.subr.bf16.mxu0 %v1818
        %2337 = vmatpush1.bf16.msra.mxu0 %v1817
        %2338 = vmatprep.subr.bf16.mxu0 %v1824
        %2339 = vmatpush1.bf16.msra.mxu0 %v1823
        %2340 = vmatprep.subr.bf16.mxu0 %v1830
        %2341 = vmatpush1.bf16.msra.mxu0 %v1829
        %2342 = vmatprep.subr.bf16.mxu0 %v1836
        %2343 = vmatpush1.bf16.msra.mxu0 %v1835
        %2344 = vmatprep.subr.bf16.mxu0 %v1842
        %2345 = vmatpush1.bf16.msra.mxu0 %v1841
        %2346 = vmatprep.subr.bf16.mxu0 %v1848
        %2347 = vmatpush1.bf16.msra.mxu0 %v1847
        %2348 = vmatprep.subr.bf16.mxu0 %v1854
        %2349 = vmatpush1.bf16.msra.mxu0 %v1853
        %2350 = vmatprep.subr.bf16.mxu0 %v1860
        %2351 = vmatpush1.bf16.msra.mxu0 %v1859
        %2352 = vmatprep.mubr.bf16.mxu0 %v1868
        %2353 = vmatmul.mubr.bf16.gmra.mrb[0].mxu0 %v1867
        %v2354 = vpop.f32.mrb[0].mxu0
        %v2355 = vadd.f32 %v2314, %v2354
        %v2356 = vpop.f32.mrb[0].mxu0
        %v2357 = vadd.f32 %v2316, %v2356
        %v2358 = vpop.f32.mrb[0].mxu0
        %v2359 = vpop.f32.mrb[0].mxu0
        %2360 = vdwg.mxu0
        %v2361 = vld [vmem:[%s440] sm:$0x3f]
        %v2363 = vlaneseq
        %v2364 = vshrl.u32 %v2363, 7
        %v2365 = vsub.s32 0, %v2364
        %v2366 = vrot.slane %v2361, %v2365
        %v2367 = vlaneseq
        %v2368 = vshrl.u32 %v2367, 7
        %v2369 = vsub.s32 1, %v2368
        %v2370 = vrot.slane %v2361, %v2369
        %v2371 = vlaneseq
        %v2372 = vshrl.u32 %v2371, 7
        %v2373 = vsub.s32 2, %v2372
        %v2374 = vrot.slane %v2361, %v2373
        %v2375 = vlaneseq
        %v2376 = vshrl.u32 %v2375, 7
        %v2377 = vsub.s32 3, %v2376
        %v2378 = vrot.slane %v2361, %v2377
        %v2379 = vlaneseq
        %v2380 = vshrl.u32 %v2379, 7
        %v2381 = vsub.s32 4, %v2380
        %v2382 = vrot.slane %v2361, %v2381
        %v2383 = vlaneseq
        %v2384 = vshrl.u32 %v2383, 7
        %v2385 = vsub.s32 5, %v2384
        %v2386 = vrot.slane %v2361, %v2385
        %v2393 = vmul.f32 %v2027, %v2366
        %v2394 = vmul.f32 %v2029, %v2370
        %v2395 = vmul.f32 %v2191, %v2374
        %v2396 = vmul.f32 %v2193, %v2378
        %v2397 = vmul.f32 %v2355, %v2382
        %v2398 = vmul.f32 %v2357, %v2386
        %v2399 = vld [vmem:[%s449] sm:$0x3f]
        %v2401 = vlaneseq
        %v2402 = vshrl.u32 %v2401, 7
        %v2403 = vsub.s32 0, %v2402
        %v2404 = vrot.slane %v2399, %v2403
        %v2405 = vlaneseq
        %v2406 = vshrl.u32 %v2405, 7
        %v2407 = vsub.s32 1, %v2406
        %v2408 = vrot.slane %v2399, %v2407
        %v2409 = vlaneseq
        %v2410 = vshrl.u32 %v2409, 7
        %v2411 = vsub.s32 2, %v2410
        %v2412 = vrot.slane %v2399, %v2411
        %v2413 = vlaneseq
        %v2414 = vshrl.u32 %v2413, 7
        %v2415 = vsub.s32 3, %v2414
        %v2416 = vrot.slane %v2399, %v2415
        %v2417 = vlaneseq
        %v2418 = vshrl.u32 %v2417, 7
        %v2419 = vsub.s32 4, %v2418
        %v2420 = vrot.slane %v2399, %v2419
        %v2421 = vlaneseq
        %v2422 = vshrl.u32 %v2421, 7
        %v2423 = vsub.s32 5, %v2422
        %v2424 = vrot.slane %v2399, %v2423
        %v2431 = vadd.f32 %v2393, %v2404
        %v2432 = vadd.f32 %v2394, %v2408
        %v2433 = vadd.f32 %v2395, %v2412
        %v2434 = vadd.f32 %v2396, %v2416
        %v2435 = vadd.f32 %v2397, %v2420
        %v2436 = vadd.f32 %v2398, %v2424
        %vm2437 = vcmp.gt.f32.partialorder %v2431, 0.0
        %vm2438 = vcmp.gt.f32.partialorder %v2432, 0.0
        %vm2439 = vcmp.gt.f32.partialorder %v2433, 0.0
        %vm2440 = vcmp.gt.f32.partialorder %v2434, 0.0
        %vm2441 = vcmp.gt.f32.partialorder %v2435, 0.0
        %vm2442 = vcmp.gt.f32.partialorder %v2436, 0.0
        %v2443 = vmul.f32 %v2431, 0.01
        %v2444 = vmul.f32 %v2432, 0.01
        %v2445 = vmul.f32 %v2433, 0.01
        %v2446 = vmul.f32 %v2434, 0.01
        %v2447 = vmul.f32 %v2435, 0.01
        %v2448 = vmul.f32 %v2436, 0.01
        %v2449 = vsel %vm2437, %v2431, %v2443
        %v2450 = vsel %vm2438, %v2432, %v2444
        %v2451 = vsel %vm2439, %v2433, %v2445
        %v2452 = vsel %vm2440, %v2434, %v2446
        %v2453 = vsel %vm2441, %v2435, %v2447
        %v2454 = vsel %vm2442, %v2436, %v2448
        %v2455 = vld [vmem:[%s458] sm:$0xff]
        %v2456 = vld [vmem:[%s458 + $0x8] sm:$0xff]
        %v2457 = vld [vmem:[%s458 + $0x10] sm:$0xff]
        %v2458 = vld [vmem:[%s458 + $0x18] sm:$0xff]
        %v2459 = vld [vmem:[%s458 + $0x20] sm:$0xff]
        %v2460 = vld [vmem:[%s458 + $0x28] sm:$0xff]
        %v2461 = vld [vmem:[%s458 + $0x30] sm:$0xff]
        %v2462 = vld [vmem:[%s458 + $0x38] sm:$0xff]
        %v2463 = vld [vmem:[%s458 + $0x40] sm:$0xff]
        %v2464 = vld [vmem:[%s458 + $0x48] sm:$0xff]
        %v2465 = vld [vmem:[%s458 + $0x50] sm:$0xff]
        %v2466 = vld [vmem:[%s458 + $0x58] sm:$0xff]
        %v2467 = vld [vmem:[%s458 + $0x60] sm:$0xff]
        %v2468 = vld [vmem:[%s458 + $0x68] sm:$0xff]
        %v2469 = vld [vmem:[%s458 + $0x70] sm:$0xff]
        %v2470 = vld [vmem:[%s458 + $0x78] sm:$0xff]
        %v2471 = vld [vmem:[%s458 + $0x80] sm:$0xff]
        %v2472 = vld [vmem:[%s458 + $0x88] sm:$0xff]
        %v2473 = vld [vmem:[%s458 + $0x90] sm:$0xff]
        %v2474 = vld [vmem:[%s458 + $0x98] sm:$0xff]
        %v2475 = vld [vmem:[%s458 + $0xa0] sm:$0xff]
        %v2476 = vld [vmem:[%s458 + $0xa8] sm:$0xff]
        %v2477 = vld [vmem:[%s458 + $0xb0] sm:$0xff]
        %v2478 = vld [vmem:[%s458 + $0xb8] sm:$0xff]
        %v2479 = vld [vmem:[%s458 + $0xc0] sm:$0xff]
        %v2480 = vld [vmem:[%s458 + $0xc8] sm:$0xff]
        %v2481 = vld [vmem:[%s458 + $0xd0] sm:$0xff]
        %v2482 = vld [vmem:[%s458 + $0xd8] sm:$0xff]
        %v2483 = vld [vmem:[%s458 + $0xe0] sm:$0xff]
        %v2484 = vld [vmem:[%s458 + $0xe8] sm:$0xff]
        %v2485 = vld [vmem:[%s458 + $0xf0] sm:$0xff]
        %v2486 = vld [vmem:[%s458 + $0xf8] sm:$0xff]
        %v2487 = vld [vmem:[%s458 + $0x100] sm:$0xff]
        %v2488 = vld [vmem:[%s458 + $0x108] sm:$0xff]
        %v2489 = vld [vmem:[%s458 + $0x110] sm:$0xff]
        %v2490 = vld [vmem:[%s458 + $0x118] sm:$0xff]
        %v2491 = vld [vmem:[%s458 + $0x120] sm:$0xff]
        %v2492 = vld [vmem:[%s458 + $0x128] sm:$0xff]
        %v2493 = vld [vmem:[%s458 + $0x130] sm:$0xff]
        %v2494 = vld [vmem:[%s458 + $0x138] sm:$0xff]
        %v2495 = vld [vmem:[%s458 + $0x140] sm:$0xff]
        %v2496 = vld [vmem:[%s458 + $0x148] sm:$0xff]
        %v2497 = vld [vmem:[%s458 + $0x150] sm:$0xff]
        %v2498 = vld [vmem:[%s458 + $0x158] sm:$0xff]
        %v2499 = vld [vmem:[%s458 + $0x160] sm:$0xff]
        %v2500 = vld [vmem:[%s458 + $0x168] sm:$0xff]
        %v2501 = vld [vmem:[%s458 + $0x170] sm:$0xff]
        %v2502 = vld [vmem:[%s458 + $0x178] sm:$0xff]
        %v2503 = vld [vmem:[%s458 + $0x180] sm:$0xff]
        %v2504 = vld [vmem:[%s458 + $0x188] sm:$0xff]
        %v2505 = vld [vmem:[%s458 + $0x190] sm:$0xff]
        %v2506 = vld [vmem:[%s458 + $0x198] sm:$0xff]
        %v2507 = vld [vmem:[%s458 + $0x1a0] sm:$0xff]
        %v2508 = vld [vmem:[%s458 + $0x1a8] sm:$0xff]
        %v2509 = vld [vmem:[%s458 + $0x1b0] sm:$0xff]
        %v2510 = vld [vmem:[%s458 + $0x1b8] sm:$0xff]
        %v2511 = vld [vmem:[%s458 + $0x1c0] sm:$0xff]
        %v2512 = vld [vmem:[%s458 + $0x1c8] sm:$0xff]
        %v2513 = vld [vmem:[%s458 + $0x1d0] sm:$0xff]
        %v2514 = vld [vmem:[%s458 + $0x1d8] sm:$0xff]
        %v2515 = vld [vmem:[%s458 + $0x1e0] sm:$0xff]
        %v2516 = vld [vmem:[%s458 + $0x1e8] sm:$0xff]
        %v2517 = vld [vmem:[%s458 + $0x1f0] sm:$0xff]
        %v2518 = vld [vmem:[%s458 + $0x1f8] sm:$0xff]
        %v2519 = vld [vmem:[%s458 + $0x200] sm:$0xff]
        %v2520 = vld [vmem:[%s458 + $0x208] sm:$0xff]
        %v2521 = vld [vmem:[%s458 + $0x210] sm:$0xff]
        %v2522 = vld [vmem:[%s458 + $0x218] sm:$0xff]
        %v2523 = vld [vmem:[%s458 + $0x220] sm:$0xff]
        %v2524 = vld [vmem:[%s458 + $0x228] sm:$0xff]
        %v2525 = vld [vmem:[%s458 + $0x230] sm:$0xff]
        %v2526 = vld [vmem:[%s458 + $0x238] sm:$0xff]
        %v2527 = vld [vmem:[%s458 + $0x240] sm:$0xff]
        %v2528 = vld [vmem:[%s458 + $0x248] sm:$0xff]
        %v2529 = vld [vmem:[%s458 + $0x250] sm:$0xff]
        %v2530 = vld [vmem:[%s458 + $0x258] sm:$0xff]
        %v2531 = vld [vmem:[%s458 + $0x260] sm:$0xff]
        %v2532 = vld [vmem:[%s458 + $0x268] sm:$0xff]
        %v2533 = vld [vmem:[%s458 + $0x270] sm:$0xff]
        %v2534 = vld [vmem:[%s458 + $0x278] sm:$0xff]
        %v2535 = vld [vmem:[%s458 + $0x280] sm:$0xff]
        %v2536 = vld [vmem:[%s458 + $0x288] sm:$0xff]
        %v2537 = vld [vmem:[%s458 + $0x290] sm:$0xff]
        %v2538 = vld [vmem:[%s458 + $0x298] sm:$0xff]
        %v2539 = vld [vmem:[%s458 + $0x2a0] sm:$0xff]
        %v2540 = vld [vmem:[%s458 + $0x2a8] sm:$0xff]
        %v2541 = vld [vmem:[%s458 + $0x2b0] sm:$0xff]
        %v2542 = vld [vmem:[%s458 + $0x2b8] sm:$0xff]
        %v2543 = vld [vmem:[%s458 + $0x2c0] sm:$0xff]
        %v2544 = vld [vmem:[%s458 + $0x2c8] sm:$0xff]
        %v2545 = vld [vmem:[%s458 + $0x2d0] sm:$0xff]
        %v2546 = vld [vmem:[%s458 + $0x2d8] sm:$0xff]
        %v2547 = vld [vmem:[%s458 + $0x2e0] sm:$0xff]
        %v2548 = vld [vmem:[%s458 + $0x2e8] sm:$0xff]
        %v2549 = vld [vmem:[%s458 + $0x2f0] sm:$0xff]
        %v2550 = vld [vmem:[%s458 + $0x2f8] sm:$0xff]
        %v2551 = vld [vmem:[%s458 + $0x300] sm:$0xff]
        %v2552 = vld [vmem:[%s458 + $0x308] sm:$0xff]
        %v2553 = vld [vmem:[%s458 + $0x310] sm:$0xff]
        %v2554 = vld [vmem:[%s458 + $0x318] sm:$0xff]
        %v2555 = vld [vmem:[%s458 + $0x320] sm:$0xff]
        %v2556 = vld [vmem:[%s458 + $0x328] sm:$0xff]
        %v2557 = vld [vmem:[%s458 + $0x330] sm:$0xff]
        %v2558 = vld [vmem:[%s458 + $0x338] sm:$0xff]
        %v2559 = vld [vmem:[%s458 + $0x340] sm:$0xff]
        %v2560 = vld [vmem:[%s458 + $0x348] sm:$0xff]
        %v2561 = vld [vmem:[%s458 + $0x350] sm:$0xff]
        %v2562 = vld [vmem:[%s458 + $0x358] sm:$0xff]
        %v2563 = vld [vmem:[%s458 + $0x360] sm:$0xff]
        %v2564 = vld [vmem:[%s458 + $0x368] sm:$0xff]
        %v2565 = vld [vmem:[%s458 + $0x370] sm:$0xff]
        %v2566 = vld [vmem:[%s458 + $0x378] sm:$0xff]
        %v2567 = vld [vmem:[%s458 + $0x380] sm:$0xff]
        %v2568 = vld [vmem:[%s458 + $0x388] sm:$0xff]
        %v2569 = vld [vmem:[%s458 + $0x390] sm:$0xff]
        %v2570 = vld [vmem:[%s458 + $0x398] sm:$0xff]
        %v2571 = vld [vmem:[%s458 + $0x3a0] sm:$0xff]
        %v2572 = vld [vmem:[%s458 + $0x3a8] sm:$0xff]
        %v2573 = vld [vmem:[%s458 + $0x3b0] sm:$0xff]
        %v2574 = vld [vmem:[%s458 + $0x3b8] sm:$0xff]
        %v2575 = vld [vmem:[%s458 + $0x3c0] sm:$0xff]
        %v2576 = vld [vmem:[%s458 + $0x3c8] sm:$0xff]
        %v2577 = vld [vmem:[%s458 + $0x3d0] sm:$0xff]
        %v2578 = vld [vmem:[%s458 + $0x3d8] sm:$0xff]
        %v2579 = vld [vmem:[%s458 + $0x3e0] sm:$0xff]
        %v2580 = vld [vmem:[%s458 + $0x3e8] sm:$0xff]
        %v2581 = vld [vmem:[%s458 + $0x3f0] sm:$0xff]
        %v2582 = vld [vmem:[%s458 + $0x3f8] sm:$0xff]
        %v2583 = vld [vmem:[%s458 + $0x400] sm:$0xff]
        %v2584 = vld [vmem:[%s458 + $0x408] sm:$0xff]
        %v2585 = vld [vmem:[%s458 + $0x410] sm:$0xff]
        %v2586 = vld [vmem:[%s458 + $0x418] sm:$0xff]
        %v2587 = vld [vmem:[%s458 + $0x420] sm:$0xff]
        %v2588 = vld [vmem:[%s458 + $0x428] sm:$0xff]
        %v2589 = vld [vmem:[%s458 + $0x430] sm:$0xff]
        %v2590 = vld [vmem:[%s458 + $0x438] sm:$0xff]
        %v2591 = vld [vmem:[%s458 + $0x440] sm:$0xff]
        %v2592 = vld [vmem:[%s458 + $0x448] sm:$0xff]
        %v2593 = vld [vmem:[%s458 + $0x450] sm:$0xff]
        %v2594 = vld [vmem:[%s458 + $0x458] sm:$0xff]
        %v2595 = vld [vmem:[%s458 + $0x460] sm:$0xff]
        %v2596 = vld [vmem:[%s458 + $0x468] sm:$0xff]
        %v2597 = vld [vmem:[%s458 + $0x470] sm:$0xff]
        %v2598 = vld [vmem:[%s458 + $0x478] sm:$0xff]
        %v2599 = vld [vmem:[%s458 + $0x480] sm:$0xff]
        %v2600 = vld [vmem:[%s458 + $0x488] sm:$0xff]
        %v2601 = vld [vmem:[%s458 + $0x490] sm:$0xff]
        %v2602 = vld [vmem:[%s458 + $0x498] sm:$0xff]
        %v2603 = vld [vmem:[%s458 + $0x4a0] sm:$0xff]
        %v2604 = vld [vmem:[%s458 + $0x4a8] sm:$0xff]
        %v2605 = vld [vmem:[%s458 + $0x4b0] sm:$0xff]
        %v2606 = vld [vmem:[%s458 + $0x4b8] sm:$0xff]
        %v2607 = vld [vmem:[%s458 + $0x4c0] sm:$0xff]
        %v2608 = vld [vmem:[%s458 + $0x4c8] sm:$0xff]
        %v2609 = vld [vmem:[%s458 + $0x4d0] sm:$0xff]
        %v2610 = vld [vmem:[%s458 + $0x4d8] sm:$0xff]
        %v2611 = vld [vmem:[%s458 + $0x4e0] sm:$0xff]
        %v2612 = vld [vmem:[%s458 + $0x4e8] sm:$0xff]
        %v2613 = vld [vmem:[%s458 + $0x4f0] sm:$0xff]
        %v2614 = vld [vmem:[%s458 + $0x4f8] sm:$0xff]
        %v2615 = vld [vmem:[%s458 + $0x500] sm:$0xff]
        %v2616 = vld [vmem:[%s458 + $0x508] sm:$0xff]
        %v2617 = vld [vmem:[%s458 + $0x510] sm:$0xff]
        %v2618 = vld [vmem:[%s458 + $0x518] sm:$0xff]
        %v2619 = vld [vmem:[%s458 + $0x520] sm:$0xff]
        %v2620 = vld [vmem:[%s458 + $0x528] sm:$0xff]
        %v2621 = vld [vmem:[%s458 + $0x530] sm:$0xff]
        %v2622 = vld [vmem:[%s458 + $0x538] sm:$0xff]
        %v2623 = vld [vmem:[%s458 + $0x540] sm:$0xff]
        %v2624 = vld [vmem:[%s458 + $0x548] sm:$0xff]
        %v2625 = vld [vmem:[%s458 + $0x550] sm:$0xff]
        %v2626 = vld [vmem:[%s458 + $0x558] sm:$0xff]
        %v2627 = vld [vmem:[%s458 + $0x560] sm:$0xff]
        %v2628 = vld [vmem:[%s458 + $0x568] sm:$0xff]
        %v2629 = vld [vmem:[%s458 + $0x570] sm:$0xff]
        %v2630 = vld [vmem:[%s458 + $0x578] sm:$0xff]
        %v2631 = vld [vmem:[%s458 + $0x580] sm:$0xff]
        %v2632 = vld [vmem:[%s458 + $0x588] sm:$0xff]
        %v2633 = vld [vmem:[%s458 + $0x590] sm:$0xff]
        %v2634 = vld [vmem:[%s458 + $0x598] sm:$0xff]
        %v2635 = vld [vmem:[%s458 + $0x5a0] sm:$0xff]
        %v2636 = vld [vmem:[%s458 + $0x5a8] sm:$0xff]
        %v2637 = vld [vmem:[%s458 + $0x5b0] sm:$0xff]
        %v2638 = vld [vmem:[%s458 + $0x5b8] sm:$0xff]
        %v2639 = vld [vmem:[%s458 + $0x5c0] sm:$0xff]
        %v2640 = vld [vmem:[%s458 + $0x5c8] sm:$0xff]
        %v2641 = vld [vmem:[%s458 + $0x5d0] sm:$0xff]
        %v2642 = vld [vmem:[%s458 + $0x5d8] sm:$0xff]
        %v2643 = vld [vmem:[%s458 + $0x5e0] sm:$0xff]
        %v2644 = vld [vmem:[%s458 + $0x5e8] sm:$0xff]
        %v2645 = vld [vmem:[%s458 + $0x5f0] sm:$0xff]
        %v2646 = vld [vmem:[%s458 + $0x5f8] sm:$0xff]
        %v2647 = vld [vmem:[%s458 + $0x600] sm:$0xff]
        %v2648 = vld [vmem:[%s458 + $0x608] sm:$0xff]
        %v2649 = vld [vmem:[%s458 + $0x610] sm:$0xff]
        %v2650 = vld [vmem:[%s458 + $0x618] sm:$0xff]
        %v2651 = vld [vmem:[%s458 + $0x620] sm:$0xff]
        %v2652 = vld [vmem:[%s458 + $0x628] sm:$0xff]
        %v2653 = vld [vmem:[%s458 + $0x630] sm:$0xff]
        %v2654 = vld [vmem:[%s458 + $0x638] sm:$0xff]
        %v2655 = vld [vmem:[%s458 + $0x640] sm:$0xff]
        %v2656 = vld [vmem:[%s458 + $0x648] sm:$0xff]
        %v2657 = vld [vmem:[%s458 + $0x650] sm:$0xff]
        %v2658 = vld [vmem:[%s458 + $0x658] sm:$0xff]
        %v2659 = vld [vmem:[%s458 + $0x660] sm:$0xff]
        %v2660 = vld [vmem:[%s458 + $0x668] sm:$0xff]
        %v2661 = vld [vmem:[%s458 + $0x670] sm:$0xff]
        %v2662 = vld [vmem:[%s458 + $0x678] sm:$0xff]
        %v2663 = vld [vmem:[%s458 + $0x680] sm:$0xff]
        %v2664 = vld [vmem:[%s458 + $0x688] sm:$0xff]
        %v2665 = vld [vmem:[%s458 + $0x690] sm:$0xff]
        %v2666 = vld [vmem:[%s458 + $0x698] sm:$0xff]
        %v2667 = vld [vmem:[%s458 + $0x6a0] sm:$0xff]
        %v2668 = vld [vmem:[%s458 + $0x6a8] sm:$0xff]
        %v2669 = vld [vmem:[%s458 + $0x6b0] sm:$0xff]
        %v2670 = vld [vmem:[%s458 + $0x6b8] sm:$0xff]
        %v2671 = vld [vmem:[%s458 + $0x6c0] sm:$0xff]
        %v2672 = vld [vmem:[%s458 + $0x6c8] sm:$0xff]
        %v2673 = vld [vmem:[%s458 + $0x6d0] sm:$0xff]
        %v2674 = vld [vmem:[%s458 + $0x6d8] sm:$0xff]
        %v2675 = vld [vmem:[%s458 + $0x6e0] sm:$0xff]
        %v2676 = vld [vmem:[%s458 + $0x6e8] sm:$0xff]
        %v2677 = vld [vmem:[%s458 + $0x6f0] sm:$0xff]
        %v2678 = vld [vmem:[%s458 + $0x6f8] sm:$0xff]
        %v2679 = vld [vmem:[%s458 + $0x700] sm:$0xff]
        %v2680 = vld [vmem:[%s458 + $0x708] sm:$0xff]
        %v2681 = vld [vmem:[%s458 + $0x710] sm:$0xff]
        %v2682 = vld [vmem:[%s458 + $0x718] sm:$0xff]
        %v2683 = vld [vmem:[%s458 + $0x720] sm:$0xff]
        %v2684 = vld [vmem:[%s458 + $0x728] sm:$0xff]
        %v2685 = vld [vmem:[%s458 + $0x730] sm:$0xff]
        %v2686 = vld [vmem:[%s458 + $0x738] sm:$0xff]
        %v2687 = vld [vmem:[%s458 + $0x740] sm:$0xff]
        %v2688 = vld [vmem:[%s458 + $0x748] sm:$0xff]
        %v2689 = vld [vmem:[%s458 + $0x750] sm:$0xff]
        %v2690 = vld [vmem:[%s458 + $0x758] sm:$0xff]
        %v2691 = vld [vmem:[%s458 + $0x760] sm:$0xff]
        %v2692 = vld [vmem:[%s458 + $0x768] sm:$0xff]
        %v2693 = vld [vmem:[%s458 + $0x770] sm:$0xff]
        %v2694 = vld [vmem:[%s458 + $0x778] sm:$0xff]
        %v2695 = vld [vmem:[%s458 + $0x780] sm:$0xff]
        %v2696 = vld [vmem:[%s458 + $0x788] sm:$0xff]
        %v2697 = vld [vmem:[%s458 + $0x790] sm:$0xff]
        %v2698 = vld [vmem:[%s458 + $0x798] sm:$0xff]
        %v2699 = vld [vmem:[%s458 + $0x7a0] sm:$0xff]
        %v2700 = vld [vmem:[%s458 + $0x7a8] sm:$0xff]
        %v2701 = vld [vmem:[%s458 + $0x7b0] sm:$0xff]
        %v2702 = vld [vmem:[%s458 + $0x7b8] sm:$0xff]
        %v2703 = vld [vmem:[%s458 + $0x7c0] sm:$0xff]
        %v2704 = vld [vmem:[%s458 + $0x7c8] sm:$0xff]
        %v2705 = vld [vmem:[%s458 + $0x7d0] sm:$0xff]
        %v2706 = vld [vmem:[%s458 + $0x7d8] sm:$0xff]
        %v2707 = vld [vmem:[%s458 + $0x7e0] sm:$0xff]
        %v2708 = vld [vmem:[%s458 + $0x7e8] sm:$0xff]
        %v2709 = vld [vmem:[%s458 + $0x7f0] sm:$0xff]
        %v2710 = vld [vmem:[%s458 + $0x7f8] sm:$0xff]
        %v2711 = vld [vmem:[%s458 + $0x800] sm:$0xff]
        %v2712 = vld [vmem:[%s458 + $0x808] sm:$0xff]
        %v2713 = vld [vmem:[%s458 + $0x810] sm:$0xff]
        %v2714 = vld [vmem:[%s458 + $0x818] sm:$0xff]
        %v2715 = vld [vmem:[%s458 + $0x820] sm:$0xff]
        %v2716 = vld [vmem:[%s458 + $0x828] sm:$0xff]
        %v2717 = vld [vmem:[%s458 + $0x830] sm:$0xff]
        %v2718 = vld [vmem:[%s458 + $0x838] sm:$0xff]
        %v2719 = vld [vmem:[%s458 + $0x840] sm:$0xff]
        %v2720 = vld [vmem:[%s458 + $0x848] sm:$0xff]
        %v2721 = vld [vmem:[%s458 + $0x850] sm:$0xff]
        %v2722 = vld [vmem:[%s458 + $0x858] sm:$0xff]
        %v2723 = vld [vmem:[%s458 + $0x860] sm:$0xff]
        %v2724 = vld [vmem:[%s458 + $0x868] sm:$0xff]
        %v2725 = vld [vmem:[%s458 + $0x870] sm:$0xff]
        %v2726 = vld [vmem:[%s458 + $0x878] sm:$0xff]
        %v2727 = vld [vmem:[%s458 + $0x880] sm:$0xff]
        %v2728 = vld [vmem:[%s458 + $0x888] sm:$0xff]
        %v2729 = vld [vmem:[%s458 + $0x890] sm:$0xff]
        %v2730 = vld [vmem:[%s458 + $0x898] sm:$0xff]
        %v2731 = vld [vmem:[%s458 + $0x8a0] sm:$0xff]
        %v2732 = vld [vmem:[%s458 + $0x8a8] sm:$0xff]
        %v2733 = vld [vmem:[%s458 + $0x8b0] sm:$0xff]
        %v2734 = vld [vmem:[%s458 + $0x8b8] sm:$0xff]
        %v2735 = vld [vmem:[%s458 + $0x8c0] sm:$0xff]
        %v2736 = vld [vmem:[%s458 + $0x8c8] sm:$0xff]
        %v2737 = vld [vmem:[%s458 + $0x8d0] sm:$0xff]
        %v2738 = vld [vmem:[%s458 + $0x8d8] sm:$0xff]
        %v2739 = vld [vmem:[%s458 + $0x8e0] sm:$0xff]
        %v2740 = vld [vmem:[%s458 + $0x8e8] sm:$0xff]
        %v2741 = vld [vmem:[%s458 + $0x8f0] sm:$0xff]
        %v2742 = vld [vmem:[%s458 + $0x8f8] sm:$0xff]
        %v2743 = vld [vmem:[%s458 + $0x900] sm:$0xff]
        %v2744 = vld [vmem:[%s458 + $0x908] sm:$0xff]
        %v2745 = vld [vmem:[%s458 + $0x910] sm:$0xff]
        %v2746 = vld [vmem:[%s458 + $0x918] sm:$0xff]
        %v2747 = vld [vmem:[%s458 + $0x920] sm:$0xff]
        %v2748 = vld [vmem:[%s458 + $0x928] sm:$0xff]
        %v2749 = vld [vmem:[%s458 + $0x930] sm:$0xff]
        %v2750 = vld [vmem:[%s458 + $0x938] sm:$0xff]
        %v2751 = vld [vmem:[%s458 + $0x940] sm:$0xff]
        %v2752 = vld [vmem:[%s458 + $0x948] sm:$0xff]
        %v2753 = vld [vmem:[%s458 + $0x950] sm:$0xff]
        %v2754 = vld [vmem:[%s458 + $0x958] sm:$0xff]
        %v2755 = vld [vmem:[%s458 + $0x960] sm:$0xff]
        %v2756 = vld [vmem:[%s458 + $0x968] sm:$0xff]
        %v2757 = vld [vmem:[%s458 + $0x970] sm:$0xff]
        %v2758 = vld [vmem:[%s458 + $0x978] sm:$0xff]
        %v2759 = vld [vmem:[%s458 + $0x980] sm:$0xff]
        %v2760 = vld [vmem:[%s458 + $0x988] sm:$0xff]
        %v2761 = vld [vmem:[%s458 + $0x990] sm:$0xff]
        %v2762 = vld [vmem:[%s458 + $0x998] sm:$0xff]
        %v2763 = vld [vmem:[%s458 + $0x9a0] sm:$0xff]
        %v2764 = vld [vmem:[%s458 + $0x9a8] sm:$0xff]
        %v2765 = vld [vmem:[%s458 + $0x9b0] sm:$0xff]
        %v2766 = vld [vmem:[%s458 + $0x9b8] sm:$0xff]
        %v2767 = vld [vmem:[%s458 + $0x9c0] sm:$0xff]
        %v2768 = vld [vmem:[%s458 + $0x9c8] sm:$0xff]
        %v2769 = vld [vmem:[%s458 + $0x9d0] sm:$0xff]
        %v2770 = vld [vmem:[%s458 + $0x9d8] sm:$0xff]
        %v2771 = vld [vmem:[%s458 + $0x9e0] sm:$0xff]
        %v2772 = vld [vmem:[%s458 + $0x9e8] sm:$0xff]
        %v2773 = vld [vmem:[%s458 + $0x9f0] sm:$0xff]
        %v2774 = vld [vmem:[%s458 + $0x9f8] sm:$0xff]
        %v2775 = vld [vmem:[%s458 + $0xa00] sm:$0xff]
        %v2776 = vld [vmem:[%s458 + $0xa08] sm:$0xff]
        %v2777 = vld [vmem:[%s458 + $0xa10] sm:$0xff]
        %v2778 = vld [vmem:[%s458 + $0xa18] sm:$0xff]
        %v2779 = vld [vmem:[%s458 + $0xa20] sm:$0xff]
        %v2780 = vld [vmem:[%s458 + $0xa28] sm:$0xff]
        %v2781 = vld [vmem:[%s458 + $0xa30] sm:$0xff]
        %v2782 = vld [vmem:[%s458 + $0xa38] sm:$0xff]
        %v2783 = vld [vmem:[%s458 + $0xa40] sm:$0xff]
        %v2784 = vld [vmem:[%s458 + $0xa48] sm:$0xff]
        %v2785 = vld [vmem:[%s458 + $0xa50] sm:$0xff]
        %v2786 = vld [vmem:[%s458 + $0xa58] sm:$0xff]
        %v2787 = vld [vmem:[%s458 + $0xa60] sm:$0xff]
        %v2788 = vld [vmem:[%s458 + $0xa68] sm:$0xff]
        %v2789 = vld [vmem:[%s458 + $0xa70] sm:$0xff]
        %v2790 = vld [vmem:[%s458 + $0xa78] sm:$0xff]
        %v2791 = vld [vmem:[%s458 + $0xa80] sm:$0xff]
        %v2792 = vld [vmem:[%s458 + $0xa88] sm:$0xff]
        %v2793 = vld [vmem:[%s458 + $0xa90] sm:$0xff]
        %v2794 = vld [vmem:[%s458 + $0xa98] sm:$0xff]
        %v2795 = vld [vmem:[%s458 + $0xaa0] sm:$0xff]
        %v2796 = vld [vmem:[%s458 + $0xaa8] sm:$0xff]
        %v2797 = vld [vmem:[%s458 + $0xab0] sm:$0xff]
        %v2798 = vld [vmem:[%s458 + $0xab8] sm:$0xff]
        %v2799 = vld [vmem:[%s458 + $0xac0] sm:$0xff]
        %v2800 = vld [vmem:[%s458 + $0xac8] sm:$0xff]
        %v2801 = vld [vmem:[%s458 + $0xad0] sm:$0xff]
        %v2802 = vld [vmem:[%s458 + $0xad8] sm:$0xff]
        %v2803 = vld [vmem:[%s458 + $0xae0] sm:$0xff]
        %v2804 = vld [vmem:[%s458 + $0xae8] sm:$0xff]
        %v2805 = vld [vmem:[%s458 + $0xaf0] sm:$0xff]
        %v2806 = vld [vmem:[%s458 + $0xaf8] sm:$0xff]
        %v2807 = vld [vmem:[%s458 + $0xb00] sm:$0xff]
        %v2808 = vld [vmem:[%s458 + $0xb08] sm:$0xff]
        %v2809 = vld [vmem:[%s458 + $0xb10] sm:$0xff]
        %v2810 = vld [vmem:[%s458 + $0xb18] sm:$0xff]
        %v2811 = vld [vmem:[%s458 + $0xb20] sm:$0xff]
        %v2812 = vld [vmem:[%s458 + $0xb28] sm:$0xff]
        %v2813 = vld [vmem:[%s458 + $0xb30] sm:$0xff]
        %v2814 = vld [vmem:[%s458 + $0xb38] sm:$0xff]
        %v2815 = vld [vmem:[%s458 + $0xb40] sm:$0xff]
        %v2816 = vld [vmem:[%s458 + $0xb48] sm:$0xff]
        %v2817 = vld [vmem:[%s458 + $0xb50] sm:$0xff]
        %v2818 = vld [vmem:[%s458 + $0xb58] sm:$0xff]
        %v2819 = vld [vmem:[%s458 + $0xb60] sm:$0xff]
        %v2820 = vld [vmem:[%s458 + $0xb68] sm:$0xff]
        %v2821 = vld [vmem:[%s458 + $0xb70] sm:$0xff]
        %v2822 = vld [vmem:[%s458 + $0xb78] sm:$0xff]
        %v2823 = vld [vmem:[%s458 + $0xb80] sm:$0xff]
        %v2824 = vld [vmem:[%s458 + $0xb88] sm:$0xff]
        %v2825 = vld [vmem:[%s458 + $0xb90] sm:$0xff]
        %v2826 = vld [vmem:[%s458 + $0xb98] sm:$0xff]
        %v2827 = vld [vmem:[%s458 + $0xba0] sm:$0xff]
        %v2828 = vld [vmem:[%s458 + $0xba8] sm:$0xff]
        %v2829 = vld [vmem:[%s458 + $0xbb0] sm:$0xff]
        %v2830 = vld [vmem:[%s458 + $0xbb8] sm:$0xff]
        %v2831 = vld [vmem:[%s458 + $0xbc0] sm:$0xff]
        %v2832 = vld [vmem:[%s458 + $0xbc8] sm:$0xff]
        %v2833 = vld [vmem:[%s458 + $0xbd0] sm:$0xff]
        %v2834 = vld [vmem:[%s458 + $0xbd8] sm:$0xff]
        %v2835 = vld [vmem:[%s458 + $0xbe0] sm:$0xff]
        %v2836 = vld [vmem:[%s458 + $0xbe8] sm:$0xff]
        %v2837 = vld [vmem:[%s458 + $0xbf0] sm:$0xff]
        %v2838 = vld [vmem:[%s458 + $0xbf8] sm:$0xff]
        %v2839 = vunpack.c.l.s8.bf16 %v2455
        %v2840 = vunpack.c.l.s8.bf16 %v2456
        %v2841 = vunpack.c.l.s8.bf16 %v2457
        %v2842 = vunpack.c.l.s8.bf16 %v2458
        %v2843 = vunpack.c.l.s8.bf16 %v2459
        %v2844 = vunpack.c.l.s8.bf16 %v2460
        %v2845 = vunpack.c.l.s8.bf16 %v2461
        %v2846 = vunpack.c.l.s8.bf16 %v2462
        %v2847 = vunpack.c.l.s8.bf16 %v2463
        %v2848 = vunpack.c.l.s8.bf16 %v2464
        %v2849 = vunpack.c.l.s8.bf16 %v2465
        %v2850 = vunpack.c.l.s8.bf16 %v2466
        %v2851 = vunpack.c.l.s8.bf16 %v2467
        %v2852 = vunpack.c.l.s8.bf16 %v2468
        %v2853 = vunpack.c.l.s8.bf16 %v2469
        %v2854 = vunpack.c.l.s8.bf16 %v2470
        %v2855 = vunpack.c.h.s8.bf16 %v2455
        %v2856 = vunpack.c.h.s8.bf16 %v2456
        %v2857 = vunpack.c.h.s8.bf16 %v2457
        %v2858 = vunpack.c.h.s8.bf16 %v2458
        %v2859 = vunpack.c.h.s8.bf16 %v2459
        %v2860 = vunpack.c.h.s8.bf16 %v2460
        %v2861 = vunpack.c.h.s8.bf16 %v2461
        %v2862 = vunpack.c.h.s8.bf16 %v2462
        %v2863 = vunpack.c.h.s8.bf16 %v2463
        %v2864 = vunpack.c.h.s8.bf16 %v2464
        %v2865 = vunpack.c.h.s8.bf16 %v2465
        %v2866 = vunpack.c.h.s8.bf16 %v2466
        %v2867 = vunpack.c.h.s8.bf16 %v2467
        %v2868 = vunpack.c.h.s8.bf16 %v2468
        %v2869 = vunpack.c.h.s8.bf16 %v2469
        %v2870 = vunpack.c.h.s8.bf16 %v2470
        %v2871 = vunpack.c.l.s8.bf16 %v2471
        %v2872 = vunpack.c.l.s8.bf16 %v2472
        %v2873 = vunpack.c.l.s8.bf16 %v2473
        %v2874 = vunpack.c.l.s8.bf16 %v2474
        %v2875 = vunpack.c.l.s8.bf16 %v2475
        %v2876 = vunpack.c.l.s8.bf16 %v2476
        %v2877 = vunpack.c.l.s8.bf16 %v2477
        %v2878 = vunpack.c.l.s8.bf16 %v2478
        %v2879 = vunpack.c.l.s8.bf16 %v2479
        %v2880 = vunpack.c.l.s8.bf16 %v2480
        %v2881 = vunpack.c.l.s8.bf16 %v2481
        %v2882 = vunpack.c.l.s8.bf16 %v2482
        %v2883 = vunpack.c.l.s8.bf16 %v2483
        %v2884 = vunpack.c.l.s8.bf16 %v2484
        %v2885 = vunpack.c.l.s8.bf16 %v2485
        %v2886 = vunpack.c.l.s8.bf16 %v2486
        %v2887 = vunpack.c.h.s8.bf16 %v2471
        %v2888 = vunpack.c.h.s8.bf16 %v2472
        %v2889 = vunpack.c.h.s8.bf16 %v2473
        %v2890 = vunpack.c.h.s8.bf16 %v2474
        %v2891 = vunpack.c.h.s8.bf16 %v2475
        %v2892 = vunpack.c.h.s8.bf16 %v2476
        %v2893 = vunpack.c.h.s8.bf16 %v2477
        %v2894 = vunpack.c.h.s8.bf16 %v2478
        %v2895 = vunpack.c.h.s8.bf16 %v2479
        %v2896 = vunpack.c.h.s8.bf16 %v2480
        %v2897 = vunpack.c.h.s8.bf16 %v2481
        %v2898 = vunpack.c.h.s8.bf16 %v2482
        %v2899 = vunpack.c.h.s8.bf16 %v2483
        %v2900 = vunpack.c.h.s8.bf16 %v2484
        %v2901 = vunpack.c.h.s8.bf16 %v2485
        %v2902 = vunpack.c.h.s8.bf16 %v2486
        %v2903 = vunpack.c.l.s8.bf16 %v2487
        %v2904 = vunpack.c.l.s8.bf16 %v2488
        %v2905 = vunpack.c.l.s8.bf16 %v2489
        %v2906 = vunpack.c.l.s8.bf16 %v2490
        %v2907 = vunpack.c.l.s8.bf16 %v2491
        %v2908 = vunpack.c.l.s8.bf16 %v2492
        %v2909 = vunpack.c.l.s8.bf16 %v2493
        %v2910 = vunpack.c.l.s8.bf16 %v2494
        %v2911 = vunpack.c.l.s8.bf16 %v2495
        %v2912 = vunpack.c.l.s8.bf16 %v2496
        %v2913 = vunpack.c.l.s8.bf16 %v2497
        %v2914 = vunpack.c.l.s8.bf16 %v2498
        %v2915 = vunpack.c.l.s8.bf16 %v2499
        %v2916 = vunpack.c.l.s8.bf16 %v2500
        %v2917 = vunpack.c.l.s8.bf16 %v2501
        %v2918 = vunpack.c.l.s8.bf16 %v2502
        %v2919 = vunpack.c.h.s8.bf16 %v2487
        %v2920 = vunpack.c.h.s8.bf16 %v2488
        %v2921 = vunpack.c.h.s8.bf16 %v2489
        %v2922 = vunpack.c.h.s8.bf16 %v2490
        %v2923 = vunpack.c.h.s8.bf16 %v2491
        %v2924 = vunpack.c.h.s8.bf16 %v2492
        %v2925 = vunpack.c.h.s8.bf16 %v2493
        %v2926 = vunpack.c.h.s8.bf16 %v2494
        %v2927 = vunpack.c.h.s8.bf16 %v2495
        %v2928 = vunpack.c.h.s8.bf16 %v2496
        %v2929 = vunpack.c.h.s8.bf16 %v2497
        %v2930 = vunpack.c.h.s8.bf16 %v2498
        %v2931 = vunpack.c.h.s8.bf16 %v2499
        %v2932 = vunpack.c.h.s8.bf16 %v2500
        %v2933 = vunpack.c.h.s8.bf16 %v2501
        %v2934 = vunpack.c.h.s8.bf16 %v2502
        %v2935 = vunpack.c.l.s8.bf16 %v2503
        %v2936 = vunpack.c.l.s8.bf16 %v2504
        %v2937 = vunpack.c.l.s8.bf16 %v2505
        %v2938 = vunpack.c.l.s8.bf16 %v2506
        %v2939 = vunpack.c.l.s8.bf16 %v2507
        %v2940 = vunpack.c.l.s8.bf16 %v2508
        %v2941 = vunpack.c.l.s8.bf16 %v2509
        %v2942 = vunpack.c.l.s8.bf16 %v2510
        %v2943 = vunpack.c.l.s8.bf16 %v2511
        %v2944 = vunpack.c.l.s8.bf16 %v2512
        %v2945 = vunpack.c.l.s8.bf16 %v2513
        %v2946 = vunpack.c.l.s8.bf16 %v2514
        %v2947 = vunpack.c.l.s8.bf16 %v2515
        %v2948 = vunpack.c.l.s8.bf16 %v2516
        %v2949 = vunpack.c.l.s8.bf16 %v2517
        %v2950 = vunpack.c.l.s8.bf16 %v2518
        %v2951 = vunpack.c.h.s8.bf16 %v2503
        %v2952 = vunpack.c.h.s8.bf16 %v2504
        %v2953 = vunpack.c.h.s8.bf16 %v2505
        %v2954 = vunpack.c.h.s8.bf16 %v2506
        %v2955 = vunpack.c.h.s8.bf16 %v2507
        %v2956 = vunpack.c.h.s8.bf16 %v2508
        %v2957 = vunpack.c.h.s8.bf16 %v2509
        %v2958 = vunpack.c.h.s8.bf16 %v2510
        %v2959 = vunpack.c.h.s8.bf16 %v2511
        %v2960 = vunpack.c.h.s8.bf16 %v2512
        %v2961 = vunpack.c.h.s8.bf16 %v2513
        %v2962 = vunpack.c.h.s8.bf16 %v2514
        %v2963 = vunpack.c.h.s8.bf16 %v2515
        %v2964 = vunpack.c.h.s8.bf16 %v2516
        %v2965 = vunpack.c.h.s8.bf16 %v2517
        %v2966 = vunpack.c.h.s8.bf16 %v2518
        %v2967 = vunpack.c.l.s8.bf16 %v2519
        %v2968 = vunpack.c.l.s8.bf16 %v2520
        %v2969 = vunpack.c.l.s8.bf16 %v2521
        %v2970 = vunpack.c.l.s8.bf16 %v2522
        %v2971 = vunpack.c.l.s8.bf16 %v2523
        %v2972 = vunpack.c.l.s8.bf16 %v2524
        %v2973 = vunpack.c.l.s8.bf16 %v2525
        %v2974 = vunpack.c.l.s8.bf16 %v2526
        %v2975 = vunpack.c.l.s8.bf16 %v2527
        %v2976 = vunpack.c.l.s8.bf16 %v2528
        %v2977 = vunpack.c.l.s8.bf16 %v2529
        %v2978 = vunpack.c.l.s8.bf16 %v2530
        %v2979 = vunpack.c.l.s8.bf16 %v2531
        %v2980 = vunpack.c.l.s8.bf16 %v2532
        %v2981 = vunpack.c.l.s8.bf16 %v2533
        %v2982 = vunpack.c.l.s8.bf16 %v2534
        %v2983 = vunpack.c.h.s8.bf16 %v2519
        %v2984 = vunpack.c.h.s8.bf16 %v2520
        %v2985 = vunpack.c.h.s8.bf16 %v2521
        %v2986 = vunpack.c.h.s8.bf16 %v2522
        %v2987 = vunpack.c.h.s8.bf16 %v2523
        %v2988 = vunpack.c.h.s8.bf16 %v2524
        %v2989 = vunpack.c.h.s8.bf16 %v2525
        %v2990 = vunpack.c.h.s8.bf16 %v2526
        %v2991 = vunpack.c.h.s8.bf16 %v2527
        %v2992 = vunpack.c.h.s8.bf16 %v2528
        %v2993 = vunpack.c.h.s8.bf16 %v2529
        %v2994 = vunpack.c.h.s8.bf16 %v2530
        %v2995 = vunpack.c.h.s8.bf16 %v2531
        %v2996 = vunpack.c.h.s8.bf16 %v2532
        %v2997 = vunpack.c.h.s8.bf16 %v2533
        %v2998 = vunpack.c.h.s8.bf16 %v2534
        %v2999 = vunpack.c.l.s8.bf16 %v2535
        %v3000 = vunpack.c.l.s8.bf16 %v2536
        %v3001 = vunpack.c.l.s8.bf16 %v2537
        %v3002 = vunpack.c.l.s8.bf16 %v2538
        %v3003 = vunpack.c.l.s8.bf16 %v2539
        %v3004 = vunpack.c.l.s8.bf16 %v2540
        %v3005 = vunpack.c.l.s8.bf16 %v2541
        %v3006 = vunpack.c.l.s8.bf16 %v2542
        %v3007 = vunpack.c.l.s8.bf16 %v2543
        %v3008 = vunpack.c.l.s8.bf16 %v2544
        %v3009 = vunpack.c.l.s8.bf16 %v2545
        %v3010 = vunpack.c.l.s8.bf16 %v2546
        %v3011 = vunpack.c.l.s8.bf16 %v2547
        %v3012 = vunpack.c.l.s8.bf16 %v2548
        %v3013 = vunpack.c.l.s8.bf16 %v2549
        %v3014 = vunpack.c.l.s8.bf16 %v2550
        %v3015 = vunpack.c.h.s8.bf16 %v2535
        %v3016 = vunpack.c.h.s8.bf16 %v2536
        %v3017 = vunpack.c.h.s8.bf16 %v2537
        %v3018 = vunpack.c.h.s8.bf16 %v2538
        %v3019 = vunpack.c.h.s8.bf16 %v2539
        %v3020 = vunpack.c.h.s8.bf16 %v2540
        %v3021 = vunpack.c.h.s8.bf16 %v2541
        %v3022 = vunpack.c.h.s8.bf16 %v2542
        %v3023 = vunpack.c.h.s8.bf16 %v2543
        %v3024 = vunpack.c.h.s8.bf16 %v2544
        %v3025 = vunpack.c.h.s8.bf16 %v2545
        %v3026 = vunpack.c.h.s8.bf16 %v2546
        %v3027 = vunpack.c.h.s8.bf16 %v2547
        %v3028 = vunpack.c.h.s8.bf16 %v2548
        %v3029 = vunpack.c.h.s8.bf16 %v2549
        %v3030 = vunpack.c.h.s8.bf16 %v2550
        %v3031 = vunpack.c.l.s8.bf16 %v2551
        %v3032 = vunpack.c.l.s8.bf16 %v2552
        %v3033 = vunpack.c.l.s8.bf16 %v2553
        %v3034 = vunpack.c.l.s8.bf16 %v2554
        %v3035 = vunpack.c.l.s8.bf16 %v2555
        %v3036 = vunpack.c.l.s8.bf16 %v2556
        %v3037 = vunpack.c.l.s8.bf16 %v2557
        %v3038 = vunpack.c.l.s8.bf16 %v2558
        %v3039 = vunpack.c.l.s8.bf16 %v2559
        %v3040 = vunpack.c.l.s8.bf16 %v2560
        %v3041 = vunpack.c.l.s8.bf16 %v2561
        %v3042 = vunpack.c.l.s8.bf16 %v2562
        %v3043 = vunpack.c.l.s8.bf16 %v2563
        %v3044 = vunpack.c.l.s8.bf16 %v2564
        %v3045 = vunpack.c.l.s8.bf16 %v2565
        %v3046 = vunpack.c.l.s8.bf16 %v2566
        %v3047 = vunpack.c.h.s8.bf16 %v2551
        %v3048 = vunpack.c.h.s8.bf16 %v2552
        %v3049 = vunpack.c.h.s8.bf16 %v2553
        %v3050 = vunpack.c.h.s8.bf16 %v2554
        %v3051 = vunpack.c.h.s8.bf16 %v2555
        %v3052 = vunpack.c.h.s8.bf16 %v2556
        %v3053 = vunpack.c.h.s8.bf16 %v2557
        %v3054 = vunpack.c.h.s8.bf16 %v2558
        %v3055 = vunpack.c.h.s8.bf16 %v2559
        %v3056 = vunpack.c.h.s8.bf16 %v2560
        %v3057 = vunpack.c.h.s8.bf16 %v2561
        %v3058 = vunpack.c.h.s8.bf16 %v2562
        %v3059 = vunpack.c.h.s8.bf16 %v2563
        %v3060 = vunpack.c.h.s8.bf16 %v2564
        %v3061 = vunpack.c.h.s8.bf16 %v2565
        %v3062 = vunpack.c.h.s8.bf16 %v2566
        %v3063 = vunpack.c.l.s8.bf16 %v2567
        %v3064 = vunpack.c.l.s8.bf16 %v2568
        %v3065 = vunpack.c.l.s8.bf16 %v2569
        %v3066 = vunpack.c.l.s8.bf16 %v2570
        %v3067 = vunpack.c.l.s8.bf16 %v2571
        %v3068 = vunpack.c.l.s8.bf16 %v2572
        %v3069 = vunpack.c.l.s8.bf16 %v2573
        %v3070 = vunpack.c.l.s8.bf16 %v2574
        %v3071 = vunpack.c.l.s8.bf16 %v2575
        %v3072 = vunpack.c.l.s8.bf16 %v2576
        %v3073 = vunpack.c.l.s8.bf16 %v2577
        %v3074 = vunpack.c.l.s8.bf16 %v2578
        %v3075 = vunpack.c.l.s8.bf16 %v2579
        %v3076 = vunpack.c.l.s8.bf16 %v2580
        %v3077 = vunpack.c.l.s8.bf16 %v2581
        %v3078 = vunpack.c.l.s8.bf16 %v2582
        %v3079 = vunpack.c.h.s8.bf16 %v2567
        %v3080 = vunpack.c.h.s8.bf16 %v2568
        %v3081 = vunpack.c.h.s8.bf16 %v2569
        %v3082 = vunpack.c.h.s8.bf16 %v2570
        %v3083 = vunpack.c.h.s8.bf16 %v2571
        %v3084 = vunpack.c.h.s8.bf16 %v2572
        %v3085 = vunpack.c.h.s8.bf16 %v2573
        %v3086 = vunpack.c.h.s8.bf16 %v2574
        %v3087 = vunpack.c.h.s8.bf16 %v2575
        %v3088 = vunpack.c.h.s8.bf16 %v2576
        %v3089 = vunpack.c.h.s8.bf16 %v2577
        %v3090 = vunpack.c.h.s8.bf16 %v2578
        %v3091 = vunpack.c.h.s8.bf16 %v2579
        %v3092 = vunpack.c.h.s8.bf16 %v2580
        %v3093 = vunpack.c.h.s8.bf16 %v2581
        %v3094 = vunpack.c.h.s8.bf16 %v2582
        %v3095 = vunpack.c.l.s8.bf16 %v2583
        %v3096 = vunpack.c.l.s8.bf16 %v2584
        %v3097 = vunpack.c.l.s8.bf16 %v2585
        %v3098 = vunpack.c.l.s8.bf16 %v2586
        %v3099 = vunpack.c.l.s8.bf16 %v2587
        %v3100 = vunpack.c.l.s8.bf16 %v2588
        %v3101 = vunpack.c.l.s8.bf16 %v2589
        %v3102 = vunpack.c.l.s8.bf16 %v2590
        %v3103 = vunpack.c.l.s8.bf16 %v2591
        %v3104 = vunpack.c.l.s8.bf16 %v2592
        %v3105 = vunpack.c.l.s8.bf16 %v2593
        %v3106 = vunpack.c.l.s8.bf16 %v2594
        %v3107 = vunpack.c.l.s8.bf16 %v2595
        %v3108 = vunpack.c.l.s8.bf16 %v2596
        %v3109 = vunpack.c.l.s8.bf16 %v2597
        %v3110 = vunpack.c.l.s8.bf16 %v2598
        %v3111 = vunpack.c.h.s8.bf16 %v2583
        %v3112 = vunpack.c.h.s8.bf16 %v2584
        %v3113 = vunpack.c.h.s8.bf16 %v2585
        %v3114 = vunpack.c.h.s8.bf16 %v2586
        %v3115 = vunpack.c.h.s8.bf16 %v2587
        %v3116 = vunpack.c.h.s8.bf16 %v2588
        %v3117 = vunpack.c.h.s8.bf16 %v2589
        %v3118 = vunpack.c.h.s8.bf16 %v2590
        %v3119 = vunpack.c.h.s8.bf16 %v2591
        %v3120 = vunpack.c.h.s8.bf16 %v2592
        %v3121 = vunpack.c.h.s8.bf16 %v2593
        %v3122 = vunpack.c.h.s8.bf16 %v2594
        %v3123 = vunpack.c.h.s8.bf16 %v2595
        %v3124 = vunpack.c.h.s8.bf16 %v2596
        %v3125 = vunpack.c.h.s8.bf16 %v2597
        %v3126 = vunpack.c.h.s8.bf16 %v2598
        %v3127 = vunpack.c.l.s8.bf16 %v2599
        %v3128 = vunpack.c.l.s8.bf16 %v2600
        %v3129 = vunpack.c.l.s8.bf16 %v2601
        %v3130 = vunpack.c.l.s8.bf16 %v2602
        %v3131 = vunpack.c.l.s8.bf16 %v2603
        %v3132 = vunpack.c.l.s8.bf16 %v2604
        %v3133 = vunpack.c.l.s8.bf16 %v2605
        %v3134 = vunpack.c.l.s8.bf16 %v2606
        %v3135 = vunpack.c.l.s8.bf16 %v2607
        %v3136 = vunpack.c.l.s8.bf16 %v2608
        %v3137 = vunpack.c.l.s8.bf16 %v2609
        %v3138 = vunpack.c.l.s8.bf16 %v2610
        %v3139 = vunpack.c.l.s8.bf16 %v2611
        %v3140 = vunpack.c.l.s8.bf16 %v2612
        %v3141 = vunpack.c.l.s8.bf16 %v2613
        %v3142 = vunpack.c.l.s8.bf16 %v2614
        %v3143 = vunpack.c.h.s8.bf16 %v2599
        %v3144 = vunpack.c.h.s8.bf16 %v2600
        %v3145 = vunpack.c.h.s8.bf16 %v2601
        %v3146 = vunpack.c.h.s8.bf16 %v2602
        %v3147 = vunpack.c.h.s8.bf16 %v2603
        %v3148 = vunpack.c.h.s8.bf16 %v2604
        %v3149 = vunpack.c.h.s8.bf16 %v2605
        %v3150 = vunpack.c.h.s8.bf16 %v2606
        %v3151 = vunpack.c.h.s8.bf16 %v2607
        %v3152 = vunpack.c.h.s8.bf16 %v2608
        %v3153 = vunpack.c.h.s8.bf16 %v2609
        %v3154 = vunpack.c.h.s8.bf16 %v2610
        %v3155 = vunpack.c.h.s8.bf16 %v2611
        %v3156 = vunpack.c.h.s8.bf16 %v2612
        %v3157 = vunpack.c.h.s8.bf16 %v2613
        %v3158 = vunpack.c.h.s8.bf16 %v2614
        %v3159 = vunpack.c.l.s8.bf16 %v2615
        %v3160 = vunpack.c.l.s8.bf16 %v2616
        %v3161 = vunpack.c.l.s8.bf16 %v2617
        %v3162 = vunpack.c.l.s8.bf16 %v2618
        %v3163 = vunpack.c.l.s8.bf16 %v2619
        %v3164 = vunpack.c.l.s8.bf16 %v2620
        %v3165 = vunpack.c.l.s8.bf16 %v2621
        %v3166 = vunpack.c.l.s8.bf16 %v2622
        %v3167 = vunpack.c.l.s8.bf16 %v2623
        %v3168 = vunpack.c.l.s8.bf16 %v2624
        %v3169 = vunpack.c.l.s8.bf16 %v2625
        %v3170 = vunpack.c.l.s8.bf16 %v2626
        %v3171 = vunpack.c.l.s8.bf16 %v2627
        %v3172 = vunpack.c.l.s8.bf16 %v2628
        %v3173 = vunpack.c.l.s8.bf16 %v2629
        %v3174 = vunpack.c.l.s8.bf16 %v2630
        %v3175 = vunpack.c.h.s8.bf16 %v2615
        %v3176 = vunpack.c.h.s8.bf16 %v2616
        %v3177 = vunpack.c.h.s8.bf16 %v2617
        %v3178 = vunpack.c.h.s8.bf16 %v2618
        %v3179 = vunpack.c.h.s8.bf16 %v2619
        %v3180 = vunpack.c.h.s8.bf16 %v2620
        %v3181 = vunpack.c.h.s8.bf16 %v2621
        %v3182 = vunpack.c.h.s8.bf16 %v2622
        %v3183 = vunpack.c.h.s8.bf16 %v2623
        %v3184 = vunpack.c.h.s8.bf16 %v2624
        %v3185 = vunpack.c.h.s8.bf16 %v2625
        %v3186 = vunpack.c.h.s8.bf16 %v2626
        %v3187 = vunpack.c.h.s8.bf16 %v2627
        %v3188 = vunpack.c.h.s8.bf16 %v2628
        %v3189 = vunpack.c.h.s8.bf16 %v2629
        %v3190 = vunpack.c.h.s8.bf16 %v2630
        %v3191 = vunpack.c.l.s8.bf16 %v2631
        %v3192 = vunpack.c.l.s8.bf16 %v2632
        %v3193 = vunpack.c.l.s8.bf16 %v2633
        %v3194 = vunpack.c.l.s8.bf16 %v2634
        %v3195 = vunpack.c.l.s8.bf16 %v2635
        %v3196 = vunpack.c.l.s8.bf16 %v2636
        %v3197 = vunpack.c.l.s8.bf16 %v2637
        %v3198 = vunpack.c.l.s8.bf16 %v2638
        %v3199 = vunpack.c.l.s8.bf16 %v2639
        %v3200 = vunpack.c.l.s8.bf16 %v2640
        %v3201 = vunpack.c.l.s8.bf16 %v2641
        %v3202 = vunpack.c.l.s8.bf16 %v2642
        %v3203 = vunpack.c.l.s8.bf16 %v2643
        %v3204 = vunpack.c.l.s8.bf16 %v2644
        %v3205 = vunpack.c.l.s8.bf16 %v2645
        %v3206 = vunpack.c.l.s8.bf16 %v2646
        %v3207 = vunpack.c.h.s8.bf16 %v2631
        %v3208 = vunpack.c.h.s8.bf16 %v2632
        %v3209 = vunpack.c.h.s8.bf16 %v2633
        %v3210 = vunpack.c.h.s8.bf16 %v2634
        %v3211 = vunpack.c.h.s8.bf16 %v2635
        %v3212 = vunpack.c.h.s8.bf16 %v2636
        %v3213 = vunpack.c.h.s8.bf16 %v2637
        %v3214 = vunpack.c.h.s8.bf16 %v2638
        %v3215 = vunpack.c.h.s8.bf16 %v2639
        %v3216 = vunpack.c.h.s8.bf16 %v2640
        %v3217 = vunpack.c.h.s8.bf16 %v2641
        %v3218 = vunpack.c.h.s8.bf16 %v2642
        %v3219 = vunpack.c.h.s8.bf16 %v2643
        %v3220 = vunpack.c.h.s8.bf16 %v2644
        %v3221 = vunpack.c.h.s8.bf16 %v2645
        %v3222 = vunpack.c.h.s8.bf16 %v2646
        %v3223 = vunpack.c.l.s8.bf16 %v2647
        %v3224 = vunpack.c.l.s8.bf16 %v2648
        %v3225 = vunpack.c.l.s8.bf16 %v2649
        %v3226 = vunpack.c.l.s8.bf16 %v2650
        %v3227 = vunpack.c.l.s8.bf16 %v2651
        %v3228 = vunpack.c.l.s8.bf16 %v2652
        %v3229 = vunpack.c.l.s8.bf16 %v2653
        %v3230 = vunpack.c.l.s8.bf16 %v2654
        %v3231 = vunpack.c.l.s8.bf16 %v2655
        %v3232 = vunpack.c.l.s8.bf16 %v2656
        %v3233 = vunpack.c.l.s8.bf16 %v2657
        %v3234 = vunpack.c.l.s8.bf16 %v2658
        %v3235 = vunpack.c.l.s8.bf16 %v2659
        %v3236 = vunpack.c.l.s8.bf16 %v2660
        %v3237 = vunpack.c.l.s8.bf16 %v2661
        %v3238 = vunpack.c.l.s8.bf16 %v2662
        %v3239 = vunpack.c.h.s8.bf16 %v2647
        %v3240 = vunpack.c.h.s8.bf16 %v2648
        %v3241 = vunpack.c.h.s8.bf16 %v2649
        %v3242 = vunpack.c.h.s8.bf16 %v2650
        %v3243 = vunpack.c.h.s8.bf16 %v2651
        %v3244 = vunpack.c.h.s8.bf16 %v2652
        %v3245 = vunpack.c.h.s8.bf16 %v2653
        %v3246 = vunpack.c.h.s8.bf16 %v2654
        %v3247 = vunpack.c.h.s8.bf16 %v2655
        %v3248 = vunpack.c.h.s8.bf16 %v2656
        %v3249 = vunpack.c.h.s8.bf16 %v2657
        %v3250 = vunpack.c.h.s8.bf16 %v2658
        %v3251 = vunpack.c.h.s8.bf16 %v2659
        %v3252 = vunpack.c.h.s8.bf16 %v2660
        %v3253 = vunpack.c.h.s8.bf16 %v2661
        %v3254 = vunpack.c.h.s8.bf16 %v2662
        %v3255 = vunpack.c.l.s8.bf16 %v2663
        %v3256 = vunpack.c.l.s8.bf16 %v2664
        %v3257 = vunpack.c.l.s8.bf16 %v2665
        %v3258 = vunpack.c.l.s8.bf16 %v2666
        %v3259 = vunpack.c.l.s8.bf16 %v2667
        %v3260 = vunpack.c.l.s8.bf16 %v2668
        %v3261 = vunpack.c.l.s8.bf16 %v2669
        %v3262 = vunpack.c.l.s8.bf16 %v2670
        %v3263 = vunpack.c.l.s8.bf16 %v2671
        %v3264 = vunpack.c.l.s8.bf16 %v2672
        %v3265 = vunpack.c.l.s8.bf16 %v2673
        %v3266 = vunpack.c.l.s8.bf16 %v2674
        %v3267 = vunpack.c.l.s8.bf16 %v2675
        %v3268 = vunpack.c.l.s8.bf16 %v2676
        %v3269 = vunpack.c.l.s8.bf16 %v2677
        %v3270 = vunpack.c.l.s8.bf16 %v2678
        %v3271 = vunpack.c.h.s8.bf16 %v2663
        %v3272 = vunpack.c.h.s8.bf16 %v2664
        %v3273 = vunpack.c.h.s8.bf16 %v2665
        %v3274 = vunpack.c.h.s8.bf16 %v2666
        %v3275 = vunpack.c.h.s8.bf16 %v2667
        %v3276 = vunpack.c.h.s8.bf16 %v2668
        %v3277 = vunpack.c.h.s8.bf16 %v2669
        %v3278 = vunpack.c.h.s8.bf16 %v2670
        %v3279 = vunpack.c.h.s8.bf16 %v2671
        %v3280 = vunpack.c.h.s8.bf16 %v2672
        %v3281 = vunpack.c.h.s8.bf16 %v2673
        %v3282 = vunpack.c.h.s8.bf16 %v2674
        %v3283 = vunpack.c.h.s8.bf16 %v2675
        %v3284 = vunpack.c.h.s8.bf16 %v2676
        %v3285 = vunpack.c.h.s8.bf16 %v2677
        %v3286 = vunpack.c.h.s8.bf16 %v2678
        %v3287 = vunpack.c.l.s8.bf16 %v2679
        %v3288 = vunpack.c.l.s8.bf16 %v2680
        %v3289 = vunpack.c.l.s8.bf16 %v2681
        %v3290 = vunpack.c.l.s8.bf16 %v2682
        %v3291 = vunpack.c.l.s8.bf16 %v2683
        %v3292 = vunpack.c.l.s8.bf16 %v2684
        %v3293 = vunpack.c.l.s8.bf16 %v2685
        %v3294 = vunpack.c.l.s8.bf16 %v2686
        %v3295 = vunpack.c.l.s8.bf16 %v2687
        %v3296 = vunpack.c.l.s8.bf16 %v2688
        %v3297 = vunpack.c.l.s8.bf16 %v2689
        %v3298 = vunpack.c.l.s8.bf16 %v2690
        %v3299 = vunpack.c.l.s8.bf16 %v2691
        %v3300 = vunpack.c.l.s8.bf16 %v2692
        %v3301 = vunpack.c.l.s8.bf16 %v2693
        %v3302 = vunpack.c.l.s8.bf16 %v2694
        %v3303 = vunpack.c.h.s8.bf16 %v2679
        %v3304 = vunpack.c.h.s8.bf16 %v2680
        %v3305 = vunpack.c.h.s8.bf16 %v2681
        %v3306 = vunpack.c.h.s8.bf16 %v2682
        %v3307 = vunpack.c.h.s8.bf16 %v2683
        %v3308 = vunpack.c.h.s8.bf16 %v2684
        %v3309 = vunpack.c.h.s8.bf16 %v2685
        %v3310 = vunpack.c.h.s8.bf16 %v2686
        %v3311 = vunpack.c.h.s8.bf16 %v2687
        %v3312 = vunpack.c.h.s8.bf16 %v2688
        %v3313 = vunpack.c.h.s8.bf16 %v2689
        %v3314 = vunpack.c.h.s8.bf16 %v2690
        %v3315 = vunpack.c.h.s8.bf16 %v2691
        %v3316 = vunpack.c.h.s8.bf16 %v2692
        %v3317 = vunpack.c.h.s8.bf16 %v2693
        %v3318 = vunpack.c.h.s8.bf16 %v2694
        %v3319 = vunpack.c.l.s8.bf16 %v2695
        %v3320 = vunpack.c.l.s8.bf16 %v2696
        %v3321 = vunpack.c.l.s8.bf16 %v2697
        %v3322 = vunpack.c.l.s8.bf16 %v2698
        %v3323 = vunpack.c.l.s8.bf16 %v2699
        %v3324 = vunpack.c.l.s8.bf16 %v2700
        %v3325 = vunpack.c.l.s8.bf16 %v2701
        %v3326 = vunpack.c.l.s8.bf16 %v2702
        %v3327 = vunpack.c.l.s8.bf16 %v2703
        %v3328 = vunpack.c.l.s8.bf16 %v2704
        %v3329 = vunpack.c.l.s8.bf16 %v2705
        %v3330 = vunpack.c.l.s8.bf16 %v2706
        %v3331 = vunpack.c.l.s8.bf16 %v2707
        %v3332 = vunpack.c.l.s8.bf16 %v2708
        %v3333 = vunpack.c.l.s8.bf16 %v2709
        %v3334 = vunpack.c.l.s8.bf16 %v2710
        %v3335 = vunpack.c.h.s8.bf16 %v2695
        %v3336 = vunpack.c.h.s8.bf16 %v2696
        %v3337 = vunpack.c.h.s8.bf16 %v2697
        %v3338 = vunpack.c.h.s8.bf16 %v2698
        %v3339 = vunpack.c.h.s8.bf16 %v2699
        %v3340 = vunpack.c.h.s8.bf16 %v2700
        %v3341 = vunpack.c.h.s8.bf16 %v2701
        %v3342 = vunpack.c.h.s8.bf16 %v2702
        %v3343 = vunpack.c.h.s8.bf16 %v2703
        %v3344 = vunpack.c.h.s8.bf16 %v2704
        %v3345 = vunpack.c.h.s8.bf16 %v2705
        %v3346 = vunpack.c.h.s8.bf16 %v2706
        %v3347 = vunpack.c.h.s8.bf16 %v2707
        %v3348 = vunpack.c.h.s8.bf16 %v2708
        %v3349 = vunpack.c.h.s8.bf16 %v2709
        %v3350 = vunpack.c.h.s8.bf16 %v2710
        %v3351 = vunpack.c.l.s8.bf16 %v2711
        %v3352 = vunpack.c.l.s8.bf16 %v2712
        %v3353 = vunpack.c.l.s8.bf16 %v2713
        %v3354 = vunpack.c.l.s8.bf16 %v2714
        %v3355 = vunpack.c.l.s8.bf16 %v2715
        %v3356 = vunpack.c.l.s8.bf16 %v2716
        %v3357 = vunpack.c.l.s8.bf16 %v2717
        %v3358 = vunpack.c.l.s8.bf16 %v2718
        %v3359 = vunpack.c.l.s8.bf16 %v2719
        %v3360 = vunpack.c.l.s8.bf16 %v2720
        %v3361 = vunpack.c.l.s8.bf16 %v2721
        %v3362 = vunpack.c.l.s8.bf16 %v2722
        %v3363 = vunpack.c.l.s8.bf16 %v2723
        %v3364 = vunpack.c.l.s8.bf16 %v2724
        %v3365 = vunpack.c.l.s8.bf16 %v2725
        %v3366 = vunpack.c.l.s8.bf16 %v2726
        %v3367 = vunpack.c.h.s8.bf16 %v2711
        %v3368 = vunpack.c.h.s8.bf16 %v2712
        %v3369 = vunpack.c.h.s8.bf16 %v2713
        %v3370 = vunpack.c.h.s8.bf16 %v2714
        %v3371 = vunpack.c.h.s8.bf16 %v2715
        %v3372 = vunpack.c.h.s8.bf16 %v2716
        %v3373 = vunpack.c.h.s8.bf16 %v2717
        %v3374 = vunpack.c.h.s8.bf16 %v2718
        %v3375 = vunpack.c.h.s8.bf16 %v2719
        %v3376 = vunpack.c.h.s8.bf16 %v2720
        %v3377 = vunpack.c.h.s8.bf16 %v2721
        %v3378 = vunpack.c.h.s8.bf16 %v2722
        %v3379 = vunpack.c.h.s8.bf16 %v2723
        %v3380 = vunpack.c.h.s8.bf16 %v2724
        %v3381 = vunpack.c.h.s8.bf16 %v2725
        %v3382 = vunpack.c.h.s8.bf16 %v2726
        %v3383 = vunpack.c.l.s8.bf16 %v2727
        %v3384 = vunpack.c.l.s8.bf16 %v2728
        %v3385 = vunpack.c.l.s8.bf16 %v2729
        %v3386 = vunpack.c.l.s8.bf16 %v2730
        %v3387 = vunpack.c.l.s8.bf16 %v2731
        %v3388 = vunpack.c.l.s8.bf16 %v2732
        %v3389 = vunpack.c.l.s8.bf16 %v2733
        %v3390 = vunpack.c.l.s8.bf16 %v2734
        %v3391 = vunpack.c.l.s8.bf16 %v2735
        %v3392 = vunpack.c.l.s8.bf16 %v2736
        %v3393 = vunpack.c.l.s8.bf16 %v2737
        %v3394 = vunpack.c.l.s8.bf16 %v2738
        %v3395 = vunpack.c.l.s8.bf16 %v2739
        %v3396 = vunpack.c.l.s8.bf16 %v2740
        %v3397 = vunpack.c.l.s8.bf16 %v2741
        %v3398 = vunpack.c.l.s8.bf16 %v2742
        %v3399 = vunpack.c.h.s8.bf16 %v2727
        %v3400 = vunpack.c.h.s8.bf16 %v2728
        %v3401 = vunpack.c.h.s8.bf16 %v2729
        %v3402 = vunpack.c.h.s8.bf16 %v2730
        %v3403 = vunpack.c.h.s8.bf16 %v2731
        %v3404 = vunpack.c.h.s8.bf16 %v2732
        %v3405 = vunpack.c.h.s8.bf16 %v2733
        %v3406 = vunpack.c.h.s8.bf16 %v2734
        %v3407 = vunpack.c.h.s8.bf16 %v2735
        %v3408 = vunpack.c.h.s8.bf16 %v2736
        %v3409 = vunpack.c.h.s8.bf16 %v2737
        %v3410 = vunpack.c.h.s8.bf16 %v2738
        %v3411 = vunpack.c.h.s8.bf16 %v2739
        %v3412 = vunpack.c.h.s8.bf16 %v2740
        %v3413 = vunpack.c.h.s8.bf16 %v2741
        %v3414 = vunpack.c.h.s8.bf16 %v2742
        %v3415 = vunpack.c.l.s8.bf16 %v2743
        %v3416 = vunpack.c.l.s8.bf16 %v2744
        %v3417 = vunpack.c.l.s8.bf16 %v2745
        %v3418 = vunpack.c.l.s8.bf16 %v2746
        %v3419 = vunpack.c.l.s8.bf16 %v2747
        %v3420 = vunpack.c.l.s8.bf16 %v2748
        %v3421 = vunpack.c.l.s8.bf16 %v2749
        %v3422 = vunpack.c.l.s8.bf16 %v2750
        %v3423 = vunpack.c.l.s8.bf16 %v2751
        %v3424 = vunpack.c.l.s8.bf16 %v2752
        %v3425 = vunpack.c.l.s8.bf16 %v2753
        %v3426 = vunpack.c.l.s8.bf16 %v2754
        %v3427 = vunpack.c.l.s8.bf16 %v2755
        %v3428 = vunpack.c.l.s8.bf16 %v2756
        %v3429 = vunpack.c.l.s8.bf16 %v2757
        %v3430 = vunpack.c.l.s8.bf16 %v2758
        %v3431 = vunpack.c.h.s8.bf16 %v2743
        %v3432 = vunpack.c.h.s8.bf16 %v2744
        %v3433 = vunpack.c.h.s8.bf16 %v2745
        %v3434 = vunpack.c.h.s8.bf16 %v2746
        %v3435 = vunpack.c.h.s8.bf16 %v2747
        %v3436 = vunpack.c.h.s8.bf16 %v2748
        %v3437 = vunpack.c.h.s8.bf16 %v2749
        %v3438 = vunpack.c.h.s8.bf16 %v2750
        %v3439 = vunpack.c.h.s8.bf16 %v2751
        %v3440 = vunpack.c.h.s8.bf16 %v2752
        %v3441 = vunpack.c.h.s8.bf16 %v2753
        %v3442 = vunpack.c.h.s8.bf16 %v2754
        %v3443 = vunpack.c.h.s8.bf16 %v2755
        %v3444 = vunpack.c.h.s8.bf16 %v2756
        %v3445 = vunpack.c.h.s8.bf16 %v2757
        %v3446 = vunpack.c.h.s8.bf16 %v2758
        %v3447 = vunpack.c.l.s8.bf16 %v2759
        %v3448 = vunpack.c.l.s8.bf16 %v2760
        %v3449 = vunpack.c.l.s8.bf16 %v2761
        %v3450 = vunpack.c.l.s8.bf16 %v2762
        %v3451 = vunpack.c.l.s8.bf16 %v2763
        %v3452 = vunpack.c.l.s8.bf16 %v2764
        %v3453 = vunpack.c.l.s8.bf16 %v2765
        %v3454 = vunpack.c.l.s8.bf16 %v2766
        %v3455 = vunpack.c.l.s8.bf16 %v2767
        %v3456 = vunpack.c.l.s8.bf16 %v2768
        %v3457 = vunpack.c.l.s8.bf16 %v2769
        %v3458 = vunpack.c.l.s8.bf16 %v2770
        %v3459 = vunpack.c.l.s8.bf16 %v2771
        %v3460 = vunpack.c.l.s8.bf16 %v2772
        %v3461 = vunpack.c.l.s8.bf16 %v2773
        %v3462 = vunpack.c.l.s8.bf16 %v2774
        %v3463 = vunpack.c.h.s8.bf16 %v2759
        %v3464 = vunpack.c.h.s8.bf16 %v2760
        %v3465 = vunpack.c.h.s8.bf16 %v2761
        %v3466 = vunpack.c.h.s8.bf16 %v2762
        %v3467 = vunpack.c.h.s8.bf16 %v2763
        %v3468 = vunpack.c.h.s8.bf16 %v2764
        %v3469 = vunpack.c.h.s8.bf16 %v2765
        %v3470 = vunpack.c.h.s8.bf16 %v2766
        %v3471 = vunpack.c.h.s8.bf16 %v2767
        %v3472 = vunpack.c.h.s8.bf16 %v2768
        %v3473 = vunpack.c.h.s8.bf16 %v2769
        %v3474 = vunpack.c.h.s8.bf16 %v2770
        %v3475 = vunpack.c.h.s8.bf16 %v2771
        %v3476 = vunpack.c.h.s8.bf16 %v2772
        %v3477 = vunpack.c.h.s8.bf16 %v2773
        %v3478 = vunpack.c.h.s8.bf16 %v2774
        %v3479 = vunpack.c.l.s8.bf16 %v2775
        %v3480 = vunpack.c.l.s8.bf16 %v2776
        %v3481 = vunpack.c.l.s8.bf16 %v2777
        %v3482 = vunpack.c.l.s8.bf16 %v2778
        %v3483 = vunpack.c.l.s8.bf16 %v2779
        %v3484 = vunpack.c.l.s8.bf16 %v2780
        %v3485 = vunpack.c.l.s8.bf16 %v2781
        %v3486 = vunpack.c.l.s8.bf16 %v2782
        %v3487 = vunpack.c.l.s8.bf16 %v2783
        %v3488 = vunpack.c.l.s8.bf16 %v2784
        %v3489 = vunpack.c.l.s8.bf16 %v2785
        %v3490 = vunpack.c.l.s8.bf16 %v2786
        %v3491 = vunpack.c.l.s8.bf16 %v2787
        %v3492 = vunpack.c.l.s8.bf16 %v2788
        %v3493 = vunpack.c.l.s8.bf16 %v2789
        %v3494 = vunpack.c.l.s8.bf16 %v2790
        %v3495 = vunpack.c.h.s8.bf16 %v2775
        %v3496 = vunpack.c.h.s8.bf16 %v2776
        %v3497 = vunpack.c.h.s8.bf16 %v2777
        %v3498 = vunpack.c.h.s8.bf16 %v2778
        %v3499 = vunpack.c.h.s8.bf16 %v2779
        %v3500 = vunpack.c.h.s8.bf16 %v2780
        %v3501 = vunpack.c.h.s8.bf16 %v2781
        %v3502 = vunpack.c.h.s8.bf16 %v2782
        %v3503 = vunpack.c.h.s8.bf16 %v2783
        %v3504 = vunpack.c.h.s8.bf16 %v2784
        %v3505 = vunpack.c.h.s8.bf16 %v2785
        %v3506 = vunpack.c.h.s8.bf16 %v2786
        %v3507 = vunpack.c.h.s8.bf16 %v2787
        %v3508 = vunpack.c.h.s8.bf16 %v2788
        %v3509 = vunpack.c.h.s8.bf16 %v2789
        %v3510 = vunpack.c.h.s8.bf16 %v2790
        %v3511 = vunpack.c.l.s8.bf16 %v2791
        %v3512 = vunpack.c.l.s8.bf16 %v2792
        %v3513 = vunpack.c.l.s8.bf16 %v2793
        %v3514 = vunpack.c.l.s8.bf16 %v2794
        %v3515 = vunpack.c.l.s8.bf16 %v2795
        %v3516 = vunpack.c.l.s8.bf16 %v2796
        %v3517 = vunpack.c.l.s8.bf16 %v2797
        %v3518 = vunpack.c.l.s8.bf16 %v2798
        %v3519 = vunpack.c.l.s8.bf16 %v2799
        %v3520 = vunpack.c.l.s8.bf16 %v2800
        %v3521 = vunpack.c.l.s8.bf16 %v2801
        %v3522 = vunpack.c.l.s8.bf16 %v2802
        %v3523 = vunpack.c.l.s8.bf16 %v2803
        %v3524 = vunpack.c.l.s8.bf16 %v2804
        %v3525 = vunpack.c.l.s8.bf16 %v2805
        %v3526 = vunpack.c.l.s8.bf16 %v2806
        %v3527 = vunpack.c.h.s8.bf16 %v2791
        %v3528 = vunpack.c.h.s8.bf16 %v2792
        %v3529 = vunpack.c.h.s8.bf16 %v2793
        %v3530 = vunpack.c.h.s8.bf16 %v2794
        %v3531 = vunpack.c.h.s8.bf16 %v2795
        %v3532 = vunpack.c.h.s8.bf16 %v2796
        %v3533 = vunpack.c.h.s8.bf16 %v2797
        %v3534 = vunpack.c.h.s8.bf16 %v2798
        %v3535 = vunpack.c.h.s8.bf16 %v2799
        %v3536 = vunpack.c.h.s8.bf16 %v2800
        %v3537 = vunpack.c.h.s8.bf16 %v2801
        %v3538 = vunpack.c.h.s8.bf16 %v2802
        %v3539 = vunpack.c.h.s8.bf16 %v2803
        %v3540 = vunpack.c.h.s8.bf16 %v2804
        %v3541 = vunpack.c.h.s8.bf16 %v2805
        %v3542 = vunpack.c.h.s8.bf16 %v2806
        %v3543 = vunpack.c.l.s8.bf16 %v2807
        %v3544 = vunpack.c.l.s8.bf16 %v2808
        %v3545 = vunpack.c.l.s8.bf16 %v2809
        %v3546 = vunpack.c.l.s8.bf16 %v2810
        %v3547 = vunpack.c.l.s8.bf16 %v2811
        %v3548 = vunpack.c.l.s8.bf16 %v2812
        %v3549 = vunpack.c.l.s8.bf16 %v2813
        %v3550 = vunpack.c.l.s8.bf16 %v2814
        %v3551 = vunpack.c.l.s8.bf16 %v2815
        %v3552 = vunpack.c.l.s8.bf16 %v2816
        %v3553 = vunpack.c.l.s8.bf16 %v2817
        %v3554 = vunpack.c.l.s8.bf16 %v2818
        %v3555 = vunpack.c.l.s8.bf16 %v2819
        %v3556 = vunpack.c.l.s8.bf16 %v2820
        %v3557 = vunpack.c.l.s8.bf16 %v2821
        %v3558 = vunpack.c.l.s8.bf16 %v2822
        %v3559 = vunpack.c.h.s8.bf16 %v2807
        %v3560 = vunpack.c.h.s8.bf16 %v2808
        %v3561 = vunpack.c.h.s8.bf16 %v2809
        %v3562 = vunpack.c.h.s8.bf16 %v2810
        %v3563 = vunpack.c.h.s8.bf16 %v2811
        %v3564 = vunpack.c.h.s8.bf16 %v2812
        %v3565 = vunpack.c.h.s8.bf16 %v2813
        %v3566 = vunpack.c.h.s8.bf16 %v2814
        %v3567 = vunpack.c.h.s8.bf16 %v2815
        %v3568 = vunpack.c.h.s8.bf16 %v2816
        %v3569 = vunpack.c.h.s8.bf16 %v2817
        %v3570 = vunpack.c.h.s8.bf16 %v2818
        %v3571 = vunpack.c.h.s8.bf16 %v2819
        %v3572 = vunpack.c.h.s8.bf16 %v2820
        %v3573 = vunpack.c.h.s8.bf16 %v2821
        %v3574 = vunpack.c.h.s8.bf16 %v2822
        %v3575 = vunpack.c.l.s8.bf16 %v2823
        %v3576 = vunpack.c.l.s8.bf16 %v2824
        %v3577 = vunpack.c.l.s8.bf16 %v2825
        %v3578 = vunpack.c.l.s8.bf16 %v2826
        %v3579 = vunpack.c.l.s8.bf16 %v2827
        %v3580 = vunpack.c.l.s8.bf16 %v2828
        %v3581 = vunpack.c.l.s8.bf16 %v2829
        %v3582 = vunpack.c.l.s8.bf16 %v2830
        %v3583 = vunpack.c.l.s8.bf16 %v2831
        %v3584 = vunpack.c.l.s8.bf16 %v2832
        %v3585 = vunpack.c.l.s8.bf16 %v2833
        %v3586 = vunpack.c.l.s8.bf16 %v2834
        %v3587 = vunpack.c.l.s8.bf16 %v2835
        %v3588 = vunpack.c.l.s8.bf16 %v2836
        %v3589 = vunpack.c.l.s8.bf16 %v2837
        %v3590 = vunpack.c.l.s8.bf16 %v2838
        %v3591 = vunpack.c.h.s8.bf16 %v2823
        %v3592 = vunpack.c.h.s8.bf16 %v2824
        %v3593 = vunpack.c.h.s8.bf16 %v2825
        %v3594 = vunpack.c.h.s8.bf16 %v2826
        %v3595 = vunpack.c.h.s8.bf16 %v2827
        %v3596 = vunpack.c.h.s8.bf16 %v2828
        %v3597 = vunpack.c.h.s8.bf16 %v2829
        %v3598 = vunpack.c.h.s8.bf16 %v2830
        %v3599 = vunpack.c.h.s8.bf16 %v2831
        %v3600 = vunpack.c.h.s8.bf16 %v2832
        %v3601 = vunpack.c.h.s8.bf16 %v2833
        %v3602 = vunpack.c.h.s8.bf16 %v2834
        %v3603 = vunpack.c.h.s8.bf16 %v2835
        %v3604 = vunpack.c.h.s8.bf16 %v2836
        %v3605 = vunpack.c.h.s8.bf16 %v2837
        %v3606 = vunpack.c.h.s8.bf16 %v2838
        %v3607 = vpack.c.bf16 %v2449, %v2449
        %v3608 = vpack.c.bf16 %v2450, %v2450
        %v3609 = vpack.c.bf16 %v2451, %v2451
        %v3610 = vpack.c.bf16 %v2452, %v2452
        %v3611 = vpack.c.bf16 %v2453, %v2453
        %v3612 = vpack.c.bf16 %v2454, %v2454
        %3613 = vmatprep.subr.bf16.mxu0 %v2840
        %3614 = vmatpush1.bf16.msra.mxu0 %v2839
        %3615 = vmatprep.subr.bf16.mxu0 %v2856
        %3616 = vmatpush1.bf16.msra.mxu0 %v2855
        %3617 = vmatprep.subr.bf16.mxu0 %v2872
        %3618 = vmatpush1.bf16.msra.mxu0 %v2871
        %3619 = vmatprep.subr.bf16.mxu0 %v2888
        %3620 = vmatpush1.bf16.msra.mxu0 %v2887
        %3621 = vmatprep.subr.bf16.mxu0 %v2904
        %3622 = vmatpush1.bf16.msra.mxu0 %v2903
        %3623 = vmatprep.subr.bf16.mxu0 %v2920
        %3624 = vmatpush1.bf16.msra.mxu0 %v2919
        %3625 = vmatprep.subr.bf16.mxu0 %v2936
        %3626 = vmatpush1.bf16.msra.mxu0 %v2935
        %3627 = vmatprep.subr.bf16.mxu0 %v2952
        %3628 = vmatpush1.bf16.msra.mxu0 %v2951
        %3629 = vmatprep.subr.bf16.mxu0 %v2968
        %3630 = vmatpush1.bf16.msra.mxu0 %v2967
        %3631 = vmatprep.subr.bf16.mxu0 %v2984
        %3632 = vmatpush1.bf16.msra.mxu0 %v2983
        %3633 = vmatprep.subr.bf16.mxu0 %v3000
        %3634 = vmatpush1.bf16.msra.mxu0 %v2999
        %3635 = vmatprep.subr.bf16.mxu0 %v3016
        %3636 = vmatpush1.bf16.msra.mxu0 %v3015
        %3637 = vmatprep.subr.bf16.mxu0 %v3032
        %3638 = vmatpush1.bf16.msra.mxu0 %v3031
        %3639 = vmatprep.subr.bf16.mxu0 %v3048
        %3640 = vmatpush1.bf16.msra.mxu0 %v3047
        %3641 = vmatprep.subr.bf16.mxu0 %v3064
        %3642 = vmatpush1.bf16.msra.mxu0 %v3063
        %3643 = vmatprep.subr.bf16.mxu0 %v3080
        %3644 = vmatpush1.bf16.msra.mxu0 %v3079
        %3645 = vmatprep.mubr.bf16.mxu0 %v3608
        %3646 = vmatmul.mubr.bf16.gmra.mrb[0].mxu0 %v3607
        %v3647 = vpop.f32.mrb[0].mxu0
        %v3648 = vadd.f32 0.0, %v3647
        %v3649 = vpop.f32.mrb[0].mxu0
        %v3650 = vadd.f32 0.0, %v3649
        %v3651 = vpop.f32.mrb[0].mxu0
        %v3652 = vpop.f32.mrb[0].mxu0
        %3653 = vdwg.mxu0
        %3654 = vmatprep.subr.bf16.mxu0 %v3096
        %3655 = vmatpush1.bf16.msra.mxu0 %v3095
        %3656 = vmatprep.subr.bf16.mxu0 %v3112
        %3657 = vmatpush1.bf16.msra.mxu0 %v3111
        %3658 = vmatprep.subr.bf16.mxu0 %v3128
        %3659 = vmatpush1.bf16.msra.mxu0 %v3127
        %3660 = vmatprep.subr.bf16.mxu0 %v3144
        %3661 = vmatpush1.bf16.msra.mxu0 %v3143
        %3662 = vmatprep.subr.bf16.mxu0 %v3160
        %3663 = vmatpush1.bf16.msra.mxu0 %v3159
        %3664 = vmatprep.subr.bf16.mxu0 %v3176
        %3665 = vmatpush1.bf16.msra.mxu0 %v3175
        %3666 = vmatprep.subr.bf16.mxu0 %v3192
        %3667 = vmatpush1.bf16.msra.mxu0 %v3191
        %3668 = vmatprep.subr.bf16.mxu0 %v3208
        %3669 = vmatpush1.bf16.msra.mxu0 %v3207
        %3670 = vmatprep.subr.bf16.mxu0 %v3224
        %3671 = vmatpush1.bf16.msra.mxu0 %v3223
        %3672 = vmatprep.subr.bf16.mxu0 %v3240
        %3673 = vmatpush1.bf16.msra.mxu0 %v3239
        %3674 = vmatprep.subr.bf16.mxu0 %v3256
        %3675 = vmatpush1.bf16.msra.mxu0 %v3255
        %3676 = vmatprep.subr.bf16.mxu0 %v3272
        %3677 = vmatpush1.bf16.msra.mxu0 %v3271
        %3678 = vmatprep.subr.bf16.mxu0 %v3288
        %3679 = vmatpush1.bf16.msra.mxu0 %v3287
        %3680 = vmatprep.subr.bf16.mxu0 %v3304
        %3681 = vmatpush1.bf16.msra.mxu0 %v3303
        %3682 = vmatprep.subr.bf16.mxu0 %v3320
        %3683 = vmatpush1.bf16.msra.mxu0 %v3319
        %3684 = vmatprep.subr.bf16.mxu0 %v3336
        %3685 = vmatpush1.bf16.msra.mxu0 %v3335
        %3686 = vmatprep.mubr.bf16.mxu0 %v3610
        %3687 = vmatmul.mubr.bf16.gmra.mrb[0].mxu0 %v3609
        %v3688 = vpop.f32.mrb[0].mxu0
        %v3689 = vadd.f32 %v3648, %v3688
        %v3690 = vpop.f32.mrb[0].mxu0
        %v3691 = vadd.f32 %v3650, %v3690
        %v3692 = vpop.f32.mrb[0].mxu0
        %v3693 = vpop.f32.mrb[0].mxu0
        %3694 = vdwg.mxu0
        %3695 = vmatprep.subr.bf16.mxu0 %v3352
        %3696 = vmatpush1.bf16.msra.mxu0 %v3351
        %3697 = vmatprep.subr.bf16.mxu0 %v3368
        %3698 = vmatpush1.bf16.msra.mxu0 %v3367
        %3699 = vmatprep.subr.bf16.mxu0 %v3384
        %3700 = vmatpush1.bf16.msra.mxu0 %v3383
        %3701 = vmatprep.subr.bf16.mxu0 %v3400
        %3702 = vmatpush1.bf16.msra.mxu0 %v3399
        %3703 = vmatprep.subr.bf16.mxu0 %v3416
        %3704 = vmatpush1.bf16.msra.mxu0 %v3415
        %3705 = vmatprep.subr.bf16.mxu0 %v3432
        %3706 = vmatpush1.bf16.msra.mxu0 %v3431
        %3707 = vmatprep.subr.bf16.mxu0 %v3448
        %3708 = vmatpush1.bf16.msra.mxu0 %v3447
        %3709 = vmatprep.subr.bf16.mxu0 %v3464
        %3710 = vmatpush1.bf16.msra.mxu0 %v3463
        %3711 = vmatprep.subr.bf16.mxu0 %v3480
        %3712 = vmatpush1.bf16.msra.mxu0 %v3479
        %3713 = vmatprep.subr.bf16.mxu0 %v3496
        %3714 = vmatpush1.bf16.msra.mxu0 %v3495
        %3715 = vmatprep.subr.bf16.mxu0 %v3512
        %3716 = vmatpush1.bf16.msra.mxu0 %v3511
        %3717 = vmatprep.subr.bf16.mxu0 %v3528
        %3718 = vmatpush1.bf16.msra.mxu0 %v3527
        %3719 = vmatprep.subr.bf16.mxu0 %v3544
        %3720 = vmatpush1.bf16.msra.mxu0 %v3543
        %3721 = vmatprep.subr.bf16.mxu0 %v3560
        %3722 = vmatpush1.bf16.msra.mxu0 %v3559
        %3723 = vmatprep.subr.bf16.mxu0 %v3576
        %3724 = vmatpush1.bf16.msra.mxu0 %v3575
        %3725 = vmatprep.subr.bf16.mxu0 %v3592
        %3726 = vmatpush1.bf16.msra.mxu0 %v3591
        %3727 = vmatprep.mubr.bf16.mxu0 %v3612
        %3728 = vmatmul.mubr.bf16.gmra.mrb[0].mxu0 %v3611
        %v3729 = vpop.f32.mrb[0].mxu0
        %v3730 = vadd.f32 %v3689, %v3729
        %v3731 = vpop.f32.mrb[0].mxu0
        %v3732 = vadd.f32 %v3691, %v3731
        %v3733 = vpop.f32.mrb[0].mxu0
        %v3734 = vpop.f32.mrb[0].mxu0
        %3735 = vdwg.mxu0
        %3736 = vmatprep.subr.bf16.mxu0 %v2842
        %3737 = vmatpush1.bf16.msra.mxu0 %v2841
        %3738 = vmatprep.subr.bf16.mxu0 %v2858
        %3739 = vmatpush1.bf16.msra.mxu0 %v2857
        %3740 = vmatprep.subr.bf16.mxu0 %v2874
        %3741 = vmatpush1.bf16.msra.mxu0 %v2873
        %3742 = vmatprep.subr.bf16.mxu0 %v2890
        %3743 = vmatpush1.bf16.msra.mxu0 %v2889
        %3744 = vmatprep.subr.bf16.mxu0 %v2906
        %3745 = vmatpush1.bf16.msra.mxu0 %v2905
        %3746 = vmatprep.subr.bf16.mxu0 %v2922
        %3747 = vmatpush1.bf16.msra.mxu0 %v2921
        %3748 = vmatprep.subr.bf16.mxu0 %v2938
        %3749 = vmatpush1.bf16.msra.mxu0 %v2937
        %3750 = vmatprep.subr.bf16.mxu0 %v2954
        %3751 = vmatpush1.bf16.msra.mxu0 %v2953
        %3752 = vmatprep.subr.bf16.mxu0 %v2970
        %3753 = vmatpush1.bf16.msra.mxu0 %v2969
        %3754 = vmatprep.subr.bf16.mxu0 %v2986
        %3755 = vmatpush1.bf16.msra.mxu0 %v2985
        %3756 = vmatprep.subr.bf16.mxu0 %v3002
        %3757 = vmatpush1.bf16.msra.mxu0 %v3001
        %3758 = vmatprep.subr.bf16.mxu0 %v3018
        %3759 = vmatpush1.bf16.msra.mxu0 %v3017
        %3760 = vmatprep.subr.bf16.mxu0 %v3034
        %3761 = vmatpush1.bf16.msra.mxu0 %v3033
        %3762 = vmatprep.subr.bf16.mxu0 %v3050
        %3763 = vmatpush1.bf16.msra.mxu0 %v3049
        %3764 = vmatprep.subr.bf16.mxu0 %v3066
        %3765 = vmatpush1.bf16.msra.mxu0 %v3065
        %3766 = vmatprep.subr.bf16.mxu0 %v3082
        %3767 = vmatpush1.bf16.msra.mxu0 %v3081
        %3768 = vmatprep.mubr.bf16.mxu0 %v3608
        %3769 = vmatmul.mubr.bf16.gmra.mrb[0].mxu0 %v3607
        %v3770 = vpop.f32.mrb[0].mxu0
        %v3771 = vadd.f32 0.0, %v3770
        %v3772 = vpop.f32.mrb[0].mxu0
        %v3773 = vadd.f32 0.0, %v3772
        %v3774 = vpop.f32.mrb[0].mxu0
        %v3775 = vpop.f32.mrb[0].mxu0
        %3776 = vdwg.mxu0
        %3777 = vmatprep.subr.bf16.mxu0 %v3098
        %3778 = vmatpush1.bf16.msra.mxu0 %v3097
        %3779 = vmatprep.subr.bf16.mxu0 %v3114
        %3780 = vmatpush1.bf16.msra.mxu0 %v3113
        %3781 = vmatprep.subr.bf16.mxu0 %v3130
        %3782 = vmatpush1.bf16.msra.mxu0 %v3129
        %3783 = vmatprep.subr.bf16.mxu0 %v3146
        %3784 = vmatpush1.bf16.msra.mxu0 %v3145
        %3785 = vmatprep.subr.bf16.mxu0 %v3162
        %3786 = vmatpush1.bf16.msra.mxu0 %v3161
        %3787 = vmatprep.subr.bf16.mxu0 %v3178
        %3788 = vmatpush1.bf16.msra.mxu0 %v3177
        %3789 = vmatprep.subr.bf16.mxu0 %v3194
        %3790 = vmatpush1.bf16.msra.mxu0 %v3193
        %3791 = vmatprep.subr.bf16.mxu0 %v3210
        %3792 = vmatpush1.bf16.msra.mxu0 %v3209
        %3793 = vmatprep.subr.bf16.mxu0 %v3226
        %3794 = vmatpush1.bf16.msra.mxu0 %v3225
        %3795 = vmatprep.subr.bf16.mxu0 %v3242
        %3796 = vmatpush1.bf16.msra.mxu0 %v3241
        %3797 = vmatprep.subr.bf16.mxu0 %v3258
        %3798 = vmatpush1.bf16.msra.mxu0 %v3257
        %3799 = vmatprep.subr.bf16.mxu0 %v3274
        %3800 = vmatpush1.bf16.msra.mxu0 %v3273
        %3801 = vmatprep.subr.bf16.mxu0 %v3290
        %3802 = vmatpush1.bf16.msra.mxu0 %v3289
        %3803 = vmatprep.subr.bf16.mxu0 %v3306
        %3804 = vmatpush1.bf16.msra.mxu0 %v3305
        %3805 = vmatprep.subr.bf16.mxu0 %v3322
        %3806 = vmatpush1.bf16.msra.mxu0 %v3321
        %3807 = vmatprep.subr.bf16.mxu0 %v3338
        %3808 = vmatpush1.bf16.msra.mxu0 %v3337
        %3809 = vmatprep.mubr.bf16.mxu0 %v3610
        %3810 = vmatmul.mubr.bf16.gmra.mrb[0].mxu0 %v3609
        %v3811 = vpop.f32.mrb[0].mxu0
        %v3812 = vadd.f32 %v3771, %v3811
        %v3813 = vpop.f32.mrb[0].mxu0
        %v3814 = vadd.f32 %v3773, %v3813
        %v3815 = vpop.f32.mrb[0].mxu0
        %v3816 = vpop.f32.mrb[0].mxu0
        %3817 = vdwg.mxu0
        %3818 = vmatprep.subr.bf16.mxu0 %v3354
        %3819 = vmatpush1.bf16.msra.mxu0 %v3353
        %3820 = vmatprep.subr.bf16.mxu0 %v3370
        %3821 = vmatpush1.bf16.msra.mxu0 %v3369
        %3822 = vmatprep.subr.bf16.mxu0 %v3386
        %3823 = vmatpush1.bf16.msra.mxu0 %v3385
        %3824 = vmatprep.subr.bf16.mxu0 %v3402
        %3825 = vmatpush1.bf16.msra.mxu0 %v3401
        %3826 = vmatprep.subr.bf16.mxu0 %v3418
        %3827 = vmatpush1.bf16.msra.mxu0 %v3417
        %3828 = vmatprep.subr.bf16.mxu0 %v3434
        %3829 = vmatpush1.bf16.msra.mxu0 %v3433
        %3830 = vmatprep.subr.bf16.mxu0 %v3450
        %3831 = vmatpush1.bf16.msra.mxu0 %v3449
        %3832 = vmatprep.subr.bf16.mxu0 %v3466
        %3833 = vmatpush1.bf16.msra.mxu0 %v3465
        %3834 = vmatprep.subr.bf16.mxu0 %v3482
        %3835 = vmatpush1.bf16.msra.mxu0 %v3481
        %3836 = vmatprep.subr.bf16.mxu0 %v3498
        %3837 = vmatpush1.bf16.msra.mxu0 %v3497
        %3838 = vmatprep.subr.bf16.mxu0 %v3514
        %3839 = vmatpush1.bf16.msra.mxu0 %v3513
        %3840 = vmatprep.subr.bf16.mxu0 %v3530
        %3841 = vmatpush1.bf16.msra.mxu0 %v3529
        %3842 = vmatprep.subr.bf16.mxu0 %v3546
        %3843 = vmatpush1.bf16.msra.mxu0 %v3545
        %3844 = vmatprep.subr.bf16.mxu0 %v3562
        %3845 = vmatpush1.bf16.msra.mxu0 %v3561
        %3846 = vmatprep.subr.bf16.mxu0 %v3578
        %3847 = vmatpush1.bf16.msra.mxu0 %v3577
        %3848 = vmatprep.subr.bf16.mxu0 %v3594
        %3849 = vmatpush1.bf16.msra.mxu0 %v3593
        %3850 = vmatprep.mubr.bf16.mxu0 %v3612
        %3851 = vmatmul.mubr.bf16.gmra.mrb[0].mxu0 %v3611
        %v3852 = vpop.f32.mrb[0].mxu0
        %v3853 = vadd.f32 %v3812, %v3852
        %v3854 = vpop.f32.mrb[0].mxu0
        %v3855 = vadd.f32 %v3814, %v3854
        %v3856 = vpop.f32.mrb[0].mxu0
        %v3857 = vpop.f32.mrb[0].mxu0
        %3858 = vdwg.mxu0
        %3859 = vmatprep.subr.bf16.mxu0 %v2844
        %3860 = vmatpush1.bf16.msra.mxu0 %v2843
        %3861 = vmatprep.subr.bf16.mxu0 %v2860
        %3862 = vmatpush1.bf16.msra.mxu0 %v2859
        %3863 = vmatprep.subr.bf16.mxu0 %v2876
        %3864 = vmatpush1.bf16.msra.mxu0 %v2875
        %3865 = vmatprep.subr.bf16.mxu0 %v2892
        %3866 = vmatpush1.bf16.msra.mxu0 %v2891
        %3867 = vmatprep.subr.bf16.mxu0 %v2908
        %3868 = vmatpush1.bf16.msra.mxu0 %v2907
        %3869 = vmatprep.subr.bf16.mxu0 %v2924
        %3870 = vmatpush1.bf16.msra.mxu0 %v2923
        %3871 = vmatprep.subr.bf16.mxu0 %v2940
        %3872 = vmatpush1.bf16.msra.mxu0 %v2939
        %3873 = vmatprep.subr.bf16.mxu0 %v2956
        %3874 = vmatpush1.bf16.msra.mxu0 %v2955
        %3875 = vmatprep.subr.bf16.mxu0 %v2972
        %3876 = vmatpush1.bf16.msra.mxu0 %v2971
        %3877 = vmatprep.subr.bf16.mxu0 %v2988
        %3878 = vmatpush1.bf16.msra.mxu0 %v2987
        %3879 = vmatprep.subr.bf16.mxu0 %v3004
        %3880 = vmatpush1.bf16.msra.mxu0 %v3003
        %3881 = vmatprep.subr.bf16.mxu0 %v3020
        %3882 = vmatpush1.bf16.msra.mxu0 %v3019
        %3883 = vmatprep.subr.bf16.mxu0 %v3036
        %3884 = vmatpush1.bf16.msra.mxu0 %v3035
        %3885 = vmatprep.subr.bf16.mxu0 %v3052
        %3886 = vmatpush1.bf16.msra.mxu0 %v3051
        %3887 = vmatprep.subr.bf16.mxu0 %v3068
        %3888 = vmatpush1.bf16.msra.mxu0 %v3067
        %3889 = vmatprep.subr.bf16.mxu0 %v3084
        %3890 = vmatpush1.bf16.msra.mxu0 %v3083
        %3891 = vmatprep.mubr.bf16.mxu0 %v3608
        %3892 = vmatmul.mubr.bf16.gmra.mrb[0].mxu0 %v3607
        %v3893 = vpop.f32.mrb[0].mxu0
        %v3894 = vadd.f32 0.0, %v3893
        %v3895 = vpop.f32.mrb[0].mxu0
        %v3896 = vadd.f32 0.0, %v3895
        %v3897 = vpop.f32.mrb[0].mxu0
        %v3898 = vpop.f32.mrb[0].mxu0
        %3899 = vdwg.mxu0
        %3900 = vmatprep.subr.bf16.mxu0 %v3100
        %3901 = vmatpush1.bf16.msra.mxu0 %v3099
        %3902 = vmatprep.subr.bf16.mxu0 %v3116
        %3903 = vmatpush1.bf16.msra.mxu0 %v3115
        %3904 = vmatprep.subr.bf16.mxu0 %v3132
        %3905 = vmatpush1.bf16.msra.mxu0 %v3131
        %3906 = vmatprep.subr.bf16.mxu0 %v3148
        %3907 = vmatpush1.bf16.msra.mxu0 %v3147
        %3908 = vmatprep.subr.bf16.mxu0 %v3164
        %3909 = vmatpush1.bf16.msra.mxu0 %v3163
        %3910 = vmatprep.subr.bf16.mxu0 %v3180
        %3911 = vmatpush1.bf16.msra.mxu0 %v3179
        %3912 = vmatprep.subr.bf16.mxu0 %v3196
        %3913 = vmatpush1.bf16.msra.mxu0 %v3195
        %3914 = vmatprep.subr.bf16.mxu0 %v3212
        %3915 = vmatpush1.bf16.msra.mxu0 %v3211
        %3916 = vmatprep.subr.bf16.mxu0 %v3228
        %3917 = vmatpush1.bf16.msra.mxu0 %v3227
        %3918 = vmatprep.subr.bf16.mxu0 %v3244
        %3919 = vmatpush1.bf16.msra.mxu0 %v3243
        %3920 = vmatprep.subr.bf16.mxu0 %v3260
        %3921 = vmatpush1.bf16.msra.mxu0 %v3259
        %3922 = vmatprep.subr.bf16.mxu0 %v3276
        %3923 = vmatpush1.bf16.msra.mxu0 %v3275
        %3924 = vmatprep.subr.bf16.mxu0 %v3292
        %3925 = vmatpush1.bf16.msra.mxu0 %v3291
        %3926 = vmatprep.subr.bf16.mxu0 %v3308
        %3927 = vmatpush1.bf16.msra.mxu0 %v3307
        %3928 = vmatprep.subr.bf16.mxu0 %v3324
        %3929 = vmatpush1.bf16.msra.mxu0 %v3323
        %3930 = vmatprep.subr.bf16.mxu0 %v3340
        %3931 = vmatpush1.bf16.msra.mxu0 %v3339
        %3932 = vmatprep.mubr.bf16.mxu0 %v3610
        %3933 = vmatmul.mubr.bf16.gmra.mrb[0].mxu0 %v3609
        %v3934 = vpop.f32.mrb[0].mxu0
        %v3935 = vadd.f32 %v3894, %v3934
        %v3936 = vpop.f32.mrb[0].mxu0
        %v3937 = vadd.f32 %v3896, %v3936
        %v3938 = vpop.f32.mrb[0].mxu0
        %v3939 = vpop.f32.mrb[0].mxu0
        %3940 = vdwg.mxu0
        %3941 = vmatprep.subr.bf16.mxu0 %v3356
        %3942 = vmatpush1.bf16.msra.mxu0 %v3355
        %3943 = vmatprep.subr.bf16.mxu0 %v3372
        %3944 = vmatpush1.bf16.msra.mxu0 %v3371
        %3945 = vmatprep.subr.bf16.mxu0 %v3388
        %3946 = vmatpush1.bf16.msra.mxu0 %v3387
        %3947 = vmatprep.subr.bf16.mxu0 %v3404
        %3948 = vmatpush1.bf16.msra.mxu0 %v3403
        %3949 = vmatprep.subr.bf16.mxu0 %v3420
        %3950 = vmatpush1.bf16.msra.mxu0 %v3419
        %3951 = vmatprep.subr.bf16.mxu0 %v3436
        %3952 = vmatpush1.bf16.msra.mxu0 %v3435
        %3953 = vmatprep.subr.bf16.mxu0 %v3452
        %3954 = vmatpush1.bf16.msra.mxu0 %v3451
        %3955 = vmatprep.subr.bf16.mxu0 %v3468
        %3956 = vmatpush1.bf16.msra.mxu0 %v3467
        %3957 = vmatprep.subr.bf16.mxu0 %v3484
        %3958 = vmatpush1.bf16.msra.mxu0 %v3483
        %3959 = vmatprep.subr.bf16.mxu0 %v3500
        %3960 = vmatpush1.bf16.msra.mxu0 %v3499
        %3961 = vmatprep.subr.bf16.mxu0 %v3516
        %3962 = vmatpush1.bf16.msra.mxu0 %v3515
        %3963 = vmatprep.subr.bf16.mxu0 %v3532
        %3964 = vmatpush1.bf16.msra.mxu0 %v3531
        %3965 = vmatprep.subr.bf16.mxu0 %v3548
        %3966 = vmatpush1.bf16.msra.mxu0 %v3547
        %3967 = vmatprep.subr.bf16.mxu0 %v3564
        %3968 = vmatpush1.bf16.msra.mxu0 %v3563
        %3969 = vmatprep.subr.bf16.mxu0 %v3580
        %3970 = vmatpush1.bf16.msra.mxu0 %v3579
        %3971 = vmatprep.subr.bf16.mxu0 %v3596
        %3972 = vmatpush1.bf16.msra.mxu0 %v3595
        %3973 = vmatprep.mubr.bf16.mxu0 %v3612
        %3974 = vmatmul.mubr.bf16.gmra.mrb[0].mxu0 %v3611
        %v3975 = vpop.f32.mrb[0].mxu0
        %v3976 = vadd.f32 %v3935, %v3975
        %v3977 = vpop.f32.mrb[0].mxu0
        %v3978 = vadd.f32 %v3937, %v3977
        %v3979 = vpop.f32.mrb[0].mxu0
        %v3980 = vpop.f32.mrb[0].mxu0
        %3981 = vdwg.mxu0
        %3982 = vmatprep.subr.bf16.mxu0 %v2846
        %3983 = vmatpush1.bf16.msra.mxu0 %v2845
        %3984 = vmatprep.subr.bf16.mxu0 %v2862
        %3985 = vmatpush1.bf16.msra.mxu0 %v2861
        %3986 = vmatprep.subr.bf16.mxu0 %v2878
        %3987 = vmatpush1.bf16.msra.mxu0 %v2877
        %3988 = vmatprep.subr.bf16.mxu0 %v2894
        %3989 = vmatpush1.bf16.msra.mxu0 %v2893
        %3990 = vmatprep.subr.bf16.mxu0 %v2910
        %3991 = vmatpush1.bf16.msra.mxu0 %v2909
        %3992 = vmatprep.subr.bf16.mxu0 %v2926
        %3993 = vmatpush1.bf16.msra.mxu0 %v2925
        %3994 = vmatprep.subr.bf16.mxu0 %v2942
        %3995 = vmatpush1.bf16.msra.mxu0 %v2941
        %3996 = vmatprep.subr.bf16.mxu0 %v2958
        %3997 = vmatpush1.bf16.msra.mxu0 %v2957
        %3998 = vmatprep.subr.bf16.mxu0 %v2974
        %3999 = vmatpush1.bf16.msra.mxu0 %v2973
        %4000 = vmatprep.subr.bf16.mxu0 %v2990
        %4001 = vmatpush1.bf16.msra.mxu0 %v2989
        %4002 = vmatprep.subr.bf16.mxu0 %v3006
        %4003 = vmatpush1.bf16.msra.mxu0 %v3005
        %4004 = vmatprep.subr.bf16.mxu0 %v3022
        %4005 = vmatpush1.bf16.msra.mxu0 %v3021
        %4006 = vmatprep.subr.bf16.mxu0 %v3038
        %4007 = vmatpush1.bf16.msra.mxu0 %v3037
        %4008 = vmatprep.subr.bf16.mxu0 %v3054
        %4009 = vmatpush1.bf16.msra.mxu0 %v3053
        %4010 = vmatprep.subr.bf16.mxu0 %v3070
        %4011 = vmatpush1.bf16.msra.mxu0 %v3069
        %4012 = vmatprep.subr.bf16.mxu0 %v3086
        %4013 = vmatpush1.bf16.msra.mxu0 %v3085
        %4014 = vmatprep.mubr.bf16.mxu0 %v3608
        %4015 = vmatmul.mubr.bf16.gmra.mrb[0].mxu0 %v3607
        %v4016 = vpop.f32.mrb[0].mxu0
        %v4017 = vadd.f32 0.0, %v4016
        %v4018 = vpop.f32.mrb[0].mxu0
        %v4019 = vadd.f32 0.0, %v4018
        %v4020 = vpop.f32.mrb[0].mxu0
        %v4021 = vpop.f32.mrb[0].mxu0
        %4022 = vdwg.mxu0
        %4023 = vmatprep.subr.bf16.mxu0 %v3102
        %4024 = vmatpush1.bf16.msra.mxu0 %v3101
        %4025 = vmatprep.subr.bf16.mxu0 %v3118
        %4026 = vmatpush1.bf16.msra.mxu0 %v3117
        %4027 = vmatprep.subr.bf16.mxu0 %v3134
        %4028 = vmatpush1.bf16.msra.mxu0 %v3133
        %4029 = vmatprep.subr.bf16.mxu0 %v3150
        %4030 = vmatpush1.bf16.msra.mxu0 %v3149
        %4031 = vmatprep.subr.bf16.mxu0 %v3166
        %4032 = vmatpush1.bf16.msra.mxu0 %v3165
        %4033 = vmatprep.subr.bf16.mxu0 %v3182
        %4034 = vmatpush1.bf16.msra.mxu0 %v3181
        %4035 = vmatprep.subr.bf16.mxu0 %v3198
        %4036 = vmatpush1.bf16.msra.mxu0 %v3197
        %4037 = vmatprep.subr.bf16.mxu0 %v3214
        %4038 = vmatpush1.bf16.msra.mxu0 %v3213
        %4039 = vmatprep.subr.bf16.mxu0 %v3230
        %4040 = vmatpush1.bf16.msra.mxu0 %v3229
        %4041 = vmatprep.subr.bf16.mxu0 %v3246
        %4042 = vmatpush1.bf16.msra.mxu0 %v3245
        %4043 = vmatprep.subr.bf16.mxu0 %v3262
        %4044 = vmatpush1.bf16.msra.mxu0 %v3261
        %4045 = vmatprep.subr.bf16.mxu0 %v3278
        %4046 = vmatpush1.bf16.msra.mxu0 %v3277
        %4047 = vmatprep.subr.bf16.mxu0 %v3294
        %4048 = vmatpush1.bf16.msra.mxu0 %v3293
        %4049 = vmatprep.subr.bf16.mxu0 %v3310
        %4050 = vmatpush1.bf16.msra.mxu0 %v3309
        %4051 = vmatprep.subr.bf16.mxu0 %v3326
        %4052 = vmatpush1.bf16.msra.mxu0 %v3325
        %4053 = vmatprep.subr.bf16.mxu0 %v3342
        %4054 = vmatpush1.bf16.msra.mxu0 %v3341
        %4055 = vmatprep.mubr.bf16.mxu0 %v3610
        %4056 = vmatmul.mubr.bf16.gmra.mrb[0].mxu0 %v3609
        %v4057 = vpop.f32.mrb[0].mxu0
        %v4058 = vadd.f32 %v4017, %v4057
        %v4059 = vpop.f32.mrb[0].mxu0
        %v4060 = vadd.f32 %v4019, %v4059
        %v4061 = vpop.f32.mrb[0].mxu0
        %v4062 = vpop.f32.mrb[0].mxu0
        %4063 = vdwg.mxu0
        %4064 = vmatprep.subr.bf16.mxu0 %v3358
        %4065 = vmatpush1.bf16.msra.mxu0 %v3357
        %4066 = vmatprep.subr.bf16.mxu0 %v3374
        %4067 = vmatpush1.bf16.msra.mxu0 %v3373
        %4068 = vmatprep.subr.bf16.mxu0 %v3390
        %4069 = vmatpush1.bf16.msra.mxu0 %v3389
        %4070 = vmatprep.subr.bf16.mxu0 %v3406
        %4071 = vmatpush1.bf16.msra.mxu0 %v3405
        %4072 = vmatprep.subr.bf16.mxu0 %v3422
        %4073 = vmatpush1.bf16.msra.mxu0 %v3421
        %4074 = vmatprep.subr.bf16.mxu0 %v3438
        %4075 = vmatpush1.bf16.msra.mxu0 %v3437
        %4076 = vmatprep.subr.bf16.mxu0 %v3454
        %4077 = vmatpush1.bf16.msra.mxu0 %v3453
        %4078 = vmatprep.subr.bf16.mxu0 %v3470
        %4079 = vmatpush1.bf16.msra.mxu0 %v3469
        %4080 = vmatprep.subr.bf16.mxu0 %v3486
        %4081 = vmatpush1.bf16.msra.mxu0 %v3485
        %4082 = vmatprep.subr.bf16.mxu0 %v3502
        %4083 = vmatpush1.bf16.msra.mxu0 %v3501
        %4084 = vmatprep.subr.bf16.mxu0 %v3518
        %4085 = vmatpush1.bf16.msra.mxu0 %v3517
        %4086 = vmatprep.subr.bf16.mxu0 %v3534
        %4087 = vmatpush1.bf16.msra.mxu0 %v3533
        %4088 = vmatprep.subr.bf16.mxu0 %v3550
        %4089 = vmatpush1.bf16.msra.mxu0 %v3549
        %4090 = vmatprep.subr.bf16.mxu0 %v3566
        %4091 = vmatpush1.bf16.msra.mxu0 %v3565
        %4092 = vmatprep.subr.bf16.mxu0 %v3582
        %4093 = vmatpush1.bf16.msra.mxu0 %v3581
        %4094 = vmatprep.subr.bf16.mxu0 %v3598
        %4095 = vmatpush1.bf16.msra.mxu0 %v3597
        %4096 = vmatprep.mubr.bf16.mxu0 %v3612
        %4097 = vmatmul.mubr.bf16.gmra.mrb[0].mxu0 %v3611
        %v4098 = vpop.f32.mrb[0].mxu0
        %v4099 = vadd.f32 %v4058, %v4098
        %v4100 = vpop.f32.mrb[0].mxu0
        %v4101 = vadd.f32 %v4060, %v4100
        %v4102 = vpop.f32.mrb[0].mxu0
        %v4103 = vpop.f32.mrb[0].mxu0
        %4104 = vdwg.mxu0
        %4105 = vmatprep.subr.bf16.mxu0 %v2848
        %4106 = vmatpush1.bf16.msra.mxu0 %v2847
        %4107 = vmatprep.subr.bf16.mxu0 %v2864
        %4108 = vmatpush1.bf16.msra.mxu0 %v2863
        %4109 = vmatprep.subr.bf16.mxu0 %v2880
        %4110 = vmatpush1.bf16.msra.mxu0 %v2879
        %4111 = vmatprep.subr.bf16.mxu0 %v2896
        %4112 = vmatpush1.bf16.msra.mxu0 %v2895
        %4113 = vmatprep.subr.bf16.mxu0 %v2912
        %4114 = vmatpush1.bf16.msra.mxu0 %v2911
        %4115 = vmatprep.subr.bf16.mxu0 %v2928
        %4116 = vmatpush1.bf16.msra.mxu0 %v2927
        %4117 = vmatprep.subr.bf16.mxu0 %v2944
        %4118 = vmatpush1.bf16.msra.mxu0 %v2943
        %4119 = vmatprep.subr.bf16.mxu0 %v2960
        %4120 = vmatpush1.bf16.msra.mxu0 %v2959
        %4121 = vmatprep.subr.bf16.mxu0 %v2976
        %4122 = vmatpush1.bf16.msra.mxu0 %v2975
        %4123 = vmatprep.subr.bf16.mxu0 %v2992
        %4124 = vmatpush1.bf16.msra.mxu0 %v2991
        %4125 = vmatprep.subr.bf16.mxu0 %v3008
        %4126 = vmatpush1.bf16.msra.mxu0 %v3007
        %4127 = vmatprep.subr.bf16.mxu0 %v3024
        %4128 = vmatpush1.bf16.msra.mxu0 %v3023
        %4129 = vmatprep.subr.bf16.mxu0 %v3040
        %4130 = vmatpush1.bf16.msra.mxu0 %v3039
        %4131 = vmatprep.subr.bf16.mxu0 %v3056
        %4132 = vmatpush1.bf16.msra.mxu0 %v3055
        %4133 = vmatprep.subr.bf16.mxu0 %v3072
        %4134 = vmatpush1.bf16.msra.mxu0 %v3071
        %4135 = vmatprep.subr.bf16.mxu0 %v3088
        %4136 = vmatpush1.bf16.msra.mxu0 %v3087
        %4137 = vmatprep.mubr.bf16.mxu0 %v3608
        %4138 = vmatmul.mubr.bf16.gmra.mrb[0].mxu0 %v3607
        %v4139 = vpop.f32.mrb[0].mxu0
        %v4140 = vadd.f32 0.0, %v4139
        %v4141 = vpop.f32.mrb[0].mxu0
        %v4142 = vadd.f32 0.0, %v4141
        %v4143 = vpop.f32.mrb[0].mxu0
        %v4144 = vpop.f32.mrb[0].mxu0
        %4145 = vdwg.mxu0
        %4146 = vmatprep.subr.bf16.mxu0 %v3104
        %4147 = vmatpush1.bf16.msra.mxu0 %v3103
        %4148 = vmatprep.subr.bf16.mxu0 %v3120
        %4149 = vmatpush1.bf16.msra.mxu0 %v3119
        %4150 = vmatprep.subr.bf16.mxu0 %v3136
        %4151 = vmatpush1.bf16.msra.mxu0 %v3135
        %4152 = vmatprep.subr.bf16.mxu0 %v3152
        %4153 = vmatpush1.bf16.msra.mxu0 %v3151
        %4154 = vmatprep.subr.bf16.mxu0 %v3168
        %4155 = vmatpush1.bf16.msra.mxu0 %v3167
        %4156 = vmatprep.subr.bf16.mxu0 %v3184
        %4157 = vmatpush1.bf16.msra.mxu0 %v3183
        %4158 = vmatprep.subr.bf16.mxu0 %v3200
        %4159 = vmatpush1.bf16.msra.mxu0 %v3199
        %4160 = vmatprep.subr.bf16.mxu0 %v3216
        %4161 = vmatpush1.bf16.msra.mxu0 %v3215
        %4162 = vmatprep.subr.bf16.mxu0 %v3232
        %4163 = vmatpush1.bf16.msra.mxu0 %v3231
        %4164 = vmatprep.subr.bf16.mxu0 %v3248
        %4165 = vmatpush1.bf16.msra.mxu0 %v3247
        %4166 = vmatprep.subr.bf16.mxu0 %v3264
        %4167 = vmatpush1.bf16.msra.mxu0 %v3263
        %4168 = vmatprep.subr.bf16.mxu0 %v3280
        %4169 = vmatpush1.bf16.msra.mxu0 %v3279
        %4170 = vmatprep.subr.bf16.mxu0 %v3296
        %4171 = vmatpush1.bf16.msra.mxu0 %v3295
        %4172 = vmatprep.subr.bf16.mxu0 %v3312
        %4173 = vmatpush1.bf16.msra.mxu0 %v3311
        %4174 = vmatprep.subr.bf16.mxu0 %v3328
        %4175 = vmatpush1.bf16.msra.mxu0 %v3327
        %4176 = vmatprep.subr.bf16.mxu0 %v3344
        %4177 = vmatpush1.bf16.msra.mxu0 %v3343
        %4178 = vmatprep.mubr.bf16.mxu0 %v3610
        %4179 = vmatmul.mubr.bf16.gmra.mrb[0].mxu0 %v3609
        %v4180 = vpop.f32.mrb[0].mxu0
        %v4181 = vadd.f32 %v4140, %v4180
        %v4182 = vpop.f32.mrb[0].mxu0
        %v4183 = vadd.f32 %v4142, %v4182
        %v4184 = vpop.f32.mrb[0].mxu0
        %v4185 = vpop.f32.mrb[0].mxu0
        %4186 = vdwg.mxu0
        %4187 = vmatprep.subr.bf16.mxu0 %v3360
        %4188 = vmatpush1.bf16.msra.mxu0 %v3359
        %4189 = vmatprep.subr.bf16.mxu0 %v3376
        %4190 = vmatpush1.bf16.msra.mxu0 %v3375
        %4191 = vmatprep.subr.bf16.mxu0 %v3392
        %4192 = vmatpush1.bf16.msra.mxu0 %v3391
        %4193 = vmatprep.subr.bf16.mxu0 %v3408
        %4194 = vmatpush1.bf16.msra.mxu0 %v3407
        %4195 = vmatprep.subr.bf16.mxu0 %v3424
        %4196 = vmatpush1.bf16.msra.mxu0 %v3423
        %4197 = vmatprep.subr.bf16.mxu0 %v3440
        %4198 = vmatpush1.bf16.msra.mxu0 %v3439
        %4199 = vmatprep.subr.bf16.mxu0 %v3456
        %4200 = vmatpush1.bf16.msra.mxu0 %v3455
        %4201 = vmatprep.subr.bf16.mxu0 %v3472
        %4202 = vmatpush1.bf16.msra.mxu0 %v3471
        %4203 = vmatprep.subr.bf16.mxu0 %v3488
        %4204 = vmatpush1.bf16.msra.mxu0 %v3487
        %4205 = vmatprep.subr.bf16.mxu0 %v3504
        %4206 = vmatpush1.bf16.msra.mxu0 %v3503
        %4207 = vmatprep.subr.bf16.mxu0 %v3520
        %4208 = vmatpush1.bf16.msra.mxu0 %v3519
        %4209 = vmatprep.subr.bf16.mxu0 %v3536
        %4210 = vmatpush1.bf16.msra.mxu0 %v3535
        %4211 = vmatprep.subr.bf16.mxu0 %v3552
        %4212 = vmatpush1.bf16.msra.mxu0 %v3551
        %4213 = vmatprep.subr.bf16.mxu0 %v3568
        %4214 = vmatpush1.bf16.msra.mxu0 %v3567
        %4215 = vmatprep.subr.bf16.mxu0 %v3584
        %4216 = vmatpush1.bf16.msra.mxu0 %v3583
        %4217 = vmatprep.subr.bf16.mxu0 %v3600
        %4218 = vmatpush1.bf16.msra.mxu0 %v3599
        %4219 = vmatprep.mubr.bf16.mxu0 %v3612
        %4220 = vmatmul.mubr.bf16.gmra.mrb[0].mxu0 %v3611
        %v4221 = vpop.f32.mrb[0].mxu0
        %v4222 = vadd.f32 %v4181, %v4221
        %v4223 = vpop.f32.mrb[0].mxu0
        %v4224 = vadd.f32 %v4183, %v4223
        %v4225 = vpop.f32.mrb[0].mxu0
        %v4226 = vpop.f32.mrb[0].mxu0
        %4227 = vdwg.mxu0
        %4228 = vmatprep.subr.bf16.mxu0 %v2850
        %4229 = vmatpush1.bf16.msra.mxu0 %v2849
        %4230 = vmatprep.subr.bf16.mxu0 %v2866
        %4231 = vmatpush1.bf16.msra.mxu0 %v2865
        %4232 = vmatprep.subr.bf16.mxu0 %v2882
        %4233 = vmatpush1.bf16.msra.mxu0 %v2881
        %4234 = vmatprep.subr.bf16.mxu0 %v2898
        %4235 = vmatpush1.bf16.msra.mxu0 %v2897
        %4236 = vmatprep.subr.bf16.mxu0 %v2914
        %4237 = vmatpush1.bf16.msra.mxu0 %v2913
        %4238 = vmatprep.subr.bf16.mxu0 %v2930
        %4239 = vmatpush1.bf16.msra.mxu0 %v2929
        %4240 = vmatprep.subr.bf16.mxu0 %v2946
        %4241 = vmatpush1.bf16.msra.mxu0 %v2945
        %4242 = vmatprep.subr.bf16.mxu0 %v2962
        %4243 = vmatpush1.bf16.msra.mxu0 %v2961
        %4244 = vmatprep.subr.bf16.mxu0 %v2978
        %4245 = vmatpush1.bf16.msra.mxu0 %v2977
        %4246 = vmatprep.subr.bf16.mxu0 %v2994
        %4247 = vmatpush1.bf16.msra.mxu0 %v2993
        %4248 = vmatprep.subr.bf16.mxu0 %v3010
        %4249 = vmatpush1.bf16.msra.mxu0 %v3009
        %4250 = vmatprep.subr.bf16.mxu0 %v3026
        %4251 = vmatpush1.bf16.msra.mxu0 %v3025
        %4252 = vmatprep.subr.bf16.mxu0 %v3042
        %4253 = vmatpush1.bf16.msra.mxu0 %v3041
        %4254 = vmatprep.subr.bf16.mxu0 %v3058
        %4255 = vmatpush1.bf16.msra.mxu0 %v3057
        %4256 = vmatprep.subr.bf16.mxu0 %v3074
        %4257 = vmatpush1.bf16.msra.mxu0 %v3073
        %4258 = vmatprep.subr.bf16.mxu0 %v3090
        %4259 = vmatpush1.bf16.msra.mxu0 %v3089
        %4260 = vmatprep.mubr.bf16.mxu0 %v3608
        %4261 = vmatmul.mubr.bf16.gmra.mrb[0].mxu0 %v3607
        %v4262 = vpop.f32.mrb[0].mxu0
        %v4263 = vadd.f32 0.0, %v4262
        %v4264 = vpop.f32.mrb[0].mxu0
        %v4265 = vadd.f32 0.0, %v4264
        %v4266 = vpop.f32.mrb[0].mxu0
        %v4267 = vpop.f32.mrb[0].mxu0
        %4268 = vdwg.mxu0
        %4269 = vmatprep.subr.bf16.mxu0 %v3106
        %4270 = vmatpush1.bf16.msra.mxu0 %v3105
        %4271 = vmatprep.subr.bf16.mxu0 %v3122
        %4272 = vmatpush1.bf16.msra.mxu0 %v3121
        %4273 = vmatprep.subr.bf16.mxu0 %v3138
        %4274 = vmatpush1.bf16.msra.mxu0 %v3137
        %4275 = vmatprep.subr.bf16.mxu0 %v3154
        %4276 = vmatpush1.bf16.msra.mxu0 %v3153
        %4277 = vmatprep.subr.bf16.mxu0 %v3170
        %4278 = vmatpush1.bf16.msra.mxu0 %v3169
        %4279 = vmatprep.subr.bf16.mxu0 %v3186
        %4280 = vmatpush1.bf16.msra.mxu0 %v3185
        %4281 = vmatprep.subr.bf16.mxu0 %v3202
        %4282 = vmatpush1.bf16.msra.mxu0 %v3201
        %4283 = vmatprep.subr.bf16.mxu0 %v3218
        %4284 = vmatpush1.bf16.msra.mxu0 %v3217
        %4285 = vmatprep.subr.bf16.mxu0 %v3234
        %4286 = vmatpush1.bf16.msra.mxu0 %v3233
        %4287 = vmatprep.subr.bf16.mxu0 %v3250
        %4288 = vmatpush1.bf16.msra.mxu0 %v3249
        %4289 = vmatprep.subr.bf16.mxu0 %v3266
        %4290 = vmatpush1.bf16.msra.mxu0 %v3265
        %4291 = vmatprep.subr.bf16.mxu0 %v3282
        %4292 = vmatpush1.bf16.msra.mxu0 %v3281
        %4293 = vmatprep.subr.bf16.mxu0 %v3298
        %4294 = vmatpush1.bf16.msra.mxu0 %v3297
        %4295 = vmatprep.subr.bf16.mxu0 %v3314
        %4296 = vmatpush1.bf16.msra.mxu0 %v3313
        %4297 = vmatprep.subr.bf16.mxu0 %v3330
        %4298 = vmatpush1.bf16.msra.mxu0 %v3329
        %4299 = vmatprep.subr.bf16.mxu0 %v3346
        %4300 = vmatpush1.bf16.msra.mxu0 %v3345
        %4301 = vmatprep.mubr.bf16.mxu0 %v3610
        %4302 = vmatmul.mubr.bf16.gmra.mrb[0].mxu0 %v3609
        %v4303 = vpop.f32.mrb[0].mxu0
        %v4304 = vadd.f32 %v4263, %v4303
        %v4305 = vpop.f32.mrb[0].mxu0
        %v4306 = vadd.f32 %v4265, %v4305
        %v4307 = vpop.f32.mrb[0].mxu0
        %v4308 = vpop.f32.mrb[0].mxu0
        %4309 = vdwg.mxu0
        %4310 = vmatprep.subr.bf16.mxu0 %v3362
        %4311 = vmatpush1.bf16.msra.mxu0 %v3361
        %4312 = vmatprep.subr.bf16.mxu0 %v3378
        %4313 = vmatpush1.bf16.msra.mxu0 %v3377
        %4314 = vmatprep.subr.bf16.mxu0 %v3394
        %4315 = vmatpush1.bf16.msra.mxu0 %v3393
        %4316 = vmatprep.subr.bf16.mxu0 %v3410
        %4317 = vmatpush1.bf16.msra.mxu0 %v3409
        %4318 = vmatprep.subr.bf16.mxu0 %v3426
        %4319 = vmatpush1.bf16.msra.mxu0 %v3425
        %4320 = vmatprep.subr.bf16.mxu0 %v3442
        %4321 = vmatpush1.bf16.msra.mxu0 %v3441
        %4322 = vmatprep.subr.bf16.mxu0 %v3458
        %4323 = vmatpush1.bf16.msra.mxu0 %v3457
        %4324 = vmatprep.subr.bf16.mxu0 %v3474
        %4325 = vmatpush1.bf16.msra.mxu0 %v3473
        %4326 = vmatprep.subr.bf16.mxu0 %v3490
        %4327 = vmatpush1.bf16.msra.mxu0 %v3489
        %4328 = vmatprep.subr.bf16.mxu0 %v3506
        %4329 = vmatpush1.bf16.msra.mxu0 %v3505
        %4330 = vmatprep.subr.bf16.mxu0 %v3522
        %4331 = vmatpush1.bf16.msra.mxu0 %v3521
        %4332 = vmatprep.subr.bf16.mxu0 %v3538
        %4333 = vmatpush1.bf16.msra.mxu0 %v3537
        %4334 = vmatprep.subr.bf16.mxu0 %v3554
        %4335 = vmatpush1.bf16.msra.mxu0 %v3553
        %4336 = vmatprep.subr.bf16.mxu0 %v3570
        %4337 = vmatpush1.bf16.msra.mxu0 %v3569
        %4338 = vmatprep.subr.bf16.mxu0 %v3586
        %4339 = vmatpush1.bf16.msra.mxu0 %v3585
        %4340 = vmatprep.subr.bf16.mxu0 %v3602
        %4341 = vmatpush1.bf16.msra.mxu0 %v3601
        %4342 = vmatprep.mubr.bf16.mxu0 %v3612
        %4343 = vmatmul.mubr.bf16.gmra.mrb[0].mxu0 %v3611
        %v4344 = vpop.f32.mrb[0].mxu0
        %v4345 = vadd.f32 %v4304, %v4344
        %v4346 = vpop.f32.mrb[0].mxu0
        %v4347 = vadd.f32 %v4306, %v4346
        %v4348 = vpop.f32.mrb[0].mxu0
        %v4349 = vpop.f32.mrb[0].mxu0
        %4350 = vdwg.mxu0
        %4351 = vmatprep.subr.bf16.mxu0 %v2852
        %4352 = vmatpush1.bf16.msra.mxu0 %v2851
        %4353 = vmatprep.subr.bf16.mxu0 %v2868
        %4354 = vmatpush1.bf16.msra.mxu0 %v2867
        %4355 = vmatprep.subr.bf16.mxu0 %v2884
        %4356 = vmatpush1.bf16.msra.mxu0 %v2883
        %4357 = vmatprep.subr.bf16.mxu0 %v2900
        %4358 = vmatpush1.bf16.msra.mxu0 %v2899
        %4359 = vmatprep.subr.bf16.mxu0 %v2916
        %4360 = vmatpush1.bf16.msra.mxu0 %v2915
        %4361 = vmatprep.subr.bf16.mxu0 %v2932
        %4362 = vmatpush1.bf16.msra.mxu0 %v2931
        %4363 = vmatprep.subr.bf16.mxu0 %v2948
        %4364 = vmatpush1.bf16.msra.mxu0 %v2947
        %4365 = vmatprep.subr.bf16.mxu0 %v2964
        %4366 = vmatpush1.bf16.msra.mxu0 %v2963
        %4367 = vmatprep.subr.bf16.mxu0 %v2980
        %4368 = vmatpush1.bf16.msra.mxu0 %v2979
        %4369 = vmatprep.subr.bf16.mxu0 %v2996
        %4370 = vmatpush1.bf16.msra.mxu0 %v2995
        %4371 = vmatprep.subr.bf16.mxu0 %v3012
        %4372 = vmatpush1.bf16.msra.mxu0 %v3011
        %4373 = vmatprep.subr.bf16.mxu0 %v3028
        %4374 = vmatpush1.bf16.msra.mxu0 %v3027
        %4375 = vmatprep.subr.bf16.mxu0 %v3044
        %4376 = vmatpush1.bf16.msra.mxu0 %v3043
        %4377 = vmatprep.subr.bf16.mxu0 %v3060
        %4378 = vmatpush1.bf16.msra.mxu0 %v3059
        %4379 = vmatprep.subr.bf16.mxu0 %v3076
        %4380 = vmatpush1.bf16.msra.mxu0 %v3075
        %4381 = vmatprep.subr.bf16.mxu0 %v3092
        %4382 = vmatpush1.bf16.msra.mxu0 %v3091
        %4383 = vmatprep.mubr.bf16.mxu0 %v3608
        %4384 = vmatmul.mubr.bf16.gmra.mrb[0].mxu0 %v3607
        %v4385 = vpop.f32.mrb[0].mxu0
        %v4386 = vadd.f32 0.0, %v4385
        %v4387 = vpop.f32.mrb[0].mxu0
        %v4388 = vadd.f32 0.0, %v4387
        %v4389 = vpop.f32.mrb[0].mxu0
        %v4390 = vpop.f32.mrb[0].mxu0
        %4391 = vdwg.mxu0
        %4392 = vmatprep.subr.bf16.mxu0 %v3108
        %4393 = vmatpush1.bf16.msra.mxu0 %v3107
        %4394 = vmatprep.subr.bf16.mxu0 %v3124
        %4395 = vmatpush1.bf16.msra.mxu0 %v3123
        %4396 = vmatprep.subr.bf16.mxu0 %v3140
        %4397 = vmatpush1.bf16.msra.mxu0 %v3139
        %4398 = vmatprep.subr.bf16.mxu0 %v3156
        %4399 = vmatpush1.bf16.msra.mxu0 %v3155
        %4400 = vmatprep.subr.bf16.mxu0 %v3172
        %4401 = vmatpush1.bf16.msra.mxu0 %v3171
        %4402 = vmatprep.subr.bf16.mxu0 %v3188
        %4403 = vmatpush1.bf16.msra.mxu0 %v3187
        %4404 = vmatprep.subr.bf16.mxu0 %v3204
        %4405 = vmatpush1.bf16.msra.mxu0 %v3203
        %4406 = vmatprep.subr.bf16.mxu0 %v3220
        %4407 = vmatpush1.bf16.msra.mxu0 %v3219
        %4408 = vmatprep.subr.bf16.mxu0 %v3236
        %4409 = vmatpush1.bf16.msra.mxu0 %v3235
        %4410 = vmatprep.subr.bf16.mxu0 %v3252
        %4411 = vmatpush1.bf16.msra.mxu0 %v3251
        %4412 = vmatprep.subr.bf16.mxu0 %v3268
        %4413 = vmatpush1.bf16.msra.mxu0 %v3267
        %4414 = vmatprep.subr.bf16.mxu0 %v3284
        %4415 = vmatpush1.bf16.msra.mxu0 %v3283
        %4416 = vmatprep.subr.bf16.mxu0 %v3300
        %4417 = vmatpush1.bf16.msra.mxu0 %v3299
        %4418 = vmatprep.subr.bf16.mxu0 %v3316
        %4419 = vmatpush1.bf16.msra.mxu0 %v3315
        %4420 = vmatprep.subr.bf16.mxu0 %v3332
        %4421 = vmatpush1.bf16.msra.mxu0 %v3331
        %4422 = vmatprep.subr.bf16.mxu0 %v3348
        %4423 = vmatpush1.bf16.msra.mxu0 %v3347
        %4424 = vmatprep.mubr.bf16.mxu0 %v3610
        %4425 = vmatmul.mubr.bf16.gmra.mrb[0].mxu0 %v3609
        %v4426 = vpop.f32.mrb[0].mxu0
        %v4427 = vadd.f32 %v4386, %v4426
        %v4428 = vpop.f32.mrb[0].mxu0
        %v4429 = vadd.f32 %v4388, %v4428
        %v4430 = vpop.f32.mrb[0].mxu0
        %v4431 = vpop.f32.mrb[0].mxu0
        %4432 = vdwg.mxu0
        %4433 = vmatprep.subr.bf16.mxu0 %v3364
        %4434 = vmatpush1.bf16.msra.mxu0 %v3363
        %4435 = vmatprep.subr.bf16.mxu0 %v3380
        %4436 = vmatpush1.bf16.msra.mxu0 %v3379
        %4437 = vmatprep.subr.bf16.mxu0 %v3396
        %4438 = vmatpush1.bf16.msra.mxu0 %v3395
        %4439 = vmatprep.subr.bf16.mxu0 %v3412
        %4440 = vmatpush1.bf16.msra.mxu0 %v3411
        %4441 = vmatprep.subr.bf16.mxu0 %v3428
        %4442 = vmatpush1.bf16.msra.mxu0 %v3427
        %4443 = vmatprep.subr.bf16.mxu0 %v3444
        %4444 = vmatpush1.bf16.msra.mxu0 %v3443
        %4445 = vmatprep.subr.bf16.mxu0 %v3460
        %4446 = vmatpush1.bf16.msra.mxu0 %v3459
        %4447 = vmatprep.subr.bf16.mxu0 %v3476
        %4448 = vmatpush1.bf16.msra.mxu0 %v3475
        %4449 = vmatprep.subr.bf16.mxu0 %v3492
        %4450 = vmatpush1.bf16.msra.mxu0 %v3491
        %4451 = vmatprep.subr.bf16.mxu0 %v3508
        %4452 = vmatpush1.bf16.msra.mxu0 %v3507
        %4453 = vmatprep.subr.bf16.mxu0 %v3524
        %4454 = vmatpush1.bf16.msra.mxu0 %v3523
        %4455 = vmatprep.subr.bf16.mxu0 %v3540
        %4456 = vmatpush1.bf16.msra.mxu0 %v3539
        %4457 = vmatprep.subr.bf16.mxu0 %v3556
        %4458 = vmatpush1.bf16.msra.mxu0 %v3555
        %4459 = vmatprep.subr.bf16.mxu0 %v3572
        %4460 = vmatpush1.bf16.msra.mxu0 %v3571
        %4461 = vmatprep.subr.bf16.mxu0 %v3588
        %4462 = vmatpush1.bf16.msra.mxu0 %v3587
        %4463 = vmatprep.subr.bf16.mxu0 %v3604
        %4464 = vmatpush1.bf16.msra.mxu0 %v3603
        %4465 = vmatprep.mubr.bf16.mxu0 %v3612
        %4466 = vmatmul.mubr.bf16.gmra.mrb[0].mxu0 %v3611
        %v4467 = vpop.f32.mrb[0].mxu0
        %v4468 = vadd.f32 %v4427, %v4467
        %v4469 = vpop.f32.mrb[0].mxu0
        %v4470 = vadd.f32 %v4429, %v4469
        %v4471 = vpop.f32.mrb[0].mxu0
        %v4472 = vpop.f32.mrb[0].mxu0
        %4473 = vdwg.mxu0
        %4474 = vmatprep.subr.bf16.mxu0 %v2854
        %4475 = vmatpush1.bf16.msra.mxu0 %v2853
        %4476 = vmatprep.subr.bf16.mxu0 %v2870
        %4477 = vmatpush1.bf16.msra.mxu0 %v2869
        %4478 = vmatprep.subr.bf16.mxu0 %v2886
        %4479 = vmatpush1.bf16.msra.mxu0 %v2885
        %4480 = vmatprep.subr.bf16.mxu0 %v2902
        %4481 = vmatpush1.bf16.msra.mxu0 %v2901
        %4482 = vmatprep.subr.bf16.mxu0 %v2918
        %4483 = vmatpush1.bf16.msra.mxu0 %v2917
        %4484 = vmatprep.subr.bf16.mxu0 %v2934
        %4485 = vmatpush1.bf16.msra.mxu0 %v2933
        %4486 = vmatprep.subr.bf16.mxu0 %v2950
        %4487 = vmatpush1.bf16.msra.mxu0 %v2949
        %4488 = vmatprep.subr.bf16.mxu0 %v2966
        %4489 = vmatpush1.bf16.msra.mxu0 %v2965
        %4490 = vmatprep.subr.bf16.mxu0 %v2982
        %4491 = vmatpush1.bf16.msra.mxu0 %v2981
        %4492 = vmatprep.subr.bf16.mxu0 %v2998
        %4493 = vmatpush1.bf16.msra.mxu0 %v2997
        %4494 = vmatprep.subr.bf16.mxu0 %v3014
        %4495 = vmatpush1.bf16.msra.mxu0 %v3013
        %4496 = vmatprep.subr.bf16.mxu0 %v3030
        %4497 = vmatpush1.bf16.msra.mxu0 %v3029
        %4498 = vmatprep.subr.bf16.mxu0 %v3046
        %4499 = vmatpush1.bf16.msra.mxu0 %v3045
        %4500 = vmatprep.subr.bf16.mxu0 %v3062
        %4501 = vmatpush1.bf16.msra.mxu0 %v3061
        %4502 = vmatprep.subr.bf16.mxu0 %v3078
        %4503 = vmatpush1.bf16.msra.mxu0 %v3077
        %4504 = vmatprep.subr.bf16.mxu0 %v3094
        %4505 = vmatpush1.bf16.msra.mxu0 %v3093
        %4506 = vmatprep.mubr.bf16.mxu0 %v3608
        %4507 = vmatmul.mubr.bf16.gmra.mrb[0].mxu0 %v3607
        %v4508 = vpop.f32.mrb[0].mxu0
        %v4509 = vadd.f32 0.0, %v4508
        %v4510 = vpop.f32.mrb[0].mxu0
        %v4511 = vadd.f32 0.0, %v4510
        %v4512 = vpop.f32.mrb[0].mxu0
        %v4513 = vpop.f32.mrb[0].mxu0
        %4514 = vdwg.mxu0
        %4515 = vmatprep.subr.bf16.mxu0 %v3110
        %4516 = vmatpush1.bf16.msra.mxu0 %v3109
        %4517 = vmatprep.subr.bf16.mxu0 %v3126
        %4518 = vmatpush1.bf16.msra.mxu0 %v3125
        %4519 = vmatprep.subr.bf16.mxu0 %v3142
        %4520 = vmatpush1.bf16.msra.mxu0 %v3141
        %4521 = vmatprep.subr.bf16.mxu0 %v3158
        %4522 = vmatpush1.bf16.msra.mxu0 %v3157
        %4523 = vmatprep.subr.bf16.mxu0 %v3174
        %4524 = vmatpush1.bf16.msra.mxu0 %v3173
        %4525 = vmatprep.subr.bf16.mxu0 %v3190
        %4526 = vmatpush1.bf16.msra.mxu0 %v3189
        %4527 = vmatprep.subr.bf16.mxu0 %v3206
        %4528 = vmatpush1.bf16.msra.mxu0 %v3205
        %4529 = vmatprep.subr.bf16.mxu0 %v3222
        %4530 = vmatpush1.bf16.msra.mxu0 %v3221
        %4531 = vmatprep.subr.bf16.mxu0 %v3238
        %4532 = vmatpush1.bf16.msra.mxu0 %v3237
        %4533 = vmatprep.subr.bf16.mxu0 %v3254
        %4534 = vmatpush1.bf16.msra.mxu0 %v3253
        %4535 = vmatprep.subr.bf16.mxu0 %v3270
        %4536 = vmatpush1.bf16.msra.mxu0 %v3269
        %4537 = vmatprep.subr.bf16.mxu0 %v3286
        %4538 = vmatpush1.bf16.msra.mxu0 %v3285
        %4539 = vmatprep.subr.bf16.mxu0 %v3302
        %4540 = vmatpush1.bf16.msra.mxu0 %v3301
        %4541 = vmatprep.subr.bf16.mxu0 %v3318
        %4542 = vmatpush1.bf16.msra.mxu0 %v3317
        %4543 = vmatprep.subr.bf16.mxu0 %v3334
        %4544 = vmatpush1.bf16.msra.mxu0 %v3333
        %4545 = vmatprep.subr.bf16.mxu0 %v3350
        %4546 = vmatpush1.bf16.msra.mxu0 %v3349
        %4547 = vmatprep.mubr.bf16.mxu0 %v3610
        %4548 = vmatmul.mubr.bf16.gmra.mrb[0].mxu0 %v3609
        %v4549 = vpop.f32.mrb[0].mxu0
        %v4550 = vadd.f32 %v4509, %v4549
        %v4551 = vpop.f32.mrb[0].mxu0
        %v4552 = vadd.f32 %v4511, %v4551
        %v4553 = vpop.f32.mrb[0].mxu0
        %v4554 = vpop.f32.mrb[0].mxu0
        %4555 = vdwg.mxu0
        %4556 = vmatprep.subr.bf16.mxu0 %v3366
        %4557 = vmatpush1.bf16.msra.mxu0 %v3365
        %4558 = vmatprep.subr.bf16.mxu0 %v3382
        %4559 = vmatpush1.bf16.msra.mxu0 %v3381
        %4560 = vmatprep.subr.bf16.mxu0 %v3398
        %4561 = vmatpush1.bf16.msra.mxu0 %v3397
        %4562 = vmatprep.subr.bf16.mxu0 %v3414
        %4563 = vmatpush1.bf16.msra.mxu0 %v3413
        %4564 = vmatprep.subr.bf16.mxu0 %v3430
        %4565 = vmatpush1.bf16.msra.mxu0 %v3429
        %4566 = vmatprep.subr.bf16.mxu0 %v3446
        %4567 = vmatpush1.bf16.msra.mxu0 %v3445
        %4568 = vmatprep.subr.bf16.mxu0 %v3462
        %4569 = vmatpush1.bf16.msra.mxu0 %v3461
        %4570 = vmatprep.subr.bf16.mxu0 %v3478
        %4571 = vmatpush1.bf16.msra.mxu0 %v3477
        %4572 = vmatprep.subr.bf16.mxu0 %v3494
        %4573 = vmatpush1.bf16.msra.mxu0 %v3493
        %4574 = vmatprep.subr.bf16.mxu0 %v3510
        %4575 = vmatpush1.bf16.msra.mxu0 %v3509
        %4576 = vmatprep.subr.bf16.mxu0 %v3526
        %4577 = vmatpush1.bf16.msra.mxu0 %v3525
        %4578 = vmatprep.subr.bf16.mxu0 %v3542
        %4579 = vmatpush1.bf16.msra.mxu0 %v3541
        %4580 = vmatprep.subr.bf16.mxu0 %v3558
        %4581 = vmatpush1.bf16.msra.mxu0 %v3557
        %4582 = vmatprep.subr.bf16.mxu0 %v3574
        %4583 = vmatpush1.bf16.msra.mxu0 %v3573
        %4584 = vmatprep.subr.bf16.mxu0 %v3590
        %4585 = vmatpush1.bf16.msra.mxu0 %v3589
        %4586 = vmatprep.subr.bf16.mxu0 %v3606
        %4587 = vmatpush1.bf16.msra.mxu0 %v3605
        %4588 = vmatprep.mubr.bf16.mxu0 %v3612
        %4589 = vmatmul.mubr.bf16.gmra.mrb[0].mxu0 %v3611
        %v4590 = vpop.f32.mrb[0].mxu0
        %v4591 = vadd.f32 %v4550, %v4590
        %v4592 = vpop.f32.mrb[0].mxu0
        %v4593 = vadd.f32 %v4552, %v4592
        %v4594 = vpop.f32.mrb[0].mxu0
        %v4595 = vpop.f32.mrb[0].mxu0
        %4596 = vdwg.mxu0
        %v4597 = vld [vmem:[#allocation13] sm:$0xff]
        %v4598 = vld [vmem:[#allocation13 + $0x8] sm:$0xff]
        %v4601 = vlaneseq
        %v4602 = vshrl.u32 %v4601, 7
        %v4603 = vsub.s32 0, %v4602
        %v4604 = vrot.slane %v4597, %v4603
        %v4605 = vlaneseq
        %v4606 = vshrl.u32 %v4605, 7
        %v4607 = vsub.s32 1, %v4606
        %v4608 = vrot.slane %v4597, %v4607
        %v4609 = vlaneseq
        %v4610 = vshrl.u32 %v4609, 7
        %v4611 = vsub.s32 2, %v4610
        %v4612 = vrot.slane %v4597, %v4611
        %v4613 = vlaneseq
        %v4614 = vshrl.u32 %v4613, 7
        %v4615 = vsub.s32 3, %v4614
        %v4616 = vrot.slane %v4597, %v4615
        %v4617 = vlaneseq
        %v4618 = vshrl.u32 %v4617, 7
        %v4619 = vsub.s32 4, %v4618
        %v4620 = vrot.slane %v4597, %v4619
        %v4621 = vlaneseq
        %v4622 = vshrl.u32 %v4621, 7
        %v4623 = vsub.s32 5, %v4622
        %v4624 = vrot.slane %v4597, %v4623
        %v4625 = vlaneseq
        %v4626 = vshrl.u32 %v4625, 7
        %v4627 = vsub.s32 6, %v4626
        %v4628 = vrot.slane %v4597, %v4627
        %v4629 = vlaneseq
        %v4630 = vshrl.u32 %v4629, 7
        %v4631 = vsub.s32 7, %v4630
        %v4632 = vrot.slane %v4597, %v4631
        %v4633 = vlaneseq
        %v4634 = vshrl.u32 %v4633, 7
        %v4635 = vsub.s32 0, %v4634
        %v4636 = vrot.slane %v4598, %v4635
        %v4637 = vlaneseq
        %v4638 = vshrl.u32 %v4637, 7
        %v4639 = vsub.s32 1, %v4638
        %v4640 = vrot.slane %v4598, %v4639
        %v4641 = vlaneseq
        %v4642 = vshrl.u32 %v4641, 7
        %v4643 = vsub.s32 2, %v4642
        %v4644 = vrot.slane %v4598, %v4643
        %v4645 = vlaneseq
        %v4646 = vshrl.u32 %v4645, 7
        %v4647 = vsub.s32 3, %v4646
        %v4648 = vrot.slane %v4598, %v4647
        %v4649 = vlaneseq
        %v4650 = vshrl.u32 %v4649, 7
        %v4651 = vsub.s32 4, %v4650
        %v4652 = vrot.slane %v4598, %v4651
        %v4653 = vlaneseq
        %v4654 = vshrl.u32 %v4653, 7
        %v4655 = vsub.s32 5, %v4654
        %v4656 = vrot.slane %v4598, %v4655
        %v4657 = vlaneseq
        %v4658 = vshrl.u32 %v4657, 7
        %v4659 = vsub.s32 6, %v4658
        %v4660 = vrot.slane %v4598, %v4659
        %v4661 = vlaneseq
        %v4662 = vshrl.u32 %v4661, 7
        %v4663 = vsub.s32 7, %v4662
        %v4664 = vrot.slane %v4598, %v4663
        %v4681 = vmul.f32 %v3730, %v4604
        %v4682 = vmul.f32 %v3732, %v4608
        %v4683 = vmul.f32 %v3853, %v4612
        %v4684 = vmul.f32 %v3855, %v4616
        %v4685 = vmul.f32 %v3976, %v4620
        %v4686 = vmul.f32 %v3978, %v4624
        %v4687 = vmul.f32 %v4099, %v4628
        %v4688 = vmul.f32 %v4101, %v4632
        %v4689 = vmul.f32 %v4222, %v4636
        %v4690 = vmul.f32 %v4224, %v4640
        %v4691 = vmul.f32 %v4345, %v4644
        %v4692 = vmul.f32 %v4347, %v4648
        %v4693 = vmul.f32 %v4468, %v4652
        %v4694 = vmul.f32 %v4470, %v4656
        %v4695 = vmul.f32 %v4591, %v4660
        %v4696 = vmul.f32 %v4593, %v4664
        %v4713 = vcombine.low %v4681, %v4682
        %v4714 = vcombine.low %v4683, %v4684
        %v4715 = vcombine.low %v4685, %v4686
        %v4716 = vcombine.low %v4687, %v4688
        %v4718 = vunpack.c.l.s4 1966171168
        %v4719 = vunpack.c.0.s8 %v4718
        %v4720 = vlaneseq
        %v4721 = vshrl.u32 %v4720, 7
        %v4722 = vsub.s32 %v4719, %v4721
        %v4723 = vrot.slane %v4713, %v4722
        %v4725 = vunpack.c.l.s4 1966171168
        %v4726 = vunpack.c.0.s8 %v4725
        %v4727 = vlaneseq
        %v4728 = vshrl.u32 %v4727, 7
        %v4729 = vsub.s32 %v4726, %v4728
        %v4730 = vrot.slane %v4714, %v4729
        %v4732 = vunpack.c.l.s4 1966171168
        %v4733 = vunpack.c.0.s8 %v4732
        %v4734 = vlaneseq
        %v4735 = vshrl.u32 %v4734, 7
        %v4736 = vsub.s32 %v4733, %v4735
        %v4737 = vrot.slane %v4715, %v4736
        %v4739 = vunpack.c.l.s4 1966171168
        %v4740 = vunpack.c.0.s8 %v4739
        %v4741 = vlaneseq
        %v4742 = vshrl.u32 %v4741, 7
        %v4743 = vsub.s32 %v4740, %v4742
        %v4744 = vrot.slane %v4716, %v4743
        %v4745 = vcombine.low %v4723, %v4730
        %v4746 = vcombine.low %v4737, %v4744
        %v4748 = vunpack.c.l.s4 1966171168
        %v4749 = vunpack.c.0.s8 %v4748
        %v4750 = vlaneseq
        %v4751 = vshrl.u32 %v4750, 7
        %v4752 = vsub.s32 %v4749, %v4751
        %v4753 = vrot.slane %v4745, %v4752
        %v4755 = vunpack.c.l.s4 1966171168
        %v4756 = vunpack.c.0.s8 %v4755
        %v4757 = vlaneseq
        %v4758 = vshrl.u32 %v4757, 7
        %v4759 = vsub.s32 %v4756, %v4758
        %v4760 = vrot.slane %v4746, %v4759
        %v4761 = vcombine.low %v4753, %v4760
        %v4762 = vcombine.low %v4689, %v4690
        %v4763 = vcombine.low %v4691, %v4692
        %v4764 = vcombine.low %v4693, %v4694
        %v4765 = vcombine.low %v4695, %v4696
        %v4767 = vunpack.c.l.s4 1966171168
        %v4768 = vunpack.c.0.s8 %v4767
        %v4769 = vlaneseq
        %v4770 = vshrl.u32 %v4769, 7
        %v4771 = vsub.s32 %v4768, %v4770
        %v4772 = vrot.slane %v4762, %v4771
        %v4774 = vunpack.c.l.s4 1966171168
        %v4775 = vunpack.c.0.s8 %v4774
        %v4776 = vlaneseq
        %v4777 = vshrl.u32 %v4776, 7
        %v4778 = vsub.s32 %v4775, %v4777
        %v4779 = vrot.slane %v4763, %v4778
        %v4781 = vunpack.c.l.s4 1966171168
        %v4782 = vunpack.c.0.s8 %v4781
        %v4783 = vlaneseq
        %v4784 = vshrl.u32 %v4783, 7
        %v4785 = vsub.s32 %v4782, %v4784
        %v4786 = vrot.slane %v4764, %v4785
        %v4788 = vunpack.c.l.s4 1966171168
        %v4789 = vunpack.c.0.s8 %v4788
        %v4790 = vlaneseq
        %v4791 = vshrl.u32 %v4790, 7
        %v4792 = vsub.s32 %v4789, %v4791
        %v4793 = vrot.slane %v4765, %v4792
        %v4794 = vcombine.low %v4772, %v4779
        %v4795 = vcombine.low %v4786, %v4793
        %v4797 = vunpack.c.l.s4 1966171168
        %v4798 = vunpack.c.0.s8 %v4797
        %v4799 = vlaneseq
        %v4800 = vshrl.u32 %v4799, 7
        %v4801 = vsub.s32 %v4798, %v4800
        %v4802 = vrot.slane %v4794, %v4801
        %v4804 = vunpack.c.l.s4 1966171168
        %v4805 = vunpack.c.0.s8 %v4804
        %v4806 = vlaneseq
        %v4807 = vshrl.u32 %v4806, 7
        %v4808 = vsub.s32 %v4805, %v4807
        %v4809 = vrot.slane %v4795, %v4808
        %v4810 = vcombine.low %v4802, %v4809
        %4813 = vst [vmem:[%s515] sm:$0xff] %v4761
        %4814 = vst [vmem:[%s515 + $0x8] sm:$0xff] %v4810
        %p4815 = scmp.lt.s32.totalorder %s29, 1
        %s4816 = scalar_select %p4815, %s29, 1
        %s4817 = smul.addr %s4816, 16
        %s4818 = scalar_lea.vmem %s9, %s4817
        // Predicated region
        $region89: #{_forward_2d.1} parent=55 // pred_check
          %p4819 = pneg %p256
        $region90: #{_forward_2d.1} parent=55 // pred_check_branch
          %4821 = sbr.rel (%p4819) target = $region92
        $region91: #{_forward_2d.1} parent=55 // pred_region
          _
        $region92: #{_forward_2d.1} parent=55 // pred_fallthru
          _
      $region56: #{_forward_2d.1} parent=5 // pred_fallthru
        _
      %p4822 = scmp.le.s32.totalorder 2, %s24
      // Predicated region
      $region93: #{_forward_2d.1} parent=5 // pred_check
        %p4823 = pneg %p4822
      $region94: #{_forward_2d.1} parent=5 // pred_check_branch
        %4825 = sbr.rel (%p4823) target = $region96
      $region95: #{_forward_2d.1} parent=5 // pred_region
        %s4826 = ssub.s32 %s24, 2
        // Predicated region
        $region97: #{_forward_2d.1} parent=95 // pred_check
          %p4827 = pneg %p262
        $region98: #{_forward_2d.1} parent=95 // pred_check_branch
          %4829 = sbr.rel (%p4827) target = $region100
        $region99: #{_forward_2d.1} parent=95 // pred_region
          %p4830 = scmp.lt.s32.totalorder %s30, 1
          %s4831 = scalar_select %p4830, %s30, 1
          %s4832 = smul.addr %s4831, 16
          %s4833 = scalar_lea.vmem %s9, %s4832
        $region100: #{_forward_2d.1} parent=95 // pred_fallthru
          _
      $region96: #{_forward_2d.1} parent=5 // pred_fallthru
        _
    $region6: #{_forward_2d.1} parent=1 // loop_footer
      %s28 = sadd.s32 1, %s24
    $region7: #{_forward_2d.1} parent=1 // loop_footer_branch
      %23 = sbr.rel target = $region3
    $region8: #{_forward_2d.1} parent=1 // loop_exit
      _
    %4834 = vsyncpa [#allocation3], 1
    %s4835 = scalar_lea.sflag [#allocation3], 1
    %4836 = vsyncpa %s4835, 1
    %4837 = vsyncpa [#allocation5], 1
    %4838 = vsyncpa [#allocation8], 1
    %s4839 = scalar_lea.sflag [#allocation8], 1
    %4840 = vsyncpa %s4839, 1
    %4841 = vsyncpa [#allocation11], 1
    %s4842 = scalar_lea.sflag [#allocation11], 1
    %4843 = vsyncpa %s4842, 1
    %4844 = vsyncpa [#allocation14], 1

</llo_original>
